<compile_context>
chip_gen: v7x
topology: tpu7x:2x2x1
jax: 0.10.0
libtpu: 0.0.40
codegen_flags: <defaults>
</compile_context>

<pallas_src>
import math

import jax
import jax.numpy as jnp
from jax.experimental import pallas as pl
from jax.experimental.pallas import tpu as pltpu

NUM_LAYERS = 3   # nn.LSTM(embedding_dim, hidden_dim, num_layers=3)
SUBLANE = 8      # f32 sublane granularity; batch padded to a multiple of this


def lstm_kernel(x_ref, mask_ref, wih0_ref, whh0_ref, wih12_ref, whh12_ref,
                b_ref, out_ref, xw0_scr):
    # x_ref     : (T*B, E)   bf16  time-major flattened input (row = t*B + b)
    # mask_ref  : (T, B, H)  f32   1.0 at each sequence's final valid timestep
    # wih0_ref  : (E, 4H)    bf16  layer-0 input weights (transposed)
    # whh0_ref  : (H, 4H)    bf16  layer-0 recurrent weights (transposed)
    # wih12_ref : (2, H, 4H) bf16  layers 1/2 input weights (transposed)
    # whh12_ref : (2, H, 4H) bf16  layers 1/2 recurrent weights (transposed)
    # b_ref     : (3, 4H)    f32   combined biases (b_ih + b_hh)
    # out_ref   : (B, H)     f32   hidden[0][-1]
    # xw0_scr   : (T, B, 4H) f32   scratch for the precomputed layer-0 projection
    B, H = out_ref.shape
    T = xw0_scr.shape[0]
    bf16 = jnp.bfloat16

    # ---- layer-0 input projection for every timestep in ONE bf16 matmul ----
    xw0 = jnp.dot(x_ref[...], wih0_ref[...],
                  preferred_element_type=jnp.float32) + b_ref[0]   # (T*B, 4H)
    # Stage into scratch so the unrolled loop reads a clean, leading-axis
    # (B, 4H) tile per step instead of pinning the whole value in vregs.
    for t in range(T):
        xw0_scr[t] = xw0[t * B:(t + 1) * B, :]

    zeros = jnp.zeros((B, H), jnp.float32)
    h0 = c0 = h1 = c1 = h2 = c2 = zeros
    out = zeros

    def cell(gates, c):
        # Full-vreg activations: 2 EUP pushes per layer instead of 4.
        sig = jax.nn.sigmoid(gates)                    # (B, 4H) f32
        tnh = jnp.tanh(gates)                          # (B, 4H) f32
        i_g = sig[:, 0 * H:1 * H]
        f_g = sig[:, 1 * H:2 * H]
        o_g = sig[:, 3 * H:4 * H]
        g_g = tnh[:, 2 * H:3 * H]
        c_new = f_g * c + i_g * g_g
        h_new = o_g * jnp.tanh(c_new)
        return h_new, c_new

    # ---- fully unrolled time recurrence (T static & small) -----------------
    for t in range(T):
        # layer 0: input projection precomputed; only the recurrent dot left.
        g0 = xw0_scr[t] + jnp.dot(h0.astype(bf16), whh0_ref[...],
                                  preferred_element_type=jnp.float32)
        h0, c0 = cell(g0, c0)

        # layer 1: two independent bf16 dots (no lane concat on the crit path)
        g1 = (jnp.dot(h0.astype(bf16), wih12_ref[0],
                      preferred_element_type=jnp.float32)
              + jnp.dot(h1.astype(bf16), whh12_ref[0],
                        preferred_element_type=jnp.float32)
              + b_ref[1])
        h1, c1 = cell(g1, c1)

        # layer 2
        g2 = (jnp.dot(h1.astype(bf16), wih12_ref[1],
                      preferred_element_type=jnp.float32)
              + jnp.dot(h2.astype(bf16), whh12_ref[1],
                        preferred_element_type=jnp.float32)
              + b_ref[2])
        h2, c2 = cell(g2, c2)

        # Capture the last layer's hidden state at each sequence's final valid
        # timestep (t == len-1) via a precomputed one-hot-in-time mask.
        # Padded timesteps never feed the captured value.
        out = out + mask_ref[t] * h2

    out_ref[...] = out


def lstm_model_forward(x_bte, lengths, params):
    """Pallas equivalent of LSTM_Model.forward(path_lst) -> hidden[0][-1]."""
    B, T, E = x_bte.shape
    H = params["whh_T"].shape[-1] // 4

    # Pad the batch up to the 8-sublane granularity so every in-kernel tile is
    # (8,128)-aligned.  Padded rows get length 0 and are sliced off afterwards.
    B_pad = max(SUBLANE, ((B + SUBLANE - 1) // SUBLANE) * SUBLANE)
    if B_pad != B:
        x_bte = jnp.pad(x_bte, ((0, B_pad - B), (0, 0), (0, 0)))
        lengths = jnp.pad(lengths, (0, B_pad - B))

    # time-major flatten (row = t*B_pad + b); bf16 MXU operand
    x_tb_e = (jnp.transpose(x_bte.astype(jnp.float32), (1, 0, 2))
              .reshape(T * B_pad, E).astype(jnp.bfloat16))

    # capture mask: 1.0 exactly at t == len-1 for each (valid) sequence
    t_idx = jnp.arange(1, T + 1, dtype=jnp.int32)
    mask2d = (t_idx[:, None] == lengths[None, :].astype(jnp.int32))
    mask = jnp.broadcast_to(mask2d[:, :, None],
                            (T, B_pad, H)).astype(jnp.float32)

    # bf16 MXU weights (f32 accumulation inside the kernel), f32 biases
    wih0 = params["wih0_T"].astype(jnp.bfloat16)           # (E, 4H)
    whh0 = params["whh_T"][0].astype(jnp.bfloat16)         # (H, 4H)
    wih12 = params["wih12_T"].astype(jnp.bfloat16)         # (2, H, 4H)
    whh12 = params["whh_T"][1:].astype(jnp.bfloat16)       # (2, H, 4H)

    out = pl.pallas_call(
        lstm_kernel,
        out_shape=jax.ShapeDtypeStruct((B_pad, H), jnp.float32),
        grid_spec=pltpu.PrefetchScalarGridSpec(
            num_scalar_prefetch=0,
            grid=(1,),
            in_specs=[
                pl.BlockSpec((T * B_pad, E), lambda i: (0, 0)),
                pl.BlockSpec((T, B_pad, H), lambda i: (0, 0, 0)),
                pl.BlockSpec((E, 4 * H), lambda i: (0, 0)),
                pl.BlockSpec((H, 4 * H), lambda i: (0, 0)),
                pl.BlockSpec((2, H, 4 * H), lambda i: (0, 0, 0)),
                pl.BlockSpec((2, H, 4 * H), lambda i: (0, 0, 0)),
                pl.BlockSpec((NUM_LAYERS, 4 * H), lambda i: (0, 0)),
            ],
            out_specs=pl.BlockSpec((B_pad, H), lambda i: (0, 0)),
            scratch_shapes=[pltpu.VMEM((T, B_pad, 4 * H), jnp.float32)],
        ),
        compiler_params=pltpu.CompilerParams(
            dimension_semantics=("arbitrary",)),
    )(x_tb_e, mask, wih0, whh0, wih12, whh12, params["b"])
    return out[:B]


def init_params(key, E, H):
    """Deterministic PyTorch-style init: U(-1/sqrt(H), 1/sqrt(H)), f32."""
    bound = 1.0 / math.sqrt(H)
    keys = jax.random.split(key, 12)

    def u(kk, shape):
        return jax.random.uniform(kk, shape, jnp.float32, -bound, bound)

    wih0, whh0 = u(keys[0], (4 * H, E)), u(keys[1], (4 * H, H))
    bih0, bhh0 = u(keys[2], (4 * H,)), u(keys[3], (4 * H,))
    wih1, whh1 = u(keys[4], (4 * H, H)), u(keys[5], (4 * H, H))
    bih1, bhh1 = u(keys[6], (4 * H,)), u(keys[7], (4 * H,))
    wih2, whh2 = u(keys[8], (4 * H, H)), u(keys[9], (4 * H, H))
    bih2, bhh2 = u(keys[10], (4 * H,)), u(keys[11], (4 * H,))
    return {
        "wih0_T": wih0.T,                                         # (E, 4H)
        "wih12_T": jnp.stack([wih1.T, wih2.T]),                   # (2, H, 4H)
        "whh_T": jnp.stack([whh0.T, whh1.T, whh2.T]),             # (3, H, 4H)
        "b": jnp.stack([bih0 + bhh0, bih1 + bhh1, bih2 + bhh2]),  # (3, 4H)
    }


def reference_forward(x_bte, lengths, params):
    """Pure-JAX f32 reference of the packed 3-layer LSTM (hidden[0][-1])."""
    B, T, E = x_bte.shape
    H = params["whh_T"].shape[-1] // 4
    h = jnp.zeros((NUM_LAYERS, B, H), jnp.float32)
    c = jnp.zeros((NUM_LAYERS, B, H), jnp.float32)
    for t in range(T):
        mask = (t < lengths)[:, None]
        layer_in = x_bte[:, t, :]
        new_h, new_c = [], []
        for layer in range(NUM_LAYERS):
            wih = params["wih0_T"] if layer == 0 else params["wih12_T"][layer - 1]
            gates = (layer_in @ wih + h[layer] @ params["whh_T"][layer]
                     + params["b"][layer])
            i_g = jax.nn.sigmoid(gates[:, 0:H])
            f_g = jax.nn.sigmoid(gates[:, H:2 * H])
            g_g = jnp.tanh(gates[:, 2 * H:3 * H])
            o_g = jax.nn.sigmoid(gates[:, 3 * H:4 * H])
            c_n = f_g * c[layer] + i_g * g_g
            h_n = o_g * jnp.tanh(c_n)
            new_c.append(jnp.where(mask, c_n, c[layer]))
            new_h.append(jnp.where(mask, h_n, h[layer]))
            layer_in = h_n
        h, c = jnp.stack(new_h), jnp.stack(new_c)
    return h[-1]


if __name__ == "__main__":
    # Small shapes implied by the module: a "path list" of 4 variable-length
    # sequences, embedding_dim=32, hidden_dim=32, max length 8.
    B, T, E, H = 4, 8, 32, 32
    key = jax.random.PRNGKey(0)
    k_params, k_x = jax.random.split(key)

    params = init_params(k_params, E, H)

    lengths = jnp.array([8, 5, 3, 6], dtype=jnp.int32)   # pack_sequence lengths
    x = jax.random.normal(k_x, (B, T, E), dtype=jnp.float32)
    # zero out padding positions (values there are never used anyway)
    t_idx = jnp.arange(T)[None, :, None]
    x = jnp.where(t_idx < lengths[:, None, None], x, 0.0)

    out = lstm_model_forward(x, lengths, params)
    out = jax.block_until_ready(out)

    ref = reference_forward(x, lengths, params)
    assert out.shape == (B, H)
    # bf16 MXU operands (f32 accumulate) -> tolerance loosened vs. f32 reference
    err = jnp.max(jnp.abs(out - ref))
    assert jnp.allclose(out, ref, atol=3e-2, rtol=3e-2), (
        f"mismatch: max abs err {err}")

    print("KERNEL_OK")
</pallas_src>

<mosaic_0001>
module attributes {stable_mosaic.version = 11 : i64} {
  func.func @lstm_kernel(%arg0: i32, %arg1: memref<64x32xbf16, #tpu.memory_space<vmem>>, %arg2: memref<8x8x32xf32, #tpu.memory_space<vmem>>, %arg3: memref<32x128xbf16, #tpu.memory_space<vmem>>, %arg4: memref<32x128xbf16, #tpu.memory_space<vmem>>, %arg5: memref<2x32x128xbf16, #tpu.memory_space<vmem>>, %arg6: memref<2x32x128xbf16, #tpu.memory_space<vmem>>, %arg7: memref<3x128xf32, #tpu.memory_space<vmem>>, %arg8: memref<8x32xf32, #tpu.memory_space<vmem>>, %arg9: memref<8x8x128xf32, #tpu.memory_space<vmem>>) attributes {dimension_semantics = [#tpu.dimension_semantics<arbitrary>], iteration_bounds = array<i64: 1>, scalar_prefetch = 0 : i64, scratch_operands = 1 : i64, tpu.core_type = #tpu.core_type<tc>, window_params = [{pipeline_mode = #tpu.pipeline_mode<synchronous>, transform_indices = @transform_0, window_bounds = array<i64: 64, 32>}, {pipeline_mode = #tpu.pipeline_mode<synchronous>, transform_indices = @transform_1, window_bounds = array<i64: 8, 8, 32>}, {pipeline_mode = #tpu.pipeline_mode<synchronous>, transform_indices = @transform_2, window_bounds = array<i64: 32, 128>}, {pipeline_mode = #tpu.pipeline_mode<synchronous>, transform_indices = @transform_3, window_bounds = array<i64: 32, 128>}, {pipeline_mode = #tpu.pipeline_mode<synchronous>, transform_indices = @transform_4, window_bounds = array<i64: 2, 32, 128>}, {pipeline_mode = #tpu.pipeline_mode<synchronous>, transform_indices = @transform_5, window_bounds = array<i64: 2, 32, 128>}, {pipeline_mode = #tpu.pipeline_mode<synchronous>, transform_indices = @transform_6, window_bounds = array<i64: 3, 128>}, {pipeline_mode = #tpu.pipeline_mode<synchronous>, transform_indices = @transform_7, window_bounds = array<i64: 8, 32>}]} {
    %c0 = arith.constant 0 : index
    %c0_0 = arith.constant 0 : index
    %0 = vector.load %arg1[%c0, %c0_0] : memref<64x32xbf16, #tpu.memory_space<vmem>>, vector<64x32xbf16>
    %c0_1 = arith.constant 0 : index
    %c0_2 = arith.constant 0 : index
    %1 = vector.load %arg3[%c0_1, %c0_2] : memref<32x128xbf16, #tpu.memory_space<vmem>>, vector<32x128xbf16>
    %cst = arith.constant dense<0.000000e+00> : vector<64x128xf32>
    %2 = tpu.matmul %0, %1, %cst {dimension_numbers = #tpu.dot_dimension_numbers<[1], [0], [0], [1], [0, 0, 1, 1], [], []>} : vector<64x32xbf16>, vector<32x128xbf16>, vector<64x128xf32> -> vector<64x128xf32>
    %c0_3 = arith.constant 0 : index
    %c0_4 = arith.constant 0 : index
    %3 = vector.load %arg7[%c0_3, %c0_4] : memref<3x128xf32, #tpu.memory_space<vmem>>, vector<1x128xf32>
    %4 = vector.shape_cast %3 : vector<1x128xf32> to vector<128xf32>
    %5 = vector.shape_cast %4 : vector<128xf32> to vector<1x128xf32>
    %6 = vector.broadcast %5 : vector<1x128xf32> to vector<64x128xf32>
    %7 = arith.addf %2, %6 : vector<64x128xf32>
    %8 = vector.extract_strided_slice %7 {offsets = [0, 0], sizes = [8, 128], strides = [1, 1]} : vector<64x128xf32> to vector<8x128xf32>
    %c0_5 = arith.constant 0 : index
    %c0_6 = arith.constant 0 : index
    %c0_7 = arith.constant 0 : index
    %9 = vector.load %arg9[%c0_5, %c0_6, %c0_7] : memref<8x8x128xf32, #tpu.memory_space<vmem>>, vector<1x8x128xf32>
    %10 = vector.shape_cast %9 : vector<1x8x128xf32> to vector<8x128xf32>
    %11 = vector.shape_cast %8 : vector<8x128xf32> to vector<1x8x128xf32>
    tpu.vector_store %arg9[%c0_5, %c0_6, %c0_7], %11 {strides = array<i32>} : memref<8x8x128xf32, #tpu.memory_space<vmem>>, vector<1x8x128xf32>,
    %12 = vector.extract_strided_slice %7 {offsets = [8, 0], sizes = [8, 128], strides = [1, 1]} : vector<64x128xf32> to vector<8x128xf32>
    %c1 = arith.constant 1 : index
    %c0_8 = arith.constant 0 : index
    %c0_9 = arith.constant 0 : index
    %13 = vector.load %arg9[%c1, %c0_8, %c0_9] : memref<8x8x128xf32, #tpu.memory_space<vmem>>, vector<1x8x128xf32>
    %14 = vector.shape_cast %13 : vector<1x8x128xf32> to vector<8x128xf32>
    %15 = vector.shape_cast %12 : vector<8x128xf32> to vector<1x8x128xf32>
    tpu.vector_store %arg9[%c1, %c0_8, %c0_9], %15 {strides = array<i32>} : memref<8x8x128xf32, #tpu.memory_space<vmem>>, vector<1x8x128xf32>,
    %16 = vector.extract_strided_slice %7 {offsets = [16, 0], sizes = [8, 128], strides = [1, 1]} : vector<64x128xf32> to vector<8x128xf32>
    %c2 = arith.constant 2 : index
    %c0_10 = arith.constant 0 : index
    %c0_11 = arith.constant 0 : index
    %17 = vector.load %arg9[%c2, %c0_10, %c0_11] : memref<8x8x128xf32, #tpu.memory_space<vmem>>, vector<1x8x128xf32>
    %18 = vector.shape_cast %17 : vector<1x8x128xf32> to vector<8x128xf32>
    %19 = vector.shape_cast %16 : vector<8x128xf32> to vector<1x8x128xf32>
    tpu.vector_store %arg9[%c2, %c0_10, %c0_11], %19 {strides = array<i32>} : memref<8x8x128xf32, #tpu.memory_space<vmem>>, vector<1x8x128xf32>,
    %20 = vector.extract_strided_slice %7 {offsets = [24, 0], sizes = [8, 128], strides = [1, 1]} : vector<64x128xf32> to vector<8x128xf32>
    %c3 = arith.constant 3 : index
    %c0_12 = arith.constant 0 : index
    %c0_13 = arith.constant 0 : index
    %21 = vector.load %arg9[%c3, %c0_12, %c0_13] : memref<8x8x128xf32, #tpu.memory_space<vmem>>, vector<1x8x128xf32>
    %22 = vector.shape_cast %21 : vector<1x8x128xf32> to vector<8x128xf32>
    %23 = vector.shape_cast %20 : vector<8x128xf32> to vector<1x8x128xf32>
    tpu.vector_store %arg9[%c3, %c0_12, %c0_13], %23 {strides = array<i32>} : memref<8x8x128xf32, #tpu.memory_space<vmem>>, vector<1x8x128xf32>,
    %24 = vector.extract_strided_slice %7 {offsets = [32, 0], sizes = [8, 128], strides = [1, 1]} : vector<64x128xf32> to vector<8x128xf32>
    %c4 = arith.constant 4 : index
    %c0_14 = arith.constant 0 : index
    %c0_15 = arith.constant 0 : index
    %25 = vector.load %arg9[%c4, %c0_14, %c0_15] : memref<8x8x128xf32, #tpu.memory_space<vmem>>, vector<1x8x128xf32>
    %26 = vector.shape_cast %25 : vector<1x8x128xf32> to vector<8x128xf32>
    %27 = vector.shape_cast %24 : vector<8x128xf32> to vector<1x8x128xf32>
    tpu.vector_store %arg9[%c4, %c0_14, %c0_15], %27 {strides = array<i32>} : memref<8x8x128xf32, #tpu.memory_space<vmem>>, vector<1x8x128xf32>,
    %28 = vector.extract_strided_slice %7 {offsets = [40, 0], sizes = [8, 128], strides = [1, 1]} : vector<64x128xf32> to vector<8x128xf32>
    %c5 = arith.constant 5 : index
    %c0_16 = arith.constant 0 : index
    %c0_17 = arith.constant 0 : index
    %29 = vector.load %arg9[%c5, %c0_16, %c0_17] : memref<8x8x128xf32, #tpu.memory_space<vmem>>, vector<1x8x128xf32>
    %30 = vector.shape_cast %29 : vector<1x8x128xf32> to vector<8x128xf32>
    %31 = vector.shape_cast %28 : vector<8x128xf32> to vector<1x8x128xf32>
    tpu.vector_store %arg9[%c5, %c0_16, %c0_17], %31 {strides = array<i32>} : memref<8x8x128xf32, #tpu.memory_space<vmem>>, vector<1x8x128xf32>,
    %32 = vector.extract_strided_slice %7 {offsets = [48, 0], sizes = [8, 128], strides = [1, 1]} : vector<64x128xf32> to vector<8x128xf32>
    %c6 = arith.constant 6 : index
    %c0_18 = arith.constant 0 : index
    %c0_19 = arith.constant 0 : index
    %33 = vector.load %arg9[%c6, %c0_18, %c0_19] : memref<8x8x128xf32, #tpu.memory_space<vmem>>, vector<1x8x128xf32>
    %34 = vector.shape_cast %33 : vector<1x8x128xf32> to vector<8x128xf32>
    %35 = vector.shape_cast %32 : vector<8x128xf32> to vector<1x8x128xf32>
    tpu.vector_store %arg9[%c6, %c0_18, %c0_19], %35 {strides = array<i32>} : memref<8x8x128xf32, #tpu.memory_space<vmem>>, vector<1x8x128xf32>,
    %36 = vector.extract_strided_slice %7 {offsets = [56, 0], sizes = [8, 128], strides = [1, 1]} : vector<64x128xf32> to vector<8x128xf32>
    %c7 = arith.constant 7 : index
    %c0_20 = arith.constant 0 : index
    %c0_21 = arith.constant 0 : index
    %37 = vector.load %arg9[%c7, %c0_20, %c0_21] : memref<8x8x128xf32, #tpu.memory_space<vmem>>, vector<1x8x128xf32>
    %38 = vector.shape_cast %37 : vector<1x8x128xf32> to vector<8x128xf32>
    %39 = vector.shape_cast %36 : vector<8x128xf32> to vector<1x8x128xf32>
    tpu.vector_store %arg9[%c7, %c0_20, %c0_21], %39 {strides = array<i32>} : memref<8x8x128xf32, #tpu.memory_space<vmem>>, vector<1x8x128xf32>,
    %cst_22 = arith.constant 0.000000e+00 : f32
    %40 = vector.broadcast %cst_22 : f32 to vector<8x32xf32>
    %c0_23 = arith.constant 0 : index
    %c0_24 = arith.constant 0 : index
    %c0_25 = arith.constant 0 : index
    %41 = vector.load %arg9[%c0_23, %c0_24, %c0_25] : memref<8x8x128xf32, #tpu.memory_space<vmem>>, vector<1x8x128xf32>
    %42 = vector.shape_cast %41 : vector<1x8x128xf32> to vector<8x128xf32>
    %43 = arith.truncf %40 : vector<8x32xf32> to vector<8x32xbf16>
    %c0_26 = arith.constant 0 : index
    %c0_27 = arith.constant 0 : index
    %44 = vector.load %arg4[%c0_26, %c0_27] : memref<32x128xbf16, #tpu.memory_space<vmem>>, vector<32x128xbf16>
    %cst_28 = arith.constant dense<0.000000e+00> : vector<8x128xf32>
    %45 = tpu.matmul %43, %44, %cst_28 {dimension_numbers = #tpu.dot_dimension_numbers<[1], [0], [0], [1], [0, 0, 1, 1], [], []>} : vector<8x32xbf16>, vector<32x128xbf16>, vector<8x128xf32> -> vector<8x128xf32>
    %46 = arith.addf %42, %45 : vector<8x128xf32>
    %47 = arith.negf %46 : vector<8x128xf32>
    %48 = math.exp %47 : vector<8x128xf32>
    %cst_29 = arith.constant 1.000000e+00 : f32
    %49 = vector.broadcast %cst_29 : f32 to vector<8x128xf32>
    %50 = arith.addf %49, %48 : vector<8x128xf32>
    %51 = arith.divf %49, %50 : vector<8x128xf32>
    %52 = math.tanh %46 : vector<8x128xf32>
    %53 = vector.extract_strided_slice %51 {offsets = [0, 0], sizes = [8, 32], strides = [1, 1]} : vector<8x128xf32> to vector<8x32xf32>
    %54 = vector.extract_strided_slice %51 {offsets = [0, 32], sizes = [8, 32], strides = [1, 1]} : vector<8x128xf32> to vector<8x32xf32>
    %55 = vector.extract_strided_slice %51 {offsets = [0, 96], sizes = [8, 32], strides = [1, 1]} : vector<8x128xf32> to vector<8x32xf32>
    %56 = vector.extract_strided_slice %52 {offsets = [0, 64], sizes = [8, 32], strides = [1, 1]} : vector<8x128xf32> to vector<8x32xf32>
    %57 = arith.mulf %54, %40 : vector<8x32xf32>
    %58 = arith.mulf %53, %56 : vector<8x32xf32>
    %59 = arith.addf %57, %58 : vector<8x32xf32>
    %60 = math.tanh %59 : vector<8x32xf32>
    %61 = arith.mulf %55, %60 : vector<8x32xf32>
    %62 = arith.truncf %61 : vector<8x32xf32> to vector<8x32xbf16>
    %c0_30 = arith.constant 0 : index
    %c0_31 = arith.constant 0 : index
    %c0_32 = arith.constant 0 : index
    %63 = vector.load %arg5[%c0_30, %c0_31, %c0_32] : memref<2x32x128xbf16, #tpu.memory_space<vmem>>, vector<1x32x128xbf16>
    %64 = vector.shape_cast %63 : vector<1x32x128xbf16> to vector<32x128xbf16>
    %cst_33 = arith.constant dense<0.000000e+00> : vector<8x128xf32>
    %65 = tpu.matmul %62, %64, %cst_33 {dimension_numbers = #tpu.dot_dimension_numbers<[1], [0], [0], [1], [0, 0, 1, 1], [], []>} : vector<8x32xbf16>, vector<32x128xbf16>, vector<8x128xf32> -> vector<8x128xf32>
    %66 = arith.truncf %40 : vector<8x32xf32> to vector<8x32xbf16>
    %c0_34 = arith.constant 0 : index
    %c0_35 = arith.constant 0 : index
    %c0_36 = arith.constant 0 : index
    %67 = vector.load %arg6[%c0_34, %c0_35, %c0_36] : memref<2x32x128xbf16, #tpu.memory_space<vmem>>, vector<1x32x128xbf16>
    %68 = vector.shape_cast %67 : vector<1x32x128xbf16> to vector<32x128xbf16>
    %cst_37 = arith.constant dense<0.000000e+00> : vector<8x128xf32>
    %69 = tpu.matmul %66, %68, %cst_37 {dimension_numbers = #tpu.dot_dimension_numbers<[1], [0], [0], [1], [0, 0, 1, 1], [], []>} : vector<8x32xbf16>, vector<32x128xbf16>, vector<8x128xf32> -> vector<8x128xf32>
    %70 = arith.addf %65, %69 : vector<8x128xf32>
    %c1_38 = arith.constant 1 : index
    %c0_39 = arith.constant 0 : index
    %71 = vector.load %arg7[%c1_38, %c0_39] : memref<3x128xf32, #tpu.memory_space<vmem>>, vector<1x128xf32>
    %72 = vector.shape_cast %71 : vector<1x128xf32> to vector<128xf32>
    %73 = vector.shape_cast %72 : vector<128xf32> to vector<1x128xf32>
    %74 = vector.broadcast %73 : vector<1x128xf32> to vector<8x128xf32>
    %75 = arith.addf %70, %74 : vector<8x128xf32>
    %76 = arith.negf %75 : vector<8x128xf32>
    %77 = math.exp %76 : vector<8x128xf32>
    %cst_40 = arith.constant 1.000000e+00 : f32
    %78 = vector.broadcast %cst_40 : f32 to vector<8x128xf32>
    %79 = arith.addf %78, %77 : vector<8x128xf32>
    %80 = arith.divf %78, %79 : vector<8x128xf32>
    %81 = math.tanh %75 : vector<8x128xf32>
    %82 = vector.extract_strided_slice %80 {offsets = [0, 0], sizes = [8, 32], strides = [1, 1]} : vector<8x128xf32> to vector<8x32xf32>
    %83 = vector.extract_strided_slice %80 {offsets = [0, 32], sizes = [8, 32], strides = [1, 1]} : vector<8x128xf32> to vector<8x32xf32>
    %84 = vector.extract_strided_slice %80 {offsets = [0, 96], sizes = [8, 32], strides = [1, 1]} : vector<8x128xf32> to vector<8x32xf32>
    %85 = vector.extract_strided_slice %81 {offsets = [0, 64], sizes = [8, 32], strides = [1, 1]} : vector<8x128xf32> to vector<8x32xf32>
    %86 = arith.mulf %83, %40 : vector<8x32xf32>
    %87 = arith.mulf %82, %85 : vector<8x32xf32>
    %88 = arith.addf %86, %87 : vector<8x32xf32>
    %89 = math.tanh %88 : vector<8x32xf32>
    %90 = arith.mulf %84, %89 : vector<8x32xf32>
    %91 = arith.truncf %90 : vector<8x32xf32> to vector<8x32xbf16>
    %c1_41 = arith.constant 1 : index
    %c0_42 = arith.constant 0 : index
    %c0_43 = arith.constant 0 : index
    %92 = vector.load %arg5[%c1_41, %c0_42, %c0_43] : memref<2x32x128xbf16, #tpu.memory_space<vmem>>, vector<1x32x128xbf16>
    %93 = vector.shape_cast %92 : vector<1x32x128xbf16> to vector<32x128xbf16>
    %cst_44 = arith.constant dense<0.000000e+00> : vector<8x128xf32>
    %94 = tpu.matmul %91, %93, %cst_44 {dimension_numbers = #tpu.dot_dimension_numbers<[1], [0], [0], [1], [0, 0, 1, 1], [], []>} : vector<8x32xbf16>, vector<32x128xbf16>, vector<8x128xf32> -> vector<8x128xf32>
    %95 = arith.truncf %40 : vector<8x32xf32> to vector<8x32xbf16>
    %c1_45 = arith.constant 1 : index
    %c0_46 = arith.constant 0 : index
    %c0_47 = arith.constant 0 : index
    %96 = vector.load %arg6[%c1_45, %c0_46, %c0_47] : memref<2x32x128xbf16, #tpu.memory_space<vmem>>, vector<1x32x128xbf16>
    %97 = vector.shape_cast %96 : vector<1x32x128xbf16> to vector<32x128xbf16>
    %cst_48 = arith.constant dense<0.000000e+00> : vector<8x128xf32>
    %98 = tpu.matmul %95, %97, %cst_48 {dimension_numbers = #tpu.dot_dimension_numbers<[1], [0], [0], [1], [0, 0, 1, 1], [], []>} : vector<8x32xbf16>, vector<32x128xbf16>, vector<8x128xf32> -> vector<8x128xf32>
    %99 = arith.addf %94, %98 : vector<8x128xf32>
    %c2_49 = arith.constant 2 : index
    %c0_50 = arith.constant 0 : index
    %100 = vector.load %arg7[%c2_49, %c0_50] : memref<3x128xf32, #tpu.memory_space<vmem>>, vector<1x128xf32>
    %101 = vector.shape_cast %100 : vector<1x128xf32> to vector<128xf32>
    %102 = vector.shape_cast %101 : vector<128xf32> to vector<1x128xf32>
    %103 = vector.broadcast %102 : vector<1x128xf32> to vector<8x128xf32>
    %104 = arith.addf %99, %103 : vector<8x128xf32>
    %105 = arith.negf %104 : vector<8x128xf32>
    %106 = math.exp %105 : vector<8x128xf32>
    %cst_51 = arith.constant 1.000000e+00 : f32
    %107 = vector.broadcast %cst_51 : f32 to vector<8x128xf32>
    %108 = arith.addf %107, %106 : vector<8x128xf32>
    %109 = arith.divf %107, %108 : vector<8x128xf32>
    %110 = math.tanh %104 : vector<8x128xf32>
    %111 = vector.extract_strided_slice %109 {offsets = [0, 0], sizes = [8, 32], strides = [1, 1]} : vector<8x128xf32> to vector<8x32xf32>
    %112 = vector.extract_strided_slice %109 {offsets = [0, 32], sizes = [8, 32], strides = [1, 1]} : vector<8x128xf32> to vector<8x32xf32>
    %113 = vector.extract_strided_slice %109 {offsets = [0, 96], sizes = [8, 32], strides = [1, 1]} : vector<8x128xf32> to vector<8x32xf32>
    %114 = vector.extract_strided_slice %110 {offsets = [0, 64], sizes = [8, 32], strides = [1, 1]} : vector<8x128xf32> to vector<8x32xf32>
    %115 = arith.mulf %112, %40 : vector<8x32xf32>
    %116 = arith.mulf %111, %114 : vector<8x32xf32>
    %117 = arith.addf %115, %116 : vector<8x32xf32>
    %118 = math.tanh %117 : vector<8x32xf32>
    %119 = arith.mulf %113, %118 : vector<8x32xf32>
    %c0_52 = arith.constant 0 : index
    %c0_53 = arith.constant 0 : index
    %c0_54 = arith.constant 0 : index
    %120 = vector.load %arg2[%c0_52, %c0_53, %c0_54] : memref<8x8x32xf32, #tpu.memory_space<vmem>>, vector<1x8x32xf32>
    %121 = vector.shape_cast %120 : vector<1x8x32xf32> to vector<8x32xf32>
    %122 = arith.mulf %121, %119 : vector<8x32xf32>
    %123 = arith.addf %40, %122 : vector<8x32xf32>
    %c1_55 = arith.constant 1 : index
    %c0_56 = arith.constant 0 : index
    %c0_57 = arith.constant 0 : index
    %124 = vector.load %arg9[%c1_55, %c0_56, %c0_57] : memref<8x8x128xf32, #tpu.memory_space<vmem>>, vector<1x8x128xf32>
    %125 = vector.shape_cast %124 : vector<1x8x128xf32> to vector<8x128xf32>
    %126 = arith.truncf %61 : vector<8x32xf32> to vector<8x32xbf16>
    %c0_58 = arith.constant 0 : index
    %c0_59 = arith.constant 0 : index
    %127 = vector.load %arg4[%c0_58, %c0_59] : memref<32x128xbf16, #tpu.memory_space<vmem>>, vector<32x128xbf16>
    %cst_60 = arith.constant dense<0.000000e+00> : vector<8x128xf32>
    %128 = tpu.matmul %126, %127, %cst_60 {dimension_numbers = #tpu.dot_dimension_numbers<[1], [0], [0], [1], [0, 0, 1, 1], [], []>} : vector<8x32xbf16>, vector<32x128xbf16>, vector<8x128xf32> -> vector<8x128xf32>
    %129 = arith.addf %125, %128 : vector<8x128xf32>
    %130 = arith.negf %129 : vector<8x128xf32>
    %131 = math.exp %130 : vector<8x128xf32>
    %cst_61 = arith.constant 1.000000e+00 : f32
    %132 = vector.broadcast %cst_61 : f32 to vector<8x128xf32>
    %133 = arith.addf %132, %131 : vector<8x128xf32>
    %134 = arith.divf %132, %133 : vector<8x128xf32>
    %135 = math.tanh %129 : vector<8x128xf32>
    %136 = vector.extract_strided_slice %134 {offsets = [0, 0], sizes = [8, 32], strides = [1, 1]} : vector<8x128xf32> to vector<8x32xf32>
    %137 = vector.extract_strided_slice %134 {offsets = [0, 32], sizes = [8, 32], strides = [1, 1]} : vector<8x128xf32> to vector<8x32xf32>
    %138 = vector.extract_strided_slice %134 {offsets = [0, 96], sizes = [8, 32], strides = [1, 1]} : vector<8x128xf32> to vector<8x32xf32>
    %139 = vector.extract_strided_slice %135 {offsets = [0, 64], sizes = [8, 32], strides = [1, 1]} : vector<8x128xf32> to vector<8x32xf32>
    %140 = arith.mulf %137, %59 : vector<8x32xf32>
    %141 = arith.mulf %136, %139 : vector<8x32xf32>
    %142 = arith.addf %140, %141 : vector<8x32xf32>
    %143 = math.tanh %142 : vector<8x32xf32>
    %144 = arith.mulf %138, %143 : vector<8x32xf32>
    %145 = arith.truncf %144 : vector<8x32xf32> to vector<8x32xbf16>
    %c0_62 = arith.constant 0 : index
    %c0_63 = arith.constant 0 : index
    %c0_64 = arith.constant 0 : index
    %146 = vector.load %arg5[%c0_62, %c0_63, %c0_64] : memref<2x32x128xbf16, #tpu.memory_space<vmem>>, vector<1x32x128xbf16>
    %147 = vector.shape_cast %146 : vector<1x32x128xbf16> to vector<32x128xbf16>
    %cst_65 = arith.constant dense<0.000000e+00> : vector<8x128xf32>
    %148 = tpu.matmul %145, %147, %cst_65 {dimension_numbers = #tpu.dot_dimension_numbers<[1], [0], [0], [1], [0, 0, 1, 1], [], []>} : vector<8x32xbf16>, vector<32x128xbf16>, vector<8x128xf32> -> vector<8x128xf32>
    %149 = arith.truncf %90 : vector<8x32xf32> to vector<8x32xbf16>
    %c0_66 = arith.constant 0 : index
    %c0_67 = arith.constant 0 : index
    %c0_68 = arith.constant 0 : index
    %150 = vector.load %arg6[%c0_66, %c0_67, %c0_68] : memref<2x32x128xbf16, #tpu.memory_space<vmem>>, vector<1x32x128xbf16>
    %151 = vector.shape_cast %150 : vector<1x32x128xbf16> to vector<32x128xbf16>
    %cst_69 = arith.constant dense<0.000000e+00> : vector<8x128xf32>
    %152 = tpu.matmul %149, %151, %cst_69 {dimension_numbers = #tpu.dot_dimension_numbers<[1], [0], [0], [1], [0, 0, 1, 1], [], []>} : vector<8x32xbf16>, vector<32x128xbf16>, vector<8x128xf32> -> vector<8x128xf32>
    %153 = arith.addf %148, %152 : vector<8x128xf32>
    %c1_70 = arith.constant 1 : index
    %c0_71 = arith.constant 0 : index
    %154 = vector.load %arg7[%c1_70, %c0_71] : memref<3x128xf32, #tpu.memory_space<vmem>>, vector<1x128xf32>
    %155 = vector.shape_cast %154 : vector<1x128xf32> to vector<128xf32>
    %156 = vector.shape_cast %155 : vector<128xf32> to vector<1x128xf32>
    %157 = vector.broadcast %156 : vector<1x128xf32> to vector<8x128xf32>
    %158 = arith.addf %153, %157 : vector<8x128xf32>
    %159 = arith.negf %158 : vector<8x128xf32>
    %160 = math.exp %159 : vector<8x128xf32>
    %cst_72 = arith.constant 1.000000e+00 : f32
    %161 = vector.broadcast %cst_72 : f32 to vector<8x128xf32>
    %162 = arith.addf %161, %160 : vector<8x128xf32>
    %163 = arith.divf %161, %162 : vector<8x128xf32>
    %164 = math.tanh %158 : vector<8x128xf32>
    %165 = vector.extract_strided_slice %163 {offsets = [0, 0], sizes = [8, 32], strides = [1, 1]} : vector<8x128xf32> to vector<8x32xf32>
    %166 = vector.extract_strided_slice %163 {offsets = [0, 32], sizes = [8, 32], strides = [1, 1]} : vector<8x128xf32> to vector<8x32xf32>
    %167 = vector.extract_strided_slice %163 {offsets = [0, 96], sizes = [8, 32], strides = [1, 1]} : vector<8x128xf32> to vector<8x32xf32>
    %168 = vector.extract_strided_slice %164 {offsets = [0, 64], sizes = [8, 32], strides = [1, 1]} : vector<8x128xf32> to vector<8x32xf32>
    %169 = arith.mulf %166, %88 : vector<8x32xf32>
    %170 = arith.mulf %165, %168 : vector<8x32xf32>
    %171 = arith.addf %169, %170 : vector<8x32xf32>
    %172 = math.tanh %171 : vector<8x32xf32>
    %173 = arith.mulf %167, %172 : vector<8x32xf32>
    %174 = arith.truncf %173 : vector<8x32xf32> to vector<8x32xbf16>
    %c1_73 = arith.constant 1 : index
    %c0_74 = arith.constant 0 : index
    %c0_75 = arith.constant 0 : index
    %175 = vector.load %arg5[%c1_73, %c0_74, %c0_75] : memref<2x32x128xbf16, #tpu.memory_space<vmem>>, vector<1x32x128xbf16>
    %176 = vector.shape_cast %175 : vector<1x32x128xbf16> to vector<32x128xbf16>
    %cst_76 = arith.constant dense<0.000000e+00> : vector<8x128xf32>
    %177 = tpu.matmul %174, %176, %cst_76 {dimension_numbers = #tpu.dot_dimension_numbers<[1], [0], [0], [1], [0, 0, 1, 1], [], []>} : vector<8x32xbf16>, vector<32x128xbf16>, vector<8x128xf32> -> vector<8x128xf32>
    %178 = arith.truncf %119 : vector<8x32xf32> to vector<8x32xbf16>
    %c1_77 = arith.constant 1 : index
    %c0_78 = arith.constant 0 : index
    %c0_79 = arith.constant 0 : index
    %179 = vector.load %arg6[%c1_77, %c0_78, %c0_79] : memref<2x32x128xbf16, #tpu.memory_space<vmem>>, vector<1x32x128xbf16>
    %180 = vector.shape_cast %179 : vector<1x32x128xbf16> to vector<32x128xbf16>
    %cst_80 = arith.constant dense<0.000000e+00> : vector<8x128xf32>
    %181 = tpu.matmul %178, %180, %cst_80 {dimension_numbers = #tpu.dot_dimension_numbers<[1], [0], [0], [1], [0, 0, 1, 1], [], []>} : vector<8x32xbf16>, vector<32x128xbf16>, vector<8x128xf32> -> vector<8x128xf32>
    %182 = arith.addf %177, %181 : vector<8x128xf32>
    %c2_81 = arith.constant 2 : index
    %c0_82 = arith.constant 0 : index
    %183 = vector.load %arg7[%c2_81, %c0_82] : memref<3x128xf32, #tpu.memory_space<vmem>>, vector<1x128xf32>
    %184 = vector.shape_cast %183 : vector<1x128xf32> to vector<128xf32>
    %185 = vector.shape_cast %184 : vector<128xf32> to vector<1x128xf32>
    %186 = vector.broadcast %185 : vector<1x128xf32> to vector<8x128xf32>
    %187 = arith.addf %182, %186 : vector<8x128xf32>
    %188 = arith.negf %187 : vector<8x128xf32>
    %189 = math.exp %188 : vector<8x128xf32>
    %cst_83 = arith.constant 1.000000e+00 : f32
    %190 = vector.broadcast %cst_83 : f32 to vector<8x128xf32>
    %191 = arith.addf %190, %189 : vector<8x128xf32>
    %192 = arith.divf %190, %191 : vector<8x128xf32>
    %193 = math.tanh %187 : vector<8x128xf32>
    %194 = vector.extract_strided_slice %192 {offsets = [0, 0], sizes = [8, 32], strides = [1, 1]} : vector<8x128xf32> to vector<8x32xf32>
    %195 = vector.extract_strided_slice %192 {offsets = [0, 32], sizes = [8, 32], strides = [1, 1]} : vector<8x128xf32> to vector<8x32xf32>
    %196 = vector.extract_strided_slice %192 {offsets = [0, 96], sizes = [8, 32], strides = [1, 1]} : vector<8x128xf32> to vector<8x32xf32>
    %197 = vector.extract_strided_slice %193 {offsets = [0, 64], sizes = [8, 32], strides = [1, 1]} : vector<8x128xf32> to vector<8x32xf32>
    %198 = arith.mulf %195, %117 : vector<8x32xf32>
    %199 = arith.mulf %194, %197 : vector<8x32xf32>
    %200 = arith.addf %198, %199 : vector<8x32xf32>
    %201 = math.tanh %200 : vector<8x32xf32>
    %202 = arith.mulf %196, %201 : vector<8x32xf32>
    %c1_84 = arith.constant 1 : index
    %c0_85 = arith.constant 0 : index
    %c0_86 = arith.constant 0 : index
    %203 = vector.load %arg2[%c1_84, %c0_85, %c0_86] : memref<8x8x32xf32, #tpu.memory_space<vmem>>, vector<1x8x32xf32>
    %204 = vector.shape_cast %203 : vector<1x8x32xf32> to vector<8x32xf32>
    %205 = arith.mulf %204, %202 : vector<8x32xf32>
    %206 = arith.addf %123, %205 : vector<8x32xf32>
    %c2_87 = arith.constant 2 : index
    %c0_88 = arith.constant 0 : index
    %c0_89 = arith.constant 0 : index
    %207 = vector.load %arg9[%c2_87, %c0_88, %c0_89] : memref<8x8x128xf32, #tpu.memory_space<vmem>>, vector<1x8x128xf32>
    %208 = vector.shape_cast %207 : vector<1x8x128xf32> to vector<8x128xf32>
    %209 = arith.truncf %144 : vector<8x32xf32> to vector<8x32xbf16>
    %c0_90 = arith.constant 0 : index
    %c0_91 = arith.constant 0 : index
    %210 = vector.load %arg4[%c0_90, %c0_91] : memref<32x128xbf16, #tpu.memory_space<vmem>>, vector<32x128xbf16>
    %cst_92 = arith.constant dense<0.000000e+00> : vector<8x128xf32>
    %211 = tpu.matmul %209, %210, %cst_92 {dimension_numbers = #tpu.dot_dimension_numbers<[1], [0], [0], [1], [0, 0, 1, 1], [], []>} : vector<8x32xbf16>, vector<32x128xbf16>, vector<8x128xf32> -> vector<8x128xf32>
    %212 = arith.addf %208, %211 : vector<8x128xf32>
    %213 = arith.negf %212 : vector<8x128xf32>
    %214 = math.exp %213 : vector<8x128xf32>
    %cst_93 = arith.constant 1.000000e+00 : f32
    %215 = vector.broadcast %cst_93 : f32 to vector<8x128xf32>
    %216 = arith.addf %215, %214 : vector<8x128xf32>
    %217 = arith.divf %215, %216 : vector<8x128xf32>
    %218 = math.tanh %212 : vector<8x128xf32>
    %219 = vector.extract_strided_slice %217 {offsets = [0, 0], sizes = [8, 32], strides = [1, 1]} : vector<8x128xf32> to vector<8x32xf32>
    %220 = vector.extract_strided_slice %217 {offsets = [0, 32], sizes = [8, 32], strides = [1, 1]} : vector<8x128xf32> to vector<8x32xf32>
    %221 = vector.extract_strided_slice %217 {offsets = [0, 96], sizes = [8, 32], strides = [1, 1]} : vector<8x128xf32> to vector<8x32xf32>
    %222 = vector.extract_strided_slice %218 {offsets = [0, 64], sizes = [8, 32], strides = [1, 1]} : vector<8x128xf32> to vector<8x32xf32>
    %223 = arith.mulf %220, %142 : vector<8x32xf32>
    %224 = arith.mulf %219, %222 : vector<8x32xf32>
    %225 = arith.addf %223, %224 : vector<8x32xf32>
    %226 = math.tanh %225 : vector<8x32xf32>
    %227 = arith.mulf %221, %226 : vector<8x32xf32>
    %228 = arith.truncf %227 : vector<8x32xf32> to vector<8x32xbf16>
    %c0_94 = arith.constant 0 : index
    %c0_95 = arith.constant 0 : index
    %c0_96 = arith.constant 0 : index
    %229 = vector.load %arg5[%c0_94, %c0_95, %c0_96] : memref<2x32x128xbf16, #tpu.memory_space<vmem>>, vector<1x32x128xbf16>
    %230 = vector.shape_cast %229 : vector<1x32x128xbf16> to vector<32x128xbf16>
    %cst_97 = arith.constant dense<0.000000e+00> : vector<8x128xf32>
    %231 = tpu.matmul %228, %230, %cst_97 {dimension_numbers = #tpu.dot_dimension_numbers<[1], [0], [0], [1], [0, 0, 1, 1], [], []>} : vector<8x32xbf16>, vector<32x128xbf16>, vector<8x128xf32> -> vector<8x128xf32>
    %232 = arith.truncf %173 : vector<8x32xf32> to vector<8x32xbf16>
    %c0_98 = arith.constant 0 : index
    %c0_99 = arith.constant 0 : index
    %c0_100 = arith.constant 0 : index
    %233 = vector.load %arg6[%c0_98, %c0_99, %c0_100] : memref<2x32x128xbf16, #tpu.memory_space<vmem>>, vector<1x32x128xbf16>
    %234 = vector.shape_cast %233 : vector<1x32x128xbf16> to vector<32x128xbf16>
    %cst_101 = arith.constant dense<0.000000e+00> : vector<8x128xf32>
    %235 = tpu.matmul %232, %234, %cst_101 {dimension_numbers = #tpu.dot_dimension_numbers<[1], [0], [0], [1], [0, 0, 1, 1], [], []>} : vector<8x32xbf16>, vector<32x128xbf16>, vector<8x128xf32> -> vector<8x128xf32>
    %236 = arith.addf %231, %235 : vector<8x128xf32>
    %c1_102 = arith.constant 1 : index
    %c0_103 = arith.constant 0 : index
    %237 = vector.load %arg7[%c1_102, %c0_103] : memref<3x128xf32, #tpu.memory_space<vmem>>, vector<1x128xf32>
    %238 = vector.shape_cast %237 : vector<1x128xf32> to vector<128xf32>
    %239 = vector.shape_cast %238 : vector<128xf32> to vector<1x128xf32>
    %240 = vector.broadcast %239 : vector<1x128xf32> to vector<8x128xf32>
    %241 = arith.addf %236, %240 : vector<8x128xf32>
    %242 = arith.negf %241 : vector<8x128xf32>
    %243 = math.exp %242 : vector<8x128xf32>
    %cst_104 = arith.constant 1.000000e+00 : f32
    %244 = vector.broadcast %cst_104 : f32 to vector<8x128xf32>
    %245 = arith.addf %244, %243 : vector<8x128xf32>
    %246 = arith.divf %244, %245 : vector<8x128xf32>
    %247 = math.tanh %241 : vector<8x128xf32>
    %248 = vector.extract_strided_slice %246 {offsets = [0, 0], sizes = [8, 32], strides = [1, 1]} : vector<8x128xf32> to vector<8x32xf32>
    %249 = vector.extract_strided_slice %246 {offsets = [0, 32], sizes = [8, 32], strides = [1, 1]} : vector<8x128xf32> to vector<8x32xf32>
    %250 = vector.extract_strided_slice %246 {offsets = [0, 96], sizes = [8, 32], strides = [1, 1]} : vector<8x128xf32> to vector<8x32xf32>
    %251 = vector.extract_strided_slice %247 {offsets = [0, 64], sizes = [8, 32], strides = [1, 1]} : vector<8x128xf32> to vector<8x32xf32>
    %252 = arith.mulf %249, %171 : vector<8x32xf32>
    %253 = arith.mulf %248, %251 : vector<8x32xf32>
    %254 = arith.addf %252, %253 : vector<8x32xf32>
    %255 = math.tanh %254 : vector<8x32xf32>
    %256 = arith.mulf %250, %255 : vector<8x32xf32>
    %257 = arith.truncf %256 : vector<8x32xf32> to vector<8x32xbf16>
    %c1_105 = arith.constant 1 : index
    %c0_106 = arith.constant 0 : index
    %c0_107 = arith.constant 0 : index
    %258 = vector.load %arg5[%c1_105, %c0_106, %c0_107] : memref<2x32x128xbf16, #tpu.memory_space<vmem>>, vector<1x32x128xbf16>
    %259 = vector.shape_cast %258 : vector<1x32x128xbf16> to vector<32x128xbf16>
    %cst_108 = arith.constant dense<0.000000e+00> : vector<8x128xf32>
    %260 = tpu.matmul %257, %259, %cst_108 {dimension_numbers = #tpu.dot_dimension_numbers<[1], [0], [0], [1], [0, 0, 1, 1], [], []>} : vector<8x32xbf16>, vector<32x128xbf16>, vector<8x128xf32> -> vector<8x128xf32>
    %261 = arith.truncf %202 : vector<8x32xf32> to vector<8x32xbf16>
    %c1_109 = arith.constant 1 : index
    %c0_110 = arith.constant 0 : index
    %c0_111 = arith.constant 0 : index
    %262 = vector.load %arg6[%c1_109, %c0_110, %c0_111] : memref<2x32x128xbf16, #tpu.memory_space<vmem>>, vector<1x32x128xbf16>
    %263 = vector.shape_cast %262 : vector<1x32x128xbf16> to vector<32x128xbf16>
    %cst_112 = arith.constant dense<0.000000e+00> : vector<8x128xf32>
    %264 = tpu.matmul %261, %263, %cst_112 {dimension_numbers = #tpu.dot_dimension_numbers<[1], [0], [0], [1], [0, 0, 1, 1], [], []>} : vector<8x32xbf16>, vector<32x128xbf16>, vector<8x128xf32> -> vector<8x128xf32>
    %265 = arith.addf %260, %264 : vector<8x128xf32>
    %c2_113 = arith.constant 2 : index
    %c0_114 = arith.constant 0 : index
    %266 = vector.load %arg7[%c2_113, %c0_114] : memref<3x128xf32, #tpu.memory_space<vmem>>, vector<1x128xf32>
    %267 = vector.shape_cast %266 : vector<1x128xf32> to vector<128xf32>
    %268 = vector.shape_cast %267 : vector<128xf32> to vector<1x128xf32>
    %269 = vector.broadcast %268 : vector<1x128xf32> to vector<8x128xf32>
    %270 = arith.addf %265, %269 : vector<8x128xf32>
    %271 = arith.negf %270 : vector<8x128xf32>
    %272 = math.exp %271 : vector<8x128xf32>
    %cst_115 = arith.constant 1.000000e+00 : f32
    %273 = vector.broadcast %cst_115 : f32 to vector<8x128xf32>
    %274 = arith.addf %273, %272 : vector<8x128xf32>
    %275 = arith.divf %273, %274 : vector<8x128xf32>
    %276 = math.tanh %270 : vector<8x128xf32>
    %277 = vector.extract_strided_slice %275 {offsets = [0, 0], sizes = [8, 32], strides = [1, 1]} : vector<8x128xf32> to vector<8x32xf32>
    %278 = vector.extract_strided_slice %275 {offsets = [0, 32], sizes = [8, 32], strides = [1, 1]} : vector<8x128xf32> to vector<8x32xf32>
    %279 = vector.extract_strided_slice %275 {offsets = [0, 96], sizes = [8, 32], strides = [1, 1]} : vector<8x128xf32> to vector<8x32xf32>
    %280 = vector.extract_strided_slice %276 {offsets = [0, 64], sizes = [8, 32], strides = [1, 1]} : vector<8x128xf32> to vector<8x32xf32>
    %281 = arith.mulf %278, %200 : vector<8x32xf32>
    %282 = arith.mulf %277, %280 : vector<8x32xf32>
    %283 = arith.addf %281, %282 : vector<8x32xf32>
    %284 = math.tanh %283 : vector<8x32xf32>
    %285 = arith.mulf %279, %284 : vector<8x32xf32>
    %c2_116 = arith.constant 2 : index
    %c0_117 = arith.constant 0 : index
    %c0_118 = arith.constant 0 : index
    %286 = vector.load %arg2[%c2_116, %c0_117, %c0_118] : memref<8x8x32xf32, #tpu.memory_space<vmem>>, vector<1x8x32xf32>
    %287 = vector.shape_cast %286 : vector<1x8x32xf32> to vector<8x32xf32>
    %288 = arith.mulf %287, %285 : vector<8x32xf32>
    %289 = arith.addf %206, %288 : vector<8x32xf32>
    %c3_119 = arith.constant 3 : index
    %c0_120 = arith.constant 0 : index
    %c0_121 = arith.constant 0 : index
    %290 = vector.load %arg9[%c3_119, %c0_120, %c0_121] : memref<8x8x128xf32, #tpu.memory_space<vmem>>, vector<1x8x128xf32>
    %291 = vector.shape_cast %290 : vector<1x8x128xf32> to vector<8x128xf32>
    %292 = arith.truncf %227 : vector<8x32xf32> to vector<8x32xbf16>
    %c0_122 = arith.constant 0 : index
    %c0_123 = arith.constant 0 : index
    %293 = vector.load %arg4[%c0_122, %c0_123] : memref<32x128xbf16, #tpu.memory_space<vmem>>, vector<32x128xbf16>
    %cst_124 = arith.constant dense<0.000000e+00> : vector<8x128xf32>
    %294 = tpu.matmul %292, %293, %cst_124 {dimension_numbers = #tpu.dot_dimension_numbers<[1], [0], [0], [1], [0, 0, 1, 1], [], []>} : vector<8x32xbf16>, vector<32x128xbf16>, vector<8x128xf32> -> vector<8x128xf32>
    %295 = arith.addf %291, %294 : vector<8x128xf32>
    %296 = arith.negf %295 : vector<8x128xf32>
    %297 = math.exp %296 : vector<8x128xf32>
    %cst_125 = arith.constant 1.000000e+00 : f32
    %298 = vector.broadcast %cst_125 : f32 to vector<8x128xf32>
    %299 = arith.addf %298, %297 : vector<8x128xf32>
    %300 = arith.divf %298, %299 : vector<8x128xf32>
    %301 = math.tanh %295 : vector<8x128xf32>
    %302 = vector.extract_strided_slice %300 {offsets = [0, 0], sizes = [8, 32], strides = [1, 1]} : vector<8x128xf32> to vector<8x32xf32>
    %303 = vector.extract_strided_slice %300 {offsets = [0, 32], sizes = [8, 32], strides = [1, 1]} : vector<8x128xf32> to vector<8x32xf32>
    %304 = vector.extract_strided_slice %300 {offsets = [0, 96], sizes = [8, 32], strides = [1, 1]} : vector<8x128xf32> to vector<8x32xf32>
    %305 = vector.extract_strided_slice %301 {offsets = [0, 64], sizes = [8, 32], strides = [1, 1]} : vector<8x128xf32> to vector<8x32xf32>
    %306 = arith.mulf %303, %225 : vector<8x32xf32>
    %307 = arith.mulf %302, %305 : vector<8x32xf32>
    %308 = arith.addf %306, %307 : vector<8x32xf32>
    %309 = math.tanh %308 : vector<8x32xf32>
    %310 = arith.mulf %304, %309 : vector<8x32xf32>
    %311 = arith.truncf %310 : vector<8x32xf32> to vector<8x32xbf16>
    %c0_126 = arith.constant 0 : index
    %c0_127 = arith.constant 0 : index
    %c0_128 = arith.constant 0 : index
    %312 = vector.load %arg5[%c0_126, %c0_127, %c0_128] : memref<2x32x128xbf16, #tpu.memory_space<vmem>>, vector<1x32x128xbf16>
    %313 = vector.shape_cast %312 : vector<1x32x128xbf16> to vector<32x128xbf16>
    %cst_129 = arith.constant dense<0.000000e+00> : vector<8x128xf32>
    %314 = tpu.matmul %311, %313, %cst_129 {dimension_numbers = #tpu.dot_dimension_numbers<[1], [0], [0], [1], [0, 0, 1, 1], [], []>} : vector<8x32xbf16>, vector<32x128xbf16>, vector<8x128xf32> -> vector<8x128xf32>
    %315 = arith.truncf %256 : vector<8x32xf32> to vector<8x32xbf16>
    %c0_130 = arith.constant 0 : index
    %c0_131 = arith.constant 0 : index
    %c0_132 = arith.constant 0 : index
    %316 = vector.load %arg6[%c0_130, %c0_131, %c0_132] : memref<2x32x128xbf16, #tpu.memory_space<vmem>>, vector<1x32x128xbf16>
    %317 = vector.shape_cast %316 : vector<1x32x128xbf16> to vector<32x128xbf16>
    %cst_133 = arith.constant dense<0.000000e+00> : vector<8x128xf32>
    %318 = tpu.matmul %315, %317, %cst_133 {dimension_numbers = #tpu.dot_dimension_numbers<[1], [0], [0], [1], [0, 0, 1, 1], [], []>} : vector<8x32xbf16>, vector<32x128xbf16>, vector<8x128xf32> -> vector<8x128xf32>
    %319 = arith.addf %314, %318 : vector<8x128xf32>
    %c1_134 = arith.constant 1 : index
    %c0_135 = arith.constant 0 : index
    %320 = vector.load %arg7[%c1_134, %c0_135] : memref<3x128xf32, #tpu.memory_space<vmem>>, vector<1x128xf32>
    %321 = vector.shape_cast %320 : vector<1x128xf32> to vector<128xf32>
    %322 = vector.shape_cast %321 : vector<128xf32> to vector<1x128xf32>
    %323 = vector.broadcast %322 : vector<1x128xf32> to vector<8x128xf32>
    %324 = arith.addf %319, %323 : vector<8x128xf32>
    %325 = arith.negf %324 : vector<8x128xf32>
    %326 = math.exp %325 : vector<8x128xf32>
    %cst_136 = arith.constant 1.000000e+00 : f32
    %327 = vector.broadcast %cst_136 : f32 to vector<8x128xf32>
    %328 = arith.addf %327, %326 : vector<8x128xf32>
    %329 = arith.divf %327, %328 : vector<8x128xf32>
    %330 = math.tanh %324 : vector<8x128xf32>
    %331 = vector.extract_strided_slice %329 {offsets = [0, 0], sizes = [8, 32], strides = [1, 1]} : vector<8x128xf32> to vector<8x32xf32>
    %332 = vector.extract_strided_slice %329 {offsets = [0, 32], sizes = [8, 32], strides = [1, 1]} : vector<8x128xf32> to vector<8x32xf32>
    %333 = vector.extract_strided_slice %329 {offsets = [0, 96], sizes = [8, 32], strides = [1, 1]} : vector<8x128xf32> to vector<8x32xf32>
    %334 = vector.extract_strided_slice %330 {offsets = [0, 64], sizes = [8, 32], strides = [1, 1]} : vector<8x128xf32> to vector<8x32xf32>
    %335 = arith.mulf %332, %254 : vector<8x32xf32>
    %336 = arith.mulf %331, %334 : vector<8x32xf32>
    %337 = arith.addf %335, %336 : vector<8x32xf32>
    %338 = math.tanh %337 : vector<8x32xf32>
    %339 = arith.mulf %333, %338 : vector<8x32xf32>
    %340 = arith.truncf %339 : vector<8x32xf32> to vector<8x32xbf16>
    %c1_137 = arith.constant 1 : index
    %c0_138 = arith.constant 0 : index
    %c0_139 = arith.constant 0 : index
    %341 = vector.load %arg5[%c1_137, %c0_138, %c0_139] : memref<2x32x128xbf16, #tpu.memory_space<vmem>>, vector<1x32x128xbf16>
    %342 = vector.shape_cast %341 : vector<1x32x128xbf16> to vector<32x128xbf16>
    %cst_140 = arith.constant dense<0.000000e+00> : vector<8x128xf32>
    %343 = tpu.matmul %340, %342, %cst_140 {dimension_numbers = #tpu.dot_dimension_numbers<[1], [0], [0], [1], [0, 0, 1, 1], [], []>} : vector<8x32xbf16>, vector<32x128xbf16>, vector<8x128xf32> -> vector<8x128xf32>
    %344 = arith.truncf %285 : vector<8x32xf32> to vector<8x32xbf16>
    %c1_141 = arith.constant 1 : index
    %c0_142 = arith.constant 0 : index
    %c0_143 = arith.constant 0 : index
    %345 = vector.load %arg6[%c1_141, %c0_142, %c0_143] : memref<2x32x128xbf16, #tpu.memory_space<vmem>>, vector<1x32x128xbf16>
    %346 = vector.shape_cast %345 : vector<1x32x128xbf16> to vector<32x128xbf16>
    %cst_144 = arith.constant dense<0.000000e+00> : vector<8x128xf32>
    %347 = tpu.matmul %344, %346, %cst_144 {dimension_numbers = #tpu.dot_dimension_numbers<[1], [0], [0], [1], [0, 0, 1, 1], [], []>} : vector<8x32xbf16>, vector<32x128xbf16>, vector<8x128xf32> -> vector<8x128xf32>
    %348 = arith.addf %343, %347 : vector<8x128xf32>
    %c2_145 = arith.constant 2 : index
    %c0_146 = arith.constant 0 : index
    %349 = vector.load %arg7[%c2_145, %c0_146] : memref<3x128xf32, #tpu.memory_space<vmem>>, vector<1x128xf32>
    %350 = vector.shape_cast %349 : vector<1x128xf32> to vector<128xf32>
    %351 = vector.shape_cast %350 : vector<128xf32> to vector<1x128xf32>
    %352 = vector.broadcast %351 : vector<1x128xf32> to vector<8x128xf32>
    %353 = arith.addf %348, %352 : vector<8x128xf32>
    %354 = arith.negf %353 : vector<8x128xf32>
    %355 = math.exp %354 : vector<8x128xf32>
    %cst_147 = arith.constant 1.000000e+00 : f32
    %356 = vector.broadcast %cst_147 : f32 to vector<8x128xf32>
    %357 = arith.addf %356, %355 : vector<8x128xf32>
    %358 = arith.divf %356, %357 : vector<8x128xf32>
    %359 = math.tanh %353 : vector<8x128xf32>
    %360 = vector.extract_strided_slice %358 {offsets = [0, 0], sizes = [8, 32], strides = [1, 1]} : vector<8x128xf32> to vector<8x32xf32>
    %361 = vector.extract_strided_slice %358 {offsets = [0, 32], sizes = [8, 32], strides = [1, 1]} : vector<8x128xf32> to vector<8x32xf32>
    %362 = vector.extract_strided_slice %358 {offsets = [0, 96], sizes = [8, 32], strides = [1, 1]} : vector<8x128xf32> to vector<8x32xf32>
    %363 = vector.extract_strided_slice %359 {offsets = [0, 64], sizes = [8, 32], strides = [1, 1]} : vector<8x128xf32> to vector<8x32xf32>
    %364 = arith.mulf %361, %283 : vector<8x32xf32>
    %365 = arith.mulf %360, %363 : vector<8x32xf32>
    %366 = arith.addf %364, %365 : vector<8x32xf32>
    %367 = math.tanh %366 : vector<8x32xf32>
    %368 = arith.mulf %362, %367 : vector<8x32xf32>
    %c3_148 = arith.constant 3 : index
    %c0_149 = arith.constant 0 : index
    %c0_150 = arith.constant 0 : index
    %369 = vector.load %arg2[%c3_148, %c0_149, %c0_150] : memref<8x8x32xf32, #tpu.memory_space<vmem>>, vector<1x8x32xf32>
    %370 = vector.shape_cast %369 : vector<1x8x32xf32> to vector<8x32xf32>
    %371 = arith.mulf %370, %368 : vector<8x32xf32>
    %372 = arith.addf %289, %371 : vector<8x32xf32>
    %c4_151 = arith.constant 4 : index
    %c0_152 = arith.constant 0 : index
    %c0_153 = arith.constant 0 : index
    %373 = vector.load %arg9[%c4_151, %c0_152, %c0_153] : memref<8x8x128xf32, #tpu.memory_space<vmem>>, vector<1x8x128xf32>
    %374 = vector.shape_cast %373 : vector<1x8x128xf32> to vector<8x128xf32>
    %375 = arith.truncf %310 : vector<8x32xf32> to vector<8x32xbf16>
    %c0_154 = arith.constant 0 : index
    %c0_155 = arith.constant 0 : index
    %376 = vector.load %arg4[%c0_154, %c0_155] : memref<32x128xbf16, #tpu.memory_space<vmem>>, vector<32x128xbf16>
    %cst_156 = arith.constant dense<0.000000e+00> : vector<8x128xf32>
    %377 = tpu.matmul %375, %376, %cst_156 {dimension_numbers = #tpu.dot_dimension_numbers<[1], [0], [0], [1], [0, 0, 1, 1], [], []>} : vector<8x32xbf16>, vector<32x128xbf16>, vector<8x128xf32> -> vector<8x128xf32>
    %378 = arith.addf %374, %377 : vector<8x128xf32>
    %379 = arith.negf %378 : vector<8x128xf32>
    %380 = math.exp %379 : vector<8x128xf32>
    %cst_157 = arith.constant 1.000000e+00 : f32
    %381 = vector.broadcast %cst_157 : f32 to vector<8x128xf32>
    %382 = arith.addf %381, %380 : vector<8x128xf32>
    %383 = arith.divf %381, %382 : vector<8x128xf32>
    %384 = math.tanh %378 : vector<8x128xf32>
    %385 = vector.extract_strided_slice %383 {offsets = [0, 0], sizes = [8, 32], strides = [1, 1]} : vector<8x128xf32> to vector<8x32xf32>
    %386 = vector.extract_strided_slice %383 {offsets = [0, 32], sizes = [8, 32], strides = [1, 1]} : vector<8x128xf32> to vector<8x32xf32>
    %387 = vector.extract_strided_slice %383 {offsets = [0, 96], sizes = [8, 32], strides = [1, 1]} : vector<8x128xf32> to vector<8x32xf32>
    %388 = vector.extract_strided_slice %384 {offsets = [0, 64], sizes = [8, 32], strides = [1, 1]} : vector<8x128xf32> to vector<8x32xf32>
    %389 = arith.mulf %386, %308 : vector<8x32xf32>
    %390 = arith.mulf %385, %388 : vector<8x32xf32>
    %391 = arith.addf %389, %390 : vector<8x32xf32>
    %392 = math.tanh %391 : vector<8x32xf32>
    %393 = arith.mulf %387, %392 : vector<8x32xf32>
    %394 = arith.truncf %393 : vector<8x32xf32> to vector<8x32xbf16>
    %c0_158 = arith.constant 0 : index
    %c0_159 = arith.constant 0 : index
    %c0_160 = arith.constant 0 : index
    %395 = vector.load %arg5[%c0_158, %c0_159, %c0_160] : memref<2x32x128xbf16, #tpu.memory_space<vmem>>, vector<1x32x128xbf16>
    %396 = vector.shape_cast %395 : vector<1x32x128xbf16> to vector<32x128xbf16>
    %cst_161 = arith.constant dense<0.000000e+00> : vector<8x128xf32>
    %397 = tpu.matmul %394, %396, %cst_161 {dimension_numbers = #tpu.dot_dimension_numbers<[1], [0], [0], [1], [0, 0, 1, 1], [], []>} : vector<8x32xbf16>, vector<32x128xbf16>, vector<8x128xf32> -> vector<8x128xf32>
    %398 = arith.truncf %339 : vector<8x32xf32> to vector<8x32xbf16>
    %c0_162 = arith.constant 0 : index
    %c0_163 = arith.constant 0 : index
    %c0_164 = arith.constant 0 : index
    %399 = vector.load %arg6[%c0_162, %c0_163, %c0_164] : memref<2x32x128xbf16, #tpu.memory_space<vmem>>, vector<1x32x128xbf16>
    %400 = vector.shape_cast %399 : vector<1x32x128xbf16> to vector<32x128xbf16>
    %cst_165 = arith.constant dense<0.000000e+00> : vector<8x128xf32>
    %401 = tpu.matmul %398, %400, %cst_165 {dimension_numbers = #tpu.dot_dimension_numbers<[1], [0], [0], [1], [0, 0, 1, 1], [], []>} : vector<8x32xbf16>, vector<32x128xbf16>, vector<8x128xf32> -> vector<8x128xf32>
    %402 = arith.addf %397, %401 : vector<8x128xf32>
    %c1_166 = arith.constant 1 : index
    %c0_167 = arith.constant 0 : index
    %403 = vector.load %arg7[%c1_166, %c0_167] : memref<3x128xf32, #tpu.memory_space<vmem>>, vector<1x128xf32>
    %404 = vector.shape_cast %403 : vector<1x128xf32> to vector<128xf32>
    %405 = vector.shape_cast %404 : vector<128xf32> to vector<1x128xf32>
    %406 = vector.broadcast %405 : vector<1x128xf32> to vector<8x128xf32>
    %407 = arith.addf %402, %406 : vector<8x128xf32>
    %408 = arith.negf %407 : vector<8x128xf32>
    %409 = math.exp %408 : vector<8x128xf32>
    %cst_168 = arith.constant 1.000000e+00 : f32
    %410 = vector.broadcast %cst_168 : f32 to vector<8x128xf32>
    %411 = arith.addf %410, %409 : vector<8x128xf32>
    %412 = arith.divf %410, %411 : vector<8x128xf32>
    %413 = math.tanh %407 : vector<8x128xf32>
    %414 = vector.extract_strided_slice %412 {offsets = [0, 0], sizes = [8, 32], strides = [1, 1]} : vector<8x128xf32> to vector<8x32xf32>
    %415 = vector.extract_strided_slice %412 {offsets = [0, 32], sizes = [8, 32], strides = [1, 1]} : vector<8x128xf32> to vector<8x32xf32>
    %416 = vector.extract_strided_slice %412 {offsets = [0, 96], sizes = [8, 32], strides = [1, 1]} : vector<8x128xf32> to vector<8x32xf32>
    %417 = vector.extract_strided_slice %413 {offsets = [0, 64], sizes = [8, 32], strides = [1, 1]} : vector<8x128xf32> to vector<8x32xf32>
    %418 = arith.mulf %415, %337 : vector<8x32xf32>
    %419 = arith.mulf %414, %417 : vector<8x32xf32>
    %420 = arith.addf %418, %419 : vector<8x32xf32>
    %421 = math.tanh %420 : vector<8x32xf32>
    %422 = arith.mulf %416, %421 : vector<8x32xf32>
    %423 = arith.truncf %422 : vector<8x32xf32> to vector<8x32xbf16>
    %c1_169 = arith.constant 1 : index
    %c0_170 = arith.constant 0 : index
    %c0_171 = arith.constant 0 : index
    %424 = vector.load %arg5[%c1_169, %c0_170, %c0_171] : memref<2x32x128xbf16, #tpu.memory_space<vmem>>, vector<1x32x128xbf16>
    %425 = vector.shape_cast %424 : vector<1x32x128xbf16> to vector<32x128xbf16>
    %cst_172 = arith.constant dense<0.000000e+00> : vector<8x128xf32>
    %426 = tpu.matmul %423, %425, %cst_172 {dimension_numbers = #tpu.dot_dimension_numbers<[1], [0], [0], [1], [0, 0, 1, 1], [], []>} : vector<8x32xbf16>, vector<32x128xbf16>, vector<8x128xf32> -> vector<8x128xf32>
    %427 = arith.truncf %368 : vector<8x32xf32> to vector<8x32xbf16>
    %c1_173 = arith.constant 1 : index
    %c0_174 = arith.constant 0 : index
    %c0_175 = arith.constant 0 : index
    %428 = vector.load %arg6[%c1_173, %c0_174, %c0_175] : memref<2x32x128xbf16, #tpu.memory_space<vmem>>, vector<1x32x128xbf16>
    %429 = vector.shape_cast %428 : vector<1x32x128xbf16> to vector<32x128xbf16>
    %cst_176 = arith.constant dense<0.000000e+00> : vector<8x128xf32>
    %430 = tpu.matmul %427, %429, %cst_176 {dimension_numbers = #tpu.dot_dimension_numbers<[1], [0], [0], [1], [0, 0, 1, 1], [], []>} : vector<8x32xbf16>, vector<32x128xbf16>, vector<8x128xf32> -> vector<8x128xf32>
    %431 = arith.addf %426, %430 : vector<8x128xf32>
    %c2_177 = arith.constant 2 : index
    %c0_178 = arith.constant 0 : index
    %432 = vector.load %arg7[%c2_177, %c0_178] : memref<3x128xf32, #tpu.memory_space<vmem>>, vector<1x128xf32>
    %433 = vector.shape_cast %432 : vector<1x128xf32> to vector<128xf32>
    %434 = vector.shape_cast %433 : vector<128xf32> to vector<1x128xf32>
    %435 = vector.broadcast %434 : vector<1x128xf32> to vector<8x128xf32>
    %436 = arith.addf %431, %435 : vector<8x128xf32>
    %437 = arith.negf %436 : vector<8x128xf32>
    %438 = math.exp %437 : vector<8x128xf32>
    %cst_179 = arith.constant 1.000000e+00 : f32
    %439 = vector.broadcast %cst_179 : f32 to vector<8x128xf32>
    %440 = arith.addf %439, %438 : vector<8x128xf32>
    %441 = arith.divf %439, %440 : vector<8x128xf32>
    %442 = math.tanh %436 : vector<8x128xf32>
    %443 = vector.extract_strided_slice %441 {offsets = [0, 0], sizes = [8, 32], strides = [1, 1]} : vector<8x128xf32> to vector<8x32xf32>
    %444 = vector.extract_strided_slice %441 {offsets = [0, 32], sizes = [8, 32], strides = [1, 1]} : vector<8x128xf32> to vector<8x32xf32>
    %445 = vector.extract_strided_slice %441 {offsets = [0, 96], sizes = [8, 32], strides = [1, 1]} : vector<8x128xf32> to vector<8x32xf32>
    %446 = vector.extract_strided_slice %442 {offsets = [0, 64], sizes = [8, 32], strides = [1, 1]} : vector<8x128xf32> to vector<8x32xf32>
    %447 = arith.mulf %444, %366 : vector<8x32xf32>
    %448 = arith.mulf %443, %446 : vector<8x32xf32>
    %449 = arith.addf %447, %448 : vector<8x32xf32>
    %450 = math.tanh %449 : vector<8x32xf32>
    %451 = arith.mulf %445, %450 : vector<8x32xf32>
    %c4_180 = arith.constant 4 : index
    %c0_181 = arith.constant 0 : index
    %c0_182 = arith.constant 0 : index
    %452 = vector.load %arg2[%c4_180, %c0_181, %c0_182] : memref<8x8x32xf32, #tpu.memory_space<vmem>>, vector<1x8x32xf32>
    %453 = vector.shape_cast %452 : vector<1x8x32xf32> to vector<8x32xf32>
    %454 = arith.mulf %453, %451 : vector<8x32xf32>
    %455 = arith.addf %372, %454 : vector<8x32xf32>
    %c5_183 = arith.constant 5 : index
    %c0_184 = arith.constant 0 : index
    %c0_185 = arith.constant 0 : index
    %456 = vector.load %arg9[%c5_183, %c0_184, %c0_185] : memref<8x8x128xf32, #tpu.memory_space<vmem>>, vector<1x8x128xf32>
    %457 = vector.shape_cast %456 : vector<1x8x128xf32> to vector<8x128xf32>
    %458 = arith.truncf %393 : vector<8x32xf32> to vector<8x32xbf16>
    %c0_186 = arith.constant 0 : index
    %c0_187 = arith.constant 0 : index
    %459 = vector.load %arg4[%c0_186, %c0_187] : memref<32x128xbf16, #tpu.memory_space<vmem>>, vector<32x128xbf16>
    %cst_188 = arith.constant dense<0.000000e+00> : vector<8x128xf32>
    %460 = tpu.matmul %458, %459, %cst_188 {dimension_numbers = #tpu.dot_dimension_numbers<[1], [0], [0], [1], [0, 0, 1, 1], [], []>} : vector<8x32xbf16>, vector<32x128xbf16>, vector<8x128xf32> -> vector<8x128xf32>
    %461 = arith.addf %457, %460 : vector<8x128xf32>
    %462 = arith.negf %461 : vector<8x128xf32>
    %463 = math.exp %462 : vector<8x128xf32>
    %cst_189 = arith.constant 1.000000e+00 : f32
    %464 = vector.broadcast %cst_189 : f32 to vector<8x128xf32>
    %465 = arith.addf %464, %463 : vector<8x128xf32>
    %466 = arith.divf %464, %465 : vector<8x128xf32>
    %467 = math.tanh %461 : vector<8x128xf32>
    %468 = vector.extract_strided_slice %466 {offsets = [0, 0], sizes = [8, 32], strides = [1, 1]} : vector<8x128xf32> to vector<8x32xf32>
    %469 = vector.extract_strided_slice %466 {offsets = [0, 32], sizes = [8, 32], strides = [1, 1]} : vector<8x128xf32> to vector<8x32xf32>
    %470 = vector.extract_strided_slice %466 {offsets = [0, 96], sizes = [8, 32], strides = [1, 1]} : vector<8x128xf32> to vector<8x32xf32>
    %471 = vector.extract_strided_slice %467 {offsets = [0, 64], sizes = [8, 32], strides = [1, 1]} : vector<8x128xf32> to vector<8x32xf32>
    %472 = arith.mulf %469, %391 : vector<8x32xf32>
    %473 = arith.mulf %468, %471 : vector<8x32xf32>
    %474 = arith.addf %472, %473 : vector<8x32xf32>
    %475 = math.tanh %474 : vector<8x32xf32>
    %476 = arith.mulf %470, %475 : vector<8x32xf32>
    %477 = arith.truncf %476 : vector<8x32xf32> to vector<8x32xbf16>
    %c0_190 = arith.constant 0 : index
    %c0_191 = arith.constant 0 : index
    %c0_192 = arith.constant 0 : index
    %478 = vector.load %arg5[%c0_190, %c0_191, %c0_192] : memref<2x32x128xbf16, #tpu.memory_space<vmem>>, vector<1x32x128xbf16>
    %479 = vector.shape_cast %478 : vector<1x32x128xbf16> to vector<32x128xbf16>
    %cst_193 = arith.constant dense<0.000000e+00> : vector<8x128xf32>
    %480 = tpu.matmul %477, %479, %cst_193 {dimension_numbers = #tpu.dot_dimension_numbers<[1], [0], [0], [1], [0, 0, 1, 1], [], []>} : vector<8x32xbf16>, vector<32x128xbf16>, vector<8x128xf32> -> vector<8x128xf32>
    %481 = arith.truncf %422 : vector<8x32xf32> to vector<8x32xbf16>
    %c0_194 = arith.constant 0 : index
    %c0_195 = arith.constant 0 : index
    %c0_196 = arith.constant 0 : index
    %482 = vector.load %arg6[%c0_194, %c0_195, %c0_196] : memref<2x32x128xbf16, #tpu.memory_space<vmem>>, vector<1x32x128xbf16>
    %483 = vector.shape_cast %482 : vector<1x32x128xbf16> to vector<32x128xbf16>
    %cst_197 = arith.constant dense<0.000000e+00> : vector<8x128xf32>
    %484 = tpu.matmul %481, %483, %cst_197 {dimension_numbers = #tpu.dot_dimension_numbers<[1], [0], [0], [1], [0, 0, 1, 1], [], []>} : vector<8x32xbf16>, vector<32x128xbf16>, vector<8x128xf32> -> vector<8x128xf32>
    %485 = arith.addf %480, %484 : vector<8x128xf32>
    %c1_198 = arith.constant 1 : index
    %c0_199 = arith.constant 0 : index
    %486 = vector.load %arg7[%c1_198, %c0_199] : memref<3x128xf32, #tpu.memory_space<vmem>>, vector<1x128xf32>
    %487 = vector.shape_cast %486 : vector<1x128xf32> to vector<128xf32>
    %488 = vector.shape_cast %487 : vector<128xf32> to vector<1x128xf32>
    %489 = vector.broadcast %488 : vector<1x128xf32> to vector<8x128xf32>
    %490 = arith.addf %485, %489 : vector<8x128xf32>
    %491 = arith.negf %490 : vector<8x128xf32>
    %492 = math.exp %491 : vector<8x128xf32>
    %cst_200 = arith.constant 1.000000e+00 : f32
    %493 = vector.broadcast %cst_200 : f32 to vector<8x128xf32>
    %494 = arith.addf %493, %492 : vector<8x128xf32>
    %495 = arith.divf %493, %494 : vector<8x128xf32>
    %496 = math.tanh %490 : vector<8x128xf32>
    %497 = vector.extract_strided_slice %495 {offsets = [0, 0], sizes = [8, 32], strides = [1, 1]} : vector<8x128xf32> to vector<8x32xf32>
    %498 = vector.extract_strided_slice %495 {offsets = [0, 32], sizes = [8, 32], strides = [1, 1]} : vector<8x128xf32> to vector<8x32xf32>
    %499 = vector.extract_strided_slice %495 {offsets = [0, 96], sizes = [8, 32], strides = [1, 1]} : vector<8x128xf32> to vector<8x32xf32>
    %500 = vector.extract_strided_slice %496 {offsets = [0, 64], sizes = [8, 32], strides = [1, 1]} : vector<8x128xf32> to vector<8x32xf32>
    %501 = arith.mulf %498, %420 : vector<8x32xf32>
    %502 = arith.mulf %497, %500 : vector<8x32xf32>
    %503 = arith.addf %501, %502 : vector<8x32xf32>
    %504 = math.tanh %503 : vector<8x32xf32>
    %505 = arith.mulf %499, %504 : vector<8x32xf32>
    %506 = arith.truncf %505 : vector<8x32xf32> to vector<8x32xbf16>
    %c1_201 = arith.constant 1 : index
    %c0_202 = arith.constant 0 : index
    %c0_203 = arith.constant 0 : index
    %507 = vector.load %arg5[%c1_201, %c0_202, %c0_203] : memref<2x32x128xbf16, #tpu.memory_space<vmem>>, vector<1x32x128xbf16>
    %508 = vector.shape_cast %507 : vector<1x32x128xbf16> to vector<32x128xbf16>
    %cst_204 = arith.constant dense<0.000000e+00> : vector<8x128xf32>
    %509 = tpu.matmul %506, %508, %cst_204 {dimension_numbers = #tpu.dot_dimension_numbers<[1], [0], [0], [1], [0, 0, 1, 1], [], []>} : vector<8x32xbf16>, vector<32x128xbf16>, vector<8x128xf32> -> vector<8x128xf32>
    %510 = arith.truncf %451 : vector<8x32xf32> to vector<8x32xbf16>
    %c1_205 = arith.constant 1 : index
    %c0_206 = arith.constant 0 : index
    %c0_207 = arith.constant 0 : index
    %511 = vector.load %arg6[%c1_205, %c0_206, %c0_207] : memref<2x32x128xbf16, #tpu.memory_space<vmem>>, vector<1x32x128xbf16>
    %512 = vector.shape_cast %511 : vector<1x32x128xbf16> to vector<32x128xbf16>
    %cst_208 = arith.constant dense<0.000000e+00> : vector<8x128xf32>
    %513 = tpu.matmul %510, %512, %cst_208 {dimension_numbers = #tpu.dot_dimension_numbers<[1], [0], [0], [1], [0, 0, 1, 1], [], []>} : vector<8x32xbf16>, vector<32x128xbf16>, vector<8x128xf32> -> vector<8x128xf32>
    %514 = arith.addf %509, %513 : vector<8x128xf32>
    %c2_209 = arith.constant 2 : index
    %c0_210 = arith.constant 0 : index
    %515 = vector.load %arg7[%c2_209, %c0_210] : memref<3x128xf32, #tpu.memory_space<vmem>>, vector<1x128xf32>
    %516 = vector.shape_cast %515 : vector<1x128xf32> to vector<128xf32>
    %517 = vector.shape_cast %516 : vector<128xf32> to vector<1x128xf32>
    %518 = vector.broadcast %517 : vector<1x128xf32> to vector<8x128xf32>
    %519 = arith.addf %514, %518 : vector<8x128xf32>
    %520 = arith.negf %519 : vector<8x128xf32>
    %521 = math.exp %520 : vector<8x128xf32>
    %cst_211 = arith.constant 1.000000e+00 : f32
    %522 = vector.broadcast %cst_211 : f32 to vector<8x128xf32>
    %523 = arith.addf %522, %521 : vector<8x128xf32>
    %524 = arith.divf %522, %523 : vector<8x128xf32>
    %525 = math.tanh %519 : vector<8x128xf32>
    %526 = vector.extract_strided_slice %524 {offsets = [0, 0], sizes = [8, 32], strides = [1, 1]} : vector<8x128xf32> to vector<8x32xf32>
    %527 = vector.extract_strided_slice %524 {offsets = [0, 32], sizes = [8, 32], strides = [1, 1]} : vector<8x128xf32> to vector<8x32xf32>
    %528 = vector.extract_strided_slice %524 {offsets = [0, 96], sizes = [8, 32], strides = [1, 1]} : vector<8x128xf32> to vector<8x32xf32>
    %529 = vector.extract_strided_slice %525 {offsets = [0, 64], sizes = [8, 32], strides = [1, 1]} : vector<8x128xf32> to vector<8x32xf32>
    %530 = arith.mulf %527, %449 : vector<8x32xf32>
    %531 = arith.mulf %526, %529 : vector<8x32xf32>
    %532 = arith.addf %530, %531 : vector<8x32xf32>
    %533 = math.tanh %532 : vector<8x32xf32>
    %534 = arith.mulf %528, %533 : vector<8x32xf32>
    %c5_212 = arith.constant 5 : index
    %c0_213 = arith.constant 0 : index
    %c0_214 = arith.constant 0 : index
    %535 = vector.load %arg2[%c5_212, %c0_213, %c0_214] : memref<8x8x32xf32, #tpu.memory_space<vmem>>, vector<1x8x32xf32>
    %536 = vector.shape_cast %535 : vector<1x8x32xf32> to vector<8x32xf32>
    %537 = arith.mulf %536, %534 : vector<8x32xf32>
    %538 = arith.addf %455, %537 : vector<8x32xf32>
    %c6_215 = arith.constant 6 : index
    %c0_216 = arith.constant 0 : index
    %c0_217 = arith.constant 0 : index
    %539 = vector.load %arg9[%c6_215, %c0_216, %c0_217] : memref<8x8x128xf32, #tpu.memory_space<vmem>>, vector<1x8x128xf32>
    %540 = vector.shape_cast %539 : vector<1x8x128xf32> to vector<8x128xf32>
    %541 = arith.truncf %476 : vector<8x32xf32> to vector<8x32xbf16>
    %c0_218 = arith.constant 0 : index
    %c0_219 = arith.constant 0 : index
    %542 = vector.load %arg4[%c0_218, %c0_219] : memref<32x128xbf16, #tpu.memory_space<vmem>>, vector<32x128xbf16>
    %cst_220 = arith.constant dense<0.000000e+00> : vector<8x128xf32>
    %543 = tpu.matmul %541, %542, %cst_220 {dimension_numbers = #tpu.dot_dimension_numbers<[1], [0], [0], [1], [0, 0, 1, 1], [], []>} : vector<8x32xbf16>, vector<32x128xbf16>, vector<8x128xf32> -> vector<8x128xf32>
    %544 = arith.addf %540, %543 : vector<8x128xf32>
    %545 = arith.negf %544 : vector<8x128xf32>
    %546 = math.exp %545 : vector<8x128xf32>
    %cst_221 = arith.constant 1.000000e+00 : f32
    %547 = vector.broadcast %cst_221 : f32 to vector<8x128xf32>
    %548 = arith.addf %547, %546 : vector<8x128xf32>
    %549 = arith.divf %547, %548 : vector<8x128xf32>
    %550 = math.tanh %544 : vector<8x128xf32>
    %551 = vector.extract_strided_slice %549 {offsets = [0, 0], sizes = [8, 32], strides = [1, 1]} : vector<8x128xf32> to vector<8x32xf32>
    %552 = vector.extract_strided_slice %549 {offsets = [0, 32], sizes = [8, 32], strides = [1, 1]} : vector<8x128xf32> to vector<8x32xf32>
    %553 = vector.extract_strided_slice %549 {offsets = [0, 96], sizes = [8, 32], strides = [1, 1]} : vector<8x128xf32> to vector<8x32xf32>
    %554 = vector.extract_strided_slice %550 {offsets = [0, 64], sizes = [8, 32], strides = [1, 1]} : vector<8x128xf32> to vector<8x32xf32>
    %555 = arith.mulf %552, %474 : vector<8x32xf32>
    %556 = arith.mulf %551, %554 : vector<8x32xf32>
    %557 = arith.addf %555, %556 : vector<8x32xf32>
    %558 = math.tanh %557 : vector<8x32xf32>
    %559 = arith.mulf %553, %558 : vector<8x32xf32>
    %560 = arith.truncf %559 : vector<8x32xf32> to vector<8x32xbf16>
    %c0_222 = arith.constant 0 : index
    %c0_223 = arith.constant 0 : index
    %c0_224 = arith.constant 0 : index
    %561 = vector.load %arg5[%c0_222, %c0_223, %c0_224] : memref<2x32x128xbf16, #tpu.memory_space<vmem>>, vector<1x32x128xbf16>
    %562 = vector.shape_cast %561 : vector<1x32x128xbf16> to vector<32x128xbf16>
    %cst_225 = arith.constant dense<0.000000e+00> : vector<8x128xf32>
    %563 = tpu.matmul %560, %562, %cst_225 {dimension_numbers = #tpu.dot_dimension_numbers<[1], [0], [0], [1], [0, 0, 1, 1], [], []>} : vector<8x32xbf16>, vector<32x128xbf16>, vector<8x128xf32> -> vector<8x128xf32>
    %564 = arith.truncf %505 : vector<8x32xf32> to vector<8x32xbf16>
    %c0_226 = arith.constant 0 : index
    %c0_227 = arith.constant 0 : index
    %c0_228 = arith.constant 0 : index
    %565 = vector.load %arg6[%c0_226, %c0_227, %c0_228] : memref<2x32x128xbf16, #tpu.memory_space<vmem>>, vector<1x32x128xbf16>
    %566 = vector.shape_cast %565 : vector<1x32x128xbf16> to vector<32x128xbf16>
    %cst_229 = arith.constant dense<0.000000e+00> : vector<8x128xf32>
    %567 = tpu.matmul %564, %566, %cst_229 {dimension_numbers = #tpu.dot_dimension_numbers<[1], [0], [0], [1], [0, 0, 1, 1], [], []>} : vector<8x32xbf16>, vector<32x128xbf16>, vector<8x128xf32> -> vector<8x128xf32>
    %568 = arith.addf %563, %567 : vector<8x128xf32>
    %c1_230 = arith.constant 1 : index
    %c0_231 = arith.constant 0 : index
    %569 = vector.load %arg7[%c1_230, %c0_231] : memref<3x128xf32, #tpu.memory_space<vmem>>, vector<1x128xf32>
    %570 = vector.shape_cast %569 : vector<1x128xf32> to vector<128xf32>
    %571 = vector.shape_cast %570 : vector<128xf32> to vector<1x128xf32>
    %572 = vector.broadcast %571 : vector<1x128xf32> to vector<8x128xf32>
    %573 = arith.addf %568, %572 : vector<8x128xf32>
    %574 = arith.negf %573 : vector<8x128xf32>
    %575 = math.exp %574 : vector<8x128xf32>
    %cst_232 = arith.constant 1.000000e+00 : f32
    %576 = vector.broadcast %cst_232 : f32 to vector<8x128xf32>
    %577 = arith.addf %576, %575 : vector<8x128xf32>
    %578 = arith.divf %576, %577 : vector<8x128xf32>
    %579 = math.tanh %573 : vector<8x128xf32>
    %580 = vector.extract_strided_slice %578 {offsets = [0, 0], sizes = [8, 32], strides = [1, 1]} : vector<8x128xf32> to vector<8x32xf32>
    %581 = vector.extract_strided_slice %578 {offsets = [0, 32], sizes = [8, 32], strides = [1, 1]} : vector<8x128xf32> to vector<8x32xf32>
    %582 = vector.extract_strided_slice %578 {offsets = [0, 96], sizes = [8, 32], strides = [1, 1]} : vector<8x128xf32> to vector<8x32xf32>
    %583 = vector.extract_strided_slice %579 {offsets = [0, 64], sizes = [8, 32], strides = [1, 1]} : vector<8x128xf32> to vector<8x32xf32>
    %584 = arith.mulf %581, %503 : vector<8x32xf32>
    %585 = arith.mulf %580, %583 : vector<8x32xf32>
    %586 = arith.addf %584, %585 : vector<8x32xf32>
    %587 = math.tanh %586 : vector<8x32xf32>
    %588 = arith.mulf %582, %587 : vector<8x32xf32>
    %589 = arith.truncf %588 : vector<8x32xf32> to vector<8x32xbf16>
    %c1_233 = arith.constant 1 : index
    %c0_234 = arith.constant 0 : index
    %c0_235 = arith.constant 0 : index
    %590 = vector.load %arg5[%c1_233, %c0_234, %c0_235] : memref<2x32x128xbf16, #tpu.memory_space<vmem>>, vector<1x32x128xbf16>
    %591 = vector.shape_cast %590 : vector<1x32x128xbf16> to vector<32x128xbf16>
    %cst_236 = arith.constant dense<0.000000e+00> : vector<8x128xf32>
    %592 = tpu.matmul %589, %591, %cst_236 {dimension_numbers = #tpu.dot_dimension_numbers<[1], [0], [0], [1], [0, 0, 1, 1], [], []>} : vector<8x32xbf16>, vector<32x128xbf16>, vector<8x128xf32> -> vector<8x128xf32>
    %593 = arith.truncf %534 : vector<8x32xf32> to vector<8x32xbf16>
    %c1_237 = arith.constant 1 : index
    %c0_238 = arith.constant 0 : index
    %c0_239 = arith.constant 0 : index
    %594 = vector.load %arg6[%c1_237, %c0_238, %c0_239] : memref<2x32x128xbf16, #tpu.memory_space<vmem>>, vector<1x32x128xbf16>
    %595 = vector.shape_cast %594 : vector<1x32x128xbf16> to vector<32x128xbf16>
    %cst_240 = arith.constant dense<0.000000e+00> : vector<8x128xf32>
    %596 = tpu.matmul %593, %595, %cst_240 {dimension_numbers = #tpu.dot_dimension_numbers<[1], [0], [0], [1], [0, 0, 1, 1], [], []>} : vector<8x32xbf16>, vector<32x128xbf16>, vector<8x128xf32> -> vector<8x128xf32>
    %597 = arith.addf %592, %596 : vector<8x128xf32>
    %c2_241 = arith.constant 2 : index
    %c0_242 = arith.constant 0 : index
    %598 = vector.load %arg7[%c2_241, %c0_242] : memref<3x128xf32, #tpu.memory_space<vmem>>, vector<1x128xf32>
    %599 = vector.shape_cast %598 : vector<1x128xf32> to vector<128xf32>
    %600 = vector.shape_cast %599 : vector<128xf32> to vector<1x128xf32>
    %601 = vector.broadcast %600 : vector<1x128xf32> to vector<8x128xf32>
    %602 = arith.addf %597, %601 : vector<8x128xf32>
    %603 = arith.negf %602 : vector<8x128xf32>
    %604 = math.exp %603 : vector<8x128xf32>
    %cst_243 = arith.constant 1.000000e+00 : f32
    %605 = vector.broadcast %cst_243 : f32 to vector<8x128xf32>
    %606 = arith.addf %605, %604 : vector<8x128xf32>
    %607 = arith.divf %605, %606 : vector<8x128xf32>
    %608 = math.tanh %602 : vector<8x128xf32>
    %609 = vector.extract_strided_slice %607 {offsets = [0, 0], sizes = [8, 32], strides = [1, 1]} : vector<8x128xf32> to vector<8x32xf32>
    %610 = vector.extract_strided_slice %607 {offsets = [0, 32], sizes = [8, 32], strides = [1, 1]} : vector<8x128xf32> to vector<8x32xf32>
    %611 = vector.extract_strided_slice %607 {offsets = [0, 96], sizes = [8, 32], strides = [1, 1]} : vector<8x128xf32> to vector<8x32xf32>
    %612 = vector.extract_strided_slice %608 {offsets = [0, 64], sizes = [8, 32], strides = [1, 1]} : vector<8x128xf32> to vector<8x32xf32>
    %613 = arith.mulf %610, %532 : vector<8x32xf32>
    %614 = arith.mulf %609, %612 : vector<8x32xf32>
    %615 = arith.addf %613, %614 : vector<8x32xf32>
    %616 = math.tanh %615 : vector<8x32xf32>
    %617 = arith.mulf %611, %616 : vector<8x32xf32>
    %c6_244 = arith.constant 6 : index
    %c0_245 = arith.constant 0 : index
    %c0_246 = arith.constant 0 : index
    %618 = vector.load %arg2[%c6_244, %c0_245, %c0_246] : memref<8x8x32xf32, #tpu.memory_space<vmem>>, vector<1x8x32xf32>
    %619 = vector.shape_cast %618 : vector<1x8x32xf32> to vector<8x32xf32>
    %620 = arith.mulf %619, %617 : vector<8x32xf32>
    %621 = arith.addf %538, %620 : vector<8x32xf32>
    %c7_247 = arith.constant 7 : index
    %c0_248 = arith.constant 0 : index
    %c0_249 = arith.constant 0 : index
    %622 = vector.load %arg9[%c7_247, %c0_248, %c0_249] : memref<8x8x128xf32, #tpu.memory_space<vmem>>, vector<1x8x128xf32>
    %623 = vector.shape_cast %622 : vector<1x8x128xf32> to vector<8x128xf32>
    %624 = arith.truncf %559 : vector<8x32xf32> to vector<8x32xbf16>
    %c0_250 = arith.constant 0 : index
    %c0_251 = arith.constant 0 : index
    %625 = vector.load %arg4[%c0_250, %c0_251] : memref<32x128xbf16, #tpu.memory_space<vmem>>, vector<32x128xbf16>
    %cst_252 = arith.constant dense<0.000000e+00> : vector<8x128xf32>
    %626 = tpu.matmul %624, %625, %cst_252 {dimension_numbers = #tpu.dot_dimension_numbers<[1], [0], [0], [1], [0, 0, 1, 1], [], []>} : vector<8x32xbf16>, vector<32x128xbf16>, vector<8x128xf32> -> vector<8x128xf32>
    %627 = arith.addf %623, %626 : vector<8x128xf32>
    %628 = arith.negf %627 : vector<8x128xf32>
    %629 = math.exp %628 : vector<8x128xf32>
    %cst_253 = arith.constant 1.000000e+00 : f32
    %630 = vector.broadcast %cst_253 : f32 to vector<8x128xf32>
    %631 = arith.addf %630, %629 : vector<8x128xf32>
    %632 = arith.divf %630, %631 : vector<8x128xf32>
    %633 = math.tanh %627 : vector<8x128xf32>
    %634 = vector.extract_strided_slice %632 {offsets = [0, 0], sizes = [8, 32], strides = [1, 1]} : vector<8x128xf32> to vector<8x32xf32>
    %635 = vector.extract_strided_slice %632 {offsets = [0, 32], sizes = [8, 32], strides = [1, 1]} : vector<8x128xf32> to vector<8x32xf32>
    %636 = vector.extract_strided_slice %632 {offsets = [0, 96], sizes = [8, 32], strides = [1, 1]} : vector<8x128xf32> to vector<8x32xf32>
    %637 = vector.extract_strided_slice %633 {offsets = [0, 64], sizes = [8, 32], strides = [1, 1]} : vector<8x128xf32> to vector<8x32xf32>
    %638 = arith.mulf %635, %557 : vector<8x32xf32>
    %639 = arith.mulf %634, %637 : vector<8x32xf32>
    %640 = arith.addf %638, %639 : vector<8x32xf32>
    %641 = math.tanh %640 : vector<8x32xf32>
    %642 = arith.mulf %636, %641 : vector<8x32xf32>
    %643 = arith.truncf %642 : vector<8x32xf32> to vector<8x32xbf16>
    %c0_254 = arith.constant 0 : index
    %c0_255 = arith.constant 0 : index
    %c0_256 = arith.constant 0 : index
    %644 = vector.load %arg5[%c0_254, %c0_255, %c0_256] : memref<2x32x128xbf16, #tpu.memory_space<vmem>>, vector<1x32x128xbf16>
    %645 = vector.shape_cast %644 : vector<1x32x128xbf16> to vector<32x128xbf16>
    %cst_257 = arith.constant dense<0.000000e+00> : vector<8x128xf32>
    %646 = tpu.matmul %643, %645, %cst_257 {dimension_numbers = #tpu.dot_dimension_numbers<[1], [0], [0], [1], [0, 0, 1, 1], [], []>} : vector<8x32xbf16>, vector<32x128xbf16>, vector<8x128xf32> -> vector<8x128xf32>
    %647 = arith.truncf %588 : vector<8x32xf32> to vector<8x32xbf16>
    %c0_258 = arith.constant 0 : index
    %c0_259 = arith.constant 0 : index
    %c0_260 = arith.constant 0 : index
    %648 = vector.load %arg6[%c0_258, %c0_259, %c0_260] : memref<2x32x128xbf16, #tpu.memory_space<vmem>>, vector<1x32x128xbf16>
    %649 = vector.shape_cast %648 : vector<1x32x128xbf16> to vector<32x128xbf16>
    %cst_261 = arith.constant dense<0.000000e+00> : vector<8x128xf32>
    %650 = tpu.matmul %647, %649, %cst_261 {dimension_numbers = #tpu.dot_dimension_numbers<[1], [0], [0], [1], [0, 0, 1, 1], [], []>} : vector<8x32xbf16>, vector<32x128xbf16>, vector<8x128xf32> -> vector<8x128xf32>
    %651 = arith.addf %646, %650 : vector<8x128xf32>
    %c1_262 = arith.constant 1 : index
    %c0_263 = arith.constant 0 : index
    %652 = vector.load %arg7[%c1_262, %c0_263] : memref<3x128xf32, #tpu.memory_space<vmem>>, vector<1x128xf32>
    %653 = vector.shape_cast %652 : vector<1x128xf32> to vector<128xf32>
    %654 = vector.shape_cast %653 : vector<128xf32> to vector<1x128xf32>
    %655 = vector.broadcast %654 : vector<1x128xf32> to vector<8x128xf32>
    %656 = arith.addf %651, %655 : vector<8x128xf32>
    %657 = arith.negf %656 : vector<8x128xf32>
    %658 = math.exp %657 : vector<8x128xf32>
    %cst_264 = arith.constant 1.000000e+00 : f32
    %659 = vector.broadcast %cst_264 : f32 to vector<8x128xf32>
    %660 = arith.addf %659, %658 : vector<8x128xf32>
    %661 = arith.divf %659, %660 : vector<8x128xf32>
    %662 = math.tanh %656 : vector<8x128xf32>
    %663 = vector.extract_strided_slice %661 {offsets = [0, 0], sizes = [8, 32], strides = [1, 1]} : vector<8x128xf32> to vector<8x32xf32>
    %664 = vector.extract_strided_slice %661 {offsets = [0, 32], sizes = [8, 32], strides = [1, 1]} : vector<8x128xf32> to vector<8x32xf32>
    %665 = vector.extract_strided_slice %661 {offsets = [0, 96], sizes = [8, 32], strides = [1, 1]} : vector<8x128xf32> to vector<8x32xf32>
    %666 = vector.extract_strided_slice %662 {offsets = [0, 64], sizes = [8, 32], strides = [1, 1]} : vector<8x128xf32> to vector<8x32xf32>
    %667 = arith.mulf %664, %586 : vector<8x32xf32>
    %668 = arith.mulf %663, %666 : vector<8x32xf32>
    %669 = arith.addf %667, %668 : vector<8x32xf32>
    %670 = math.tanh %669 : vector<8x32xf32>
    %671 = arith.mulf %665, %670 : vector<8x32xf32>
    %672 = arith.truncf %671 : vector<8x32xf32> to vector<8x32xbf16>
    %c1_265 = arith.constant 1 : index
    %c0_266 = arith.constant 0 : index
    %c0_267 = arith.constant 0 : index
    %673 = vector.load %arg5[%c1_265, %c0_266, %c0_267] : memref<2x32x128xbf16, #tpu.memory_space<vmem>>, vector<1x32x128xbf16>
    %674 = vector.shape_cast %673 : vector<1x32x128xbf16> to vector<32x128xbf16>
    %cst_268 = arith.constant dense<0.000000e+00> : vector<8x128xf32>
    %675 = tpu.matmul %672, %674, %cst_268 {dimension_numbers = #tpu.dot_dimension_numbers<[1], [0], [0], [1], [0, 0, 1, 1], [], []>} : vector<8x32xbf16>, vector<32x128xbf16>, vector<8x128xf32> -> vector<8x128xf32>
    %676 = arith.truncf %617 : vector<8x32xf32> to vector<8x32xbf16>
    %c1_269 = arith.constant 1 : index
    %c0_270 = arith.constant 0 : index
    %c0_271 = arith.constant 0 : index
    %677 = vector.load %arg6[%c1_269, %c0_270, %c0_271] : memref<2x32x128xbf16, #tpu.memory_space<vmem>>, vector<1x32x128xbf16>
    %678 = vector.shape_cast %677 : vector<1x32x128xbf16> to vector<32x128xbf16>
    %cst_272 = arith.constant dense<0.000000e+00> : vector<8x128xf32>
    %679 = tpu.matmul %676, %678, %cst_272 {dimension_numbers = #tpu.dot_dimension_numbers<[1], [0], [0], [1], [0, 0, 1, 1], [], []>} : vector<8x32xbf16>, vector<32x128xbf16>, vector<8x128xf32> -> vector<8x128xf32>
    %680 = arith.addf %675, %679 : vector<8x128xf32>
    %c2_273 = arith.constant 2 : index
    %c0_274 = arith.constant 0 : index
    %681 = vector.load %arg7[%c2_273, %c0_274] : memref<3x128xf32, #tpu.memory_space<vmem>>, vector<1x128xf32>
    %682 = vector.shape_cast %681 : vector<1x128xf32> to vector<128xf32>
    %683 = vector.shape_cast %682 : vector<128xf32> to vector<1x128xf32>
    %684 = vector.broadcast %683 : vector<1x128xf32> to vector<8x128xf32>
    %685 = arith.addf %680, %684 : vector<8x128xf32>
    %686 = arith.negf %685 : vector<8x128xf32>
    %687 = math.exp %686 : vector<8x128xf32>
    %cst_275 = arith.constant 1.000000e+00 : f32
    %688 = vector.broadcast %cst_275 : f32 to vector<8x128xf32>
    %689 = arith.addf %688, %687 : vector<8x128xf32>
    %690 = arith.divf %688, %689 : vector<8x128xf32>
    %691 = math.tanh %685 : vector<8x128xf32>
    %692 = vector.extract_strided_slice %690 {offsets = [0, 0], sizes = [8, 32], strides = [1, 1]} : vector<8x128xf32> to vector<8x32xf32>
    %693 = vector.extract_strided_slice %690 {offsets = [0, 32], sizes = [8, 32], strides = [1, 1]} : vector<8x128xf32> to vector<8x32xf32>
    %694 = vector.extract_strided_slice %690 {offsets = [0, 96], sizes = [8, 32], strides = [1, 1]} : vector<8x128xf32> to vector<8x32xf32>
    %695 = vector.extract_strided_slice %691 {offsets = [0, 64], sizes = [8, 32], strides = [1, 1]} : vector<8x128xf32> to vector<8x32xf32>
    %696 = arith.mulf %693, %615 : vector<8x32xf32>
    %697 = arith.mulf %692, %695 : vector<8x32xf32>
    %698 = arith.addf %696, %697 : vector<8x32xf32>
    %699 = math.tanh %698 : vector<8x32xf32>
    %700 = arith.mulf %694, %699 : vector<8x32xf32>
    %c7_276 = arith.constant 7 : index
    %c0_277 = arith.constant 0 : index
    %c0_278 = arith.constant 0 : index
    %701 = vector.load %arg2[%c7_276, %c0_277, %c0_278] : memref<8x8x32xf32, #tpu.memory_space<vmem>>, vector<1x8x32xf32>
    %702 = vector.shape_cast %701 : vector<1x8x32xf32> to vector<8x32xf32>
    %703 = arith.mulf %702, %700 : vector<8x32xf32>
    %704 = arith.addf %621, %703 : vector<8x32xf32>
    %c0_279 = arith.constant 0 : index
    %c0_280 = arith.constant 0 : index
    %705 = vector.load %arg8[%c0_279, %c0_280] : memref<8x32xf32, #tpu.memory_space<vmem>>, vector<8x32xf32>
    tpu.vector_store %arg8[%c0_279, %c0_280], %704 {strides = array<i32>} : memref<8x32xf32, #tpu.memory_space<vmem>>, vector<8x32xf32>,
    return
  }
  func.func @transform_0(%arg0: i32) -> (i32, i32) {
    %c0_i32 = arith.constant 0 : i32
    %c0_i32_0 = arith.constant 0 : i32
    %c0_i32_1 = arith.constant 0 : i32
    return %c0_i32, %c0_i32_0 : i32, i32
  }
  func.func @transform_1(%arg0: i32) -> (i32, i32, i32) {
    %c0_i32 = arith.constant 0 : i32
    %c0_i32_0 = arith.constant 0 : i32
    %c0_i32_1 = arith.constant 0 : i32
    %c0_i32_2 = arith.constant 0 : i32
    return %c0_i32, %c0_i32_0, %c0_i32_1 : i32, i32, i32
  }
  func.func @transform_2(%arg0: i32) -> (i32, i32) {
    %c0_i32 = arith.constant 0 : i32
    %c0_i32_0 = arith.constant 0 : i32
    %c0_i32_1 = arith.constant 0 : i32
    return %c0_i32, %c0_i32_0 : i32, i32
  }
  func.func @transform_3(%arg0: i32) -> (i32, i32) {
    %c0_i32 = arith.constant 0 : i32
    %c0_i32_0 = arith.constant 0 : i32
    %c0_i32_1 = arith.constant 0 : i32
    return %c0_i32, %c0_i32_0 : i32, i32
  }
  func.func @transform_4(%arg0: i32) -> (i32, i32, i32) {
    %c0_i32 = arith.constant 0 : i32
    %c0_i32_0 = arith.constant 0 : i32
    %c0_i32_1 = arith.constant 0 : i32
    %c0_i32_2 = arith.constant 0 : i32
    return %c0_i32, %c0_i32_0, %c0_i32_1 : i32, i32, i32
  }
  func.func @transform_5(%arg0: i32) -> (i32, i32, i32) {
    %c0_i32 = arith.constant 0 : i32
    %c0_i32_0 = arith.constant 0 : i32
    %c0_i32_1 = arith.constant 0 : i32
    %c0_i32_2 = arith.constant 0 : i32
    return %c0_i32, %c0_i32_0, %c0_i32_1 : i32, i32, i32
  }
  func.func @transform_6(%arg0: i32) -> (i32, i32) {
    %c0_i32 = arith.constant 0 : i32
    %c0_i32_0 = arith.constant 0 : i32
    %c0_i32_1 = arith.constant 0 : i32
    return %c0_i32, %c0_i32_0 : i32, i32
  }
  func.func @transform_7(%arg0: i32) -> (i32, i32) {
    %c0_i32 = arith.constant 0 : i32
    %c0_i32_0 = arith.constant 0 : i32
    %c0_i32_1 = arith.constant 0 : i32
    return %c0_i32, %c0_i32_0 : i32, i32
  }
}

</mosaic_0001>

<llo_original>
// kernel: tpu_custom_call.1
$region0: #{tpu_custom_call.1}
  #allocation0 [shape = 'u32[]', space=smem, size = 0x4, offset = 0x4, fixed_abs, tag = 'smem constant byte address 0x4 - core index']
  #allocation1 [shape = 'u32[144,128]{1,0:T(1,128)}', space=vmem, size = 0x12000, scoped, tag = 'internal scratch']
  #allocation2 [shape = 'f32[8,8,128]{2,1,0:T(8,128)}', space=vmem, size = 0x8000, scoped, tag = 'scratch operand']
  %s0 = inlined_call_operand.vmem [shape: bf16[64,32], index: 0, kind: input, shape index: {}]
  %s1 = inlined_call_operand.hbm [shape: f32[8,8,32], index: 1, kind: input, shape index: {}]
  %s2 = inlined_call_operand.hbm [shape: bf16[32,128], index: 2, kind: input, shape index: {}]
  %s3 = inlined_call_operand.hbm [shape: bf16[32,128], index: 3, kind: input, shape index: {}]
  %s4 = inlined_call_operand.vmem [shape: bf16[2,32,128], index: 4, kind: input, shape index: {}]
  %s5 = inlined_call_operand.vmem [shape: bf16[2,32,128], index: 5, kind: input, shape index: {}]
  %s6 = inlined_call_operand.vmem [shape: f32[3,128], index: 6, kind: input, shape index: {}]
  %s7 = inlined_call_operand.hbm [shape: f32[8,32], index: 7, kind: output, shape index: {}]
  %s8 = sld [smem:[#allocation0]]
  $region50: #{tpu_custom_call.1} parent=0
    _
  %s10 = ssub.s32 1, %s8
  %s11 = scalar_select 0, %s10, %s8
  $region1: #{tpu_custom_call.1} parent=0
    #allocation3 [shape = 'u8[32768]{0}', space=vmem, size = 0x8000, scoped, tag = 'input window, operand 1, single buffered']
    #allocation4 [shape = 's32[1]{0}', space=sflag, size = 0x4, scoped, tag = 'scoped memory for tpu_custom_call.1']
    #allocation5 [shape = 's32[1]{0}', space=sflag, size = 0x4, scoped, tag = 'scoped memory for tpu_custom_call.1']
    #allocation6 [shape = 'u8[8192]{0}', space=vmem, size = 0x2000, scoped, tag = 'input window, operand 2, single buffered']
    #allocation7 [shape = 's32[1]{0}', space=sflag, size = 0x4, scoped, tag = 'scoped memory for tpu_custom_call.1']
    #allocation8 [shape = 'u8[8192]{0}', space=vmem, size = 0x2000, scoped, tag = 'input window, operand 3, single buffered']
    #allocation9 [shape = 'u8[4096]{0}', space=vmem, size = 0x1000, scoped, tag = 'output window, operand 0, single buffered']
    %12 = vsyncpa [#allocation4], 0
    %13 = vsyncpa [#allocation7], 0
    %14 = vsyncpa [#allocation5], 0
    // Predicated region
    $region2: #{tpu_custom_call.1} parent=1 // pred_check
      _
    $region3: #{tpu_custom_call.1} parent=1 // pred_check_branch
      %16 = sbr.rel (0) target = $region5
    $region4: #{tpu_custom_call.1} parent=1 // pred_region
      _
    $region5: #{tpu_custom_call.1} parent=1 // pred_fallthru
      _
    // Predicated region
    $region6: #{tpu_custom_call.1} parent=1 // pred_check
      _
    $region7: #{tpu_custom_call.1} parent=1 // pred_check_branch
      %18 = sbr.rel (0) target = $region9
    $region8: #{tpu_custom_call.1} parent=1 // pred_region
      %s20 = ssub.s32 1024, 1024
      %21 = vsyncadd [#allocation4], %s20
      %s22 = sshll.u32 [#allocation3], 4
      %s23 = int_to_ptr.vmem [resolvable:$true] %s22
      %28 = dma.hbm_to_vmem [thread:$0]  %s1, 1024, %s23, [#allocation4], 128, 128, 8
    $region9: #{tpu_custom_call.1} parent=1 // pred_fallthru
      _
    // Predicated region
    $region10: #{tpu_custom_call.1} parent=1 // pred_check
      _
    $region11: #{tpu_custom_call.1} parent=1 // pred_check_branch
      %30 = sbr.rel (0) target = $region13
    $region12: #{tpu_custom_call.1} parent=1 // pred_region
      %s32 = ssub.s32 256, 256
      %33 = vsyncadd [#allocation7], %s32
      %s34 = sshll.u32 [#allocation6], 4
      %s35 = int_to_ptr.vmem [resolvable:$true] %s34
      %40 = dma.hbm_to_vmem [thread:$0]  %s2, 256, %s35, [#allocation7], 64, 64, 4
    $region13: #{tpu_custom_call.1} parent=1 // pred_fallthru
      _
    // Predicated region
    $region14: #{tpu_custom_call.1} parent=1 // pred_check
      _
    $region15: #{tpu_custom_call.1} parent=1 // pred_check_branch
      %42 = sbr.rel (0) target = $region17
    $region16: #{tpu_custom_call.1} parent=1 // pred_region
      %s44 = ssub.s32 256, 256
      %45 = vsyncadd [#allocation7], %s44
      %s46 = sshll.u32 [#allocation8], 4
      %s47 = int_to_ptr.vmem [resolvable:$true] %s46
      %52 = dma.hbm_to_vmem [thread:$0]  %s3, 256, %s47, [#allocation7], 64, 64, 4
    $region17: #{tpu_custom_call.1} parent=1 // pred_fallthru
      _
    // Predicated region
    $region18: #{tpu_custom_call.1} parent=1 // pred_check
      _
    $region19: #{tpu_custom_call.1} parent=1 // pred_check_branch
      %54 = sbr.rel (0) target = $region21
    $region20: #{tpu_custom_call.1} parent=1 // pred_region
      _
    $region21: #{tpu_custom_call.1} parent=1 // pred_fallthru
      _
    // Predicated region
    $region22: #{tpu_custom_call.1} parent=1 // pred_check
      _
    $region23: #{tpu_custom_call.1} parent=1 // pred_check_branch
      %56 = sbr.rel (0) target = $region25
    $region24: #{tpu_custom_call.1} parent=1 // pred_region
      _
    $region25: #{tpu_custom_call.1} parent=1 // pred_fallthru
      _
    // Predicated region
    $region26: #{tpu_custom_call.1} parent=1 // pred_check
      _
    $region27: #{tpu_custom_call.1} parent=1 // pred_check_branch
      %58 = sbr.rel (0) target = $region29
    $region28: #{tpu_custom_call.1} parent=1 // pred_region
      _
    $region29: #{tpu_custom_call.1} parent=1 // pred_fallthru
      _
    // Predicated region
    $region30: #{tpu_custom_call.1} parent=1 // pred_check
      _
    $region31: #{tpu_custom_call.1} parent=1 // pred_check_branch
      %60 = sbr.rel (0) target = $region33
    $region32: #{tpu_custom_call.1} parent=1 // pred_region
      %61 = dma.done [#allocation4], 1024
    $region33: #{tpu_custom_call.1} parent=1 // pred_fallthru
      _
    // Predicated region
    $region34: #{tpu_custom_call.1} parent=1 // pred_check
      _
    $region35: #{tpu_custom_call.1} parent=1 // pred_check_branch
      %63 = sbr.rel (0) target = $region37
    $region36: #{tpu_custom_call.1} parent=1 // pred_region
      %64 = dma.done [#allocation7], 256
    $region37: #{tpu_custom_call.1} parent=1 // pred_fallthru
      _
    // Predicated region
    $region38: #{tpu_custom_call.1} parent=1 // pred_check
      _
    $region39: #{tpu_custom_call.1} parent=1 // pred_check_branch
      %66 = sbr.rel (0) target = $region41
    $region40: #{tpu_custom_call.1} parent=1 // pred_region
      %67 = dma.done [#allocation7], 256
    $region41: #{tpu_custom_call.1} parent=1 // pred_fallthru
      _
    %v69 = vld [vmem:[%s0] sm:$0xf]
    %v70 = vld [vmem:[%s0 + $0x4] sm:$0xf]
    %v71 = vld [vmem:[%s0 + $0x8] sm:$0xf]
    %v72 = vld [vmem:[%s0 + $0xc] sm:$0xf]
    %v73 = vld [vmem:[%s0 + $0x10] sm:$0xf]
    %v74 = vld [vmem:[%s0 + $0x14] sm:$0xf]
    %v75 = vld [vmem:[%s0 + $0x18] sm:$0xf]
    %v76 = vld [vmem:[%s0 + $0x1c] sm:$0xf]
    %v77 = vld [vmem:[#allocation6] sm:$0xf]
    %v78 = vld [vmem:[#allocation6 + $0x4] sm:$0xf]
    %v79 = vld [vmem:[#allocation6 + $0x8] sm:$0xf]
    %v80 = vld [vmem:[#allocation6 + $0xc] sm:$0xf]
    %v81 = vld [vmem:[%s6] sm:$0x1]
    %v82 = vlaneseq
    %v83 = vshrl.u32 %v82, 7
    %v84 = vsub.s32 0, %v83
    %v85 = vrot.slane %v81, %v84
    %v94 = vunpack.c.l.b16 %v69
    %v95 = vunpack.c.l.b16 %v70
    %v96 = vunpack.c.l.b16 %v71
    %v97 = vunpack.c.l.b16 %v72
    %v98 = vunpack.c.l.b16 %v73
    %v99 = vunpack.c.l.b16 %v74
    %v100 = vunpack.c.l.b16 %v75
    %v101 = vunpack.c.l.b16 %v76
    %v102 = vpack.c.b16 %v95, %v94
    %v103 = vpack.c.b16 %v97, %v96
    %v104 = vpack.c.b16 %v99, %v98
    %v105 = vpack.c.b16 %v101, %v100
    %v110 = vunpack.c.l.b16 %v77
    %v111 = vunpack.c.l.b16 %v78
    %v112 = vunpack.c.l.b16 %v79
    %v113 = vunpack.c.l.b16 %v80
    %v114 = vpack.c.b16 %v111, %v110
    %v115 = vpack.c.b16 %v113, %v112
    %vm118 = vcmask 261120
    %v120 = vsel %vm118, %v102, 0
    %v123 = vsel %vm118, %v103, 0
    %v126 = vsel %vm118, %v104, 0
    %v129 = vsel %vm118, %v105, 0
    %131 = vmatprep.subr.bf16.mxu0 0
    %132 = vmatpush1.bf16.msra.mxu0 %v114
    %133 = vmatprep.subr.bf16.mxu0 0
    %134 = vmatpush1.bf16.msra.mxu0 %v115
    %135 = vmatprep.subr.bf16.mxu0 0
    %136 = vmatpush1.bf16.msra.mxu0 0
    %137 = vmatprep.subr.bf16.mxu0 0
    %138 = vmatpush1.bf16.msra.mxu0 0
    %139 = vmatprep.subr.bf16.mxu0 0
    %140 = vmatpush1.bf16.msra.mxu0 0
    %141 = vmatprep.subr.bf16.mxu0 0
    %142 = vmatpush1.bf16.msra.mxu0 0
    %143 = vmatprep.subr.bf16.mxu0 0
    %144 = vmatpush1.bf16.msra.mxu0 0
    %145 = vmatprep.subr.bf16.mxu0 0
    %146 = vmatpush1.bf16.msra.mxu0 0
    %147 = vmatprep.subr.bf16.mxu0 0
    %148 = vmatpush1.bf16.msra.mxu0 0
    %149 = vmatprep.subr.bf16.mxu0 0
    %150 = vmatpush1.bf16.msra.mxu0 0
    %151 = vmatprep.subr.bf16.mxu0 0
    %152 = vmatpush1.bf16.msra.mxu0 0
    %153 = vmatprep.subr.bf16.mxu0 0
    %154 = vmatpush1.bf16.msra.mxu0 0
    %155 = vmatprep.subr.bf16.mxu0 0
    %156 = vmatpush1.bf16.msra.mxu0 0
    %157 = vmatprep.subr.bf16.mxu0 0
    %158 = vmatpush1.bf16.msra.mxu0 0
    %159 = vmatprep.subr.bf16.mxu0 0
    %160 = vmatpush1.bf16.msra.mxu0 0
    %161 = vmatprep.subr.bf16.mxu0 0
    %162 = vmatpush1.bf16.msra.mxu0 0
    %163 = vmatprep.mubr.bf16.mxu0 0
    %164 = vmatmul.mubr.bf16.gmra.mrb[0].mxu0 %v120
    %v165 = vpop.f32.mrb[0].mxu0
    %v166 = vadd.f32 %v85, %v165
    %v167 = vpop.f32.mrb[0].mxu0
    %v168 = vpop.f32.mrb[0].mxu0
    %v169 = vadd.f32 %v85, %v168
    %v170 = vpop.f32.mrb[0].mxu0
    %171 = vmatprep.mubr.bf16.mxu0 0
    %172 = vmatmul.mubr.bf16.gmra.mrb[0].mxu0 %v123
    %v173 = vpop.f32.mrb[0].mxu0
    %v174 = vadd.f32 %v85, %v173
    %v175 = vpop.f32.mrb[0].mxu0
    %v176 = vpop.f32.mrb[0].mxu0
    %v177 = vadd.f32 %v85, %v176
    %v178 = vpop.f32.mrb[0].mxu0
    %179 = vmatprep.mubr.bf16.mxu0 0
    %180 = vmatmul.mubr.bf16.gmra.mrb[0].mxu0 %v126
    %v181 = vpop.f32.mrb[0].mxu0
    %v182 = vadd.f32 %v85, %v181
    %v183 = vpop.f32.mrb[0].mxu0
    %v184 = vpop.f32.mrb[0].mxu0
    %v185 = vadd.f32 %v85, %v184
    %v186 = vpop.f32.mrb[0].mxu0
    %187 = vmatprep.mubr.bf16.mxu0 0
    %188 = vmatmul.mubr.bf16.gmra.mrb[0].mxu0 %v129
    %v189 = vpop.f32.mrb[0].mxu0
    %v190 = vadd.f32 %v85, %v189
    %v191 = vpop.f32.mrb[0].mxu0
    %v192 = vpop.f32.mrb[0].mxu0
    %v193 = vadd.f32 %v85, %v192
    %v194 = vpop.f32.mrb[0].mxu0
    %195 = vdwg.mxu0
    %196 = vst [vmem:[#allocation2] sm:$0xff] %v166
    %s197 = scalar_lea.vmem [#allocation2], 8
    %198 = vst [vmem:[%s197] sm:$0xff] %v169
    %s199 = scalar_lea.vmem [#allocation2], 16
    %200 = vst [vmem:[%s199] sm:$0xff] %v174
    %s201 = scalar_lea.vmem [#allocation2], 24
    %202 = vst [vmem:[%s201] sm:$0xff] %v177
    %s203 = scalar_lea.vmem [#allocation2], 32
    %204 = vst [vmem:[%s203] sm:$0xff] %v182
    %s205 = scalar_lea.vmem [#allocation2], 40
    %206 = vst [vmem:[%s205] sm:$0xff] %v185
    %s207 = scalar_lea.vmem [#allocation2], 48
    %208 = vst [vmem:[%s207] sm:$0xff] %v190
    %s209 = scalar_lea.vmem [#allocation2], 56
    %210 = vst [vmem:[%s209] sm:$0xff] %v193
    %v211 = vld [vmem:[#allocation2] sm:$0xff]
    %v212 = vld [vmem:[#allocation8] sm:$0xf]
    %v213 = vld [vmem:[#allocation8 + $0x4] sm:$0xf]
    %v214 = vld [vmem:[#allocation8 + $0x8] sm:$0xf]
    %v215 = vld [vmem:[#allocation8 + $0xc] sm:$0xf]
    %v220 = vunpack.c.l.b16 %v212
    %v221 = vunpack.c.l.b16 %v213
    %v222 = vunpack.c.l.b16 %v214
    %v223 = vunpack.c.l.b16 %v215
    %v224 = vpack.c.b16 %v221, %v220
    %v225 = vpack.c.b16 %v223, %v222
    %v229 = vsel %vm118, 0, 0
    %231 = vmatprep.subr.bf16.mxu0 0
    %232 = vmatpush1.bf16.msra.mxu0 %v224
    %233 = vmatprep.subr.bf16.mxu0 0
    %234 = vmatpush1.bf16.msra.mxu0 %v225
    %235 = vmatprep.subr.bf16.mxu0 0
    %236 = vmatpush1.bf16.msra.mxu0 0
    %237 = vmatprep.subr.bf16.mxu0 0
    %238 = vmatpush1.bf16.msra.mxu0 0
    %239 = vmatprep.subr.bf16.mxu0 0
    %240 = vmatpush1.bf16.msra.mxu0 0
    %241 = vmatprep.subr.bf16.mxu0 0
    %242 = vmatpush1.bf16.msra.mxu0 0
    %243 = vmatprep.subr.bf16.mxu0 0
    %244 = vmatpush1.bf16.msra.mxu0 0
    %245 = vmatprep.subr.bf16.mxu0 0
    %246 = vmatpush1.bf16.msra.mxu0 0
    %247 = vmatprep.subr.bf16.mxu0 0
    %248 = vmatpush1.bf16.msra.mxu0 0
    %249 = vmatprep.subr.bf16.mxu0 0
    %250 = vmatpush1.bf16.msra.mxu0 0
    %251 = vmatprep.subr.bf16.mxu0 0
    %252 = vmatpush1.bf16.msra.mxu0 0
    %253 = vmatprep.subr.bf16.mxu0 0
    %254 = vmatpush1.bf16.msra.mxu0 0
    %255 = vmatprep.subr.bf16.mxu0 0
    %256 = vmatpush1.bf16.msra.mxu0 0
    %257 = vmatprep.subr.bf16.mxu0 0
    %258 = vmatpush1.bf16.msra.mxu0 0
    %259 = vmatprep.subr.bf16.mxu0 0
    %260 = vmatpush1.bf16.msra.mxu0 0
    %261 = vmatprep.subr.bf16.mxu0 0
    %262 = vmatpush1.bf16.msra.mxu0 0
    %263 = vmatprep.mubr.bf16.mxu0 0
    %264 = vmatmul.mubr.bf16.gmra.mrb[0].mxu0 %v229
    %v265 = vpop.f32.mrb[0].mxu0
    %v266 = vadd.f32 0.0, %v265
    %v267 = vpop.f32.mrb[0].mxu0
    %v268 = vpop.f32.mrb[0].mxu0
    %v269 = vpop.f32.mrb[0].mxu0
    %270 = vdwg.mxu0
    %v271 = vadd.f32 %v211, %v266
    %v272 = vxor.u32 %v271, 2147483648
    %v273 = vmul.f32 %v272, 1.442695
    %v274 = vpow.pop %v273
    %v275 = vadd.f32 %v274, 1.0
    %v276 = vrcp.pop %v275
    %v277 = vmul.f32 1.0, %v276
    %v278 = vtanh.pop %v271
    %v279 = vmul.f32 %v277, 0.0
    %281 = vrot.lane.b32.xlu0 %v278, 64
    %v282 = vpop.permute.xlu0 %281
    %v284 = vmul.f32 %v277, %v282
    %286 = vrot.lane.b32.xlu0 %v284, 32
    %v287 = vpop.permute.xlu0 %286
    %v289 = vadd.f32 %v279, %v287
    %v290 = vtanh.pop %v289
    %292 = vrot.lane.b32.xlu0 %v290, 64
    %v293 = vpop.permute.xlu0 %292
    %v295 = vmul.f32 %v277, %v293
    %v296 = vpack.c.bf16 %v295, %v295
    %v297 = vld [vmem:[%s4] sm:$0xf]
    %v298 = vld [vmem:[%s4 + $0x4] sm:$0xf]
    %v299 = vld [vmem:[%s4 + $0x8] sm:$0xf]
    %v300 = vld [vmem:[%s4 + $0xc] sm:$0xf]
    %v301 = vld [vmem:[%s5] sm:$0xf]
    %v302 = vld [vmem:[%s5 + $0x4] sm:$0xf]
    %v303 = vld [vmem:[%s5 + $0x8] sm:$0xf]
    %v304 = vld [vmem:[%s5 + $0xc] sm:$0xf]
    %v309 = vunpack.c.l.b16 %v301
    %v310 = vunpack.c.l.b16 %v302
    %v311 = vunpack.c.l.b16 %v303
    %v312 = vunpack.c.l.b16 %v304
    %v313 = vpack.c.b16 %v310, %v309
    %v314 = vpack.c.b16 %v312, %v311
    %317 = vmatprep.subr.bf16.mxu0 0
    %318 = vmatpush1.bf16.msra.mxu0 %v313
    %319 = vmatprep.subr.bf16.mxu0 0
    %320 = vmatpush1.bf16.msra.mxu0 %v314
    %321 = vmatprep.subr.bf16.mxu0 0
    %322 = vmatpush1.bf16.msra.mxu0 0
    %323 = vmatprep.subr.bf16.mxu0 0
    %324 = vmatpush1.bf16.msra.mxu0 0
    %325 = vmatprep.subr.bf16.mxu0 0
    %326 = vmatpush1.bf16.msra.mxu0 0
    %327 = vmatprep.subr.bf16.mxu0 0
    %328 = vmatpush1.bf16.msra.mxu0 0
    %329 = vmatprep.subr.bf16.mxu0 0
    %330 = vmatpush1.bf16.msra.mxu0 0
    %331 = vmatprep.subr.bf16.mxu0 0
    %332 = vmatpush1.bf16.msra.mxu0 0
    %333 = vmatprep.subr.bf16.mxu0 0
    %334 = vmatpush1.bf16.msra.mxu0 0
    %335 = vmatprep.subr.bf16.mxu0 0
    %336 = vmatpush1.bf16.msra.mxu0 0
    %337 = vmatprep.subr.bf16.mxu0 0
    %338 = vmatpush1.bf16.msra.mxu0 0
    %339 = vmatprep.subr.bf16.mxu0 0
    %340 = vmatpush1.bf16.msra.mxu0 0
    %341 = vmatprep.subr.bf16.mxu0 0
    %342 = vmatpush1.bf16.msra.mxu0 0
    %343 = vmatprep.subr.bf16.mxu0 0
    %344 = vmatpush1.bf16.msra.mxu0 0
    %345 = vmatprep.subr.bf16.mxu0 0
    %346 = vmatpush1.bf16.msra.mxu0 0
    %347 = vmatprep.subr.bf16.mxu0 0
    %348 = vmatpush1.bf16.msra.mxu0 0
    %349 = vmatprep.mubr.bf16.mxu0 0
    %350 = vmatmul.mubr.bf16.gmra.mrb[0].mxu0 %v229
    %v351 = vpop.f32.mrb[0].mxu0
    %v352 = vadd.f32 0.0, %v351
    %v353 = vpop.f32.mrb[0].mxu0
    %v354 = vpop.f32.mrb[0].mxu0
    %v355 = vpop.f32.mrb[0].mxu0
    %356 = vdwg.mxu0
    %358 = vrot.lane.b32.xlu0 %v296, 32
    %v359 = vpop.permute.xlu0 %358
    %v364 = vunpack.c.l.b16 %v297
    %v365 = vunpack.c.l.b16 %v298
    %v366 = vunpack.c.l.b16 %v299
    %v367 = vunpack.c.l.b16 %v300
    %v368 = vpack.c.b16 %v365, %v364
    %v369 = vpack.c.b16 %v367, %v366
    %v373 = vsel %vm118, %v359, 0
    %375 = vmatprep.subr.bf16.mxu0 0
    %376 = vmatpush1.bf16.msra.mxu0 %v368
    %377 = vmatprep.subr.bf16.mxu0 0
    %378 = vmatpush1.bf16.msra.mxu0 %v369
    %379 = vmatprep.subr.bf16.mxu0 0
    %380 = vmatpush1.bf16.msra.mxu0 0
    %381 = vmatprep.subr.bf16.mxu0 0
    %382 = vmatpush1.bf16.msra.mxu0 0
    %383 = vmatprep.subr.bf16.mxu0 0
    %384 = vmatpush1.bf16.msra.mxu0 0
    %385 = vmatprep.subr.bf16.mxu0 0
    %386 = vmatpush1.bf16.msra.mxu0 0
    %387 = vmatprep.subr.bf16.mxu0 0
    %388 = vmatpush1.bf16.msra.mxu0 0
    %389 = vmatprep.subr.bf16.mxu0 0
    %390 = vmatpush1.bf16.msra.mxu0 0
    %391 = vmatprep.subr.bf16.mxu0 0
    %392 = vmatpush1.bf16.msra.mxu0 0
    %393 = vmatprep.subr.bf16.mxu0 0
    %394 = vmatpush1.bf16.msra.mxu0 0
    %395 = vmatprep.subr.bf16.mxu0 0
    %396 = vmatpush1.bf16.msra.mxu0 0
    %397 = vmatprep.subr.bf16.mxu0 0
    %398 = vmatpush1.bf16.msra.mxu0 0
    %399 = vmatprep.subr.bf16.mxu0 0
    %400 = vmatpush1.bf16.msra.mxu0 0
    %401 = vmatprep.subr.bf16.mxu0 0
    %402 = vmatpush1.bf16.msra.mxu0 0
    %403 = vmatprep.subr.bf16.mxu0 0
    %404 = vmatpush1.bf16.msra.mxu0 0
    %405 = vmatprep.subr.bf16.mxu0 0
    %406 = vmatpush1.bf16.msra.mxu0 0
    %407 = vmatprep.mubr.bf16.mxu0 0
    %408 = vmatmul.mubr.bf16.gmra.mrb[0].mxu0 %v373
    %v409 = vpop.f32.mrb[0].mxu0
    %v410 = vadd.f32 %v352, %v409
    %v411 = vpop.f32.mrb[0].mxu0
    %v412 = vpop.f32.mrb[0].mxu0
    %v413 = vpop.f32.mrb[0].mxu0
    %414 = vdwg.mxu0
    %v415 = vld [vmem:[%s6 + $0x1] sm:$0x1]
    %v416 = vlaneseq
    %v417 = vshrl.u32 %v416, 7
    %v418 = vsub.s32 0, %v417
    %v419 = vrot.slane %v415, %v418
    %v420 = vadd.f32 %v410, %v419
    %v421 = vxor.u32 %v420, 2147483648
    %v422 = vmul.f32 %v421, 1.442695
    %v423 = vpow.pop %v422
    %v424 = vadd.f32 %v423, 1.0
    %v425 = vrcp.pop %v424
    %v426 = vmul.f32 1.0, %v425
    %v427 = vtanh.pop %v420
    %v428 = vmul.f32 %v426, 0.0
    %430 = vrot.lane.b32.xlu0 %v427, 64
    %v431 = vpop.permute.xlu0 %430
    %v433 = vmul.f32 %v426, %v431
    %435 = vrot.lane.b32.xlu0 %v433, 32
    %v436 = vpop.permute.xlu0 %435
    %v438 = vadd.f32 %v428, %v436
    %v439 = vtanh.pop %v438
    %441 = vrot.lane.b32.xlu0 %v439, 64
    %v442 = vpop.permute.xlu0 %441
    %v444 = vmul.f32 %v426, %v442
    %v445 = vpack.c.bf16 %v444, %v444
    %s446 = scalar_lea.vmem %s4, 16
    %v447 = vld [vmem:[%s446] sm:$0xf]
    %v448 = vld [vmem:[%s446 + $0x4] sm:$0xf]
    %v449 = vld [vmem:[%s446 + $0x8] sm:$0xf]
    %v450 = vld [vmem:[%s446 + $0xc] sm:$0xf]
    %s451 = scalar_lea.vmem %s5, 16
    %v452 = vld [vmem:[%s451] sm:$0xf]
    %v453 = vld [vmem:[%s451 + $0x4] sm:$0xf]
    %v454 = vld [vmem:[%s451 + $0x8] sm:$0xf]
    %v455 = vld [vmem:[%s451 + $0xc] sm:$0xf]
    %v460 = vunpack.c.l.b16 %v452
    %v461 = vunpack.c.l.b16 %v453
    %v462 = vunpack.c.l.b16 %v454
    %v463 = vunpack.c.l.b16 %v455
    %v464 = vpack.c.b16 %v461, %v460
    %v465 = vpack.c.b16 %v463, %v462
    %468 = vmatprep.subr.bf16.mxu0 0
    %469 = vmatpush1.bf16.msra.mxu0 %v464
    %470 = vmatprep.subr.bf16.mxu0 0
    %471 = vmatpush1.bf16.msra.mxu0 %v465
    %472 = vmatprep.subr.bf16.mxu0 0
    %473 = vmatpush1.bf16.msra.mxu0 0
    %474 = vmatprep.subr.bf16.mxu0 0
    %475 = vmatpush1.bf16.msra.mxu0 0
    %476 = vmatprep.subr.bf16.mxu0 0
    %477 = vmatpush1.bf16.msra.mxu0 0
    %478 = vmatprep.subr.bf16.mxu0 0
    %479 = vmatpush1.bf16.msra.mxu0 0
    %480 = vmatprep.subr.bf16.mxu0 0
    %481 = vmatpush1.bf16.msra.mxu0 0
    %482 = vmatprep.subr.bf16.mxu0 0
    %483 = vmatpush1.bf16.msra.mxu0 0
    %484 = vmatprep.subr.bf16.mxu0 0
    %485 = vmatpush1.bf16.msra.mxu0 0
    %486 = vmatprep.subr.bf16.mxu0 0
    %487 = vmatpush1.bf16.msra.mxu0 0
    %488 = vmatprep.subr.bf16.mxu0 0
    %489 = vmatpush1.bf16.msra.mxu0 0
    %490 = vmatprep.subr.bf16.mxu0 0
    %491 = vmatpush1.bf16.msra.mxu0 0
    %492 = vmatprep.subr.bf16.mxu0 0
    %493 = vmatpush1.bf16.msra.mxu0 0
    %494 = vmatprep.subr.bf16.mxu0 0
    %495 = vmatpush1.bf16.msra.mxu0 0
    %496 = vmatprep.subr.bf16.mxu0 0
    %497 = vmatpush1.bf16.msra.mxu0 0
    %498 = vmatprep.subr.bf16.mxu0 0
    %499 = vmatpush1.bf16.msra.mxu0 0
    %500 = vmatprep.mubr.bf16.mxu0 0
    %501 = vmatmul.mubr.bf16.gmra.mrb[0].mxu0 %v229
    %v502 = vpop.f32.mrb[0].mxu0
    %v503 = vadd.f32 0.0, %v502
    %v504 = vpop.f32.mrb[0].mxu0
    %v505 = vpop.f32.mrb[0].mxu0
    %v506 = vpop.f32.mrb[0].mxu0
    %507 = vdwg.mxu0
    %509 = vrot.lane.b32.xlu0 %v445, 32
    %v510 = vpop.permute.xlu0 %509
    %v515 = vunpack.c.l.b16 %v447
    %v516 = vunpack.c.l.b16 %v448
    %v517 = vunpack.c.l.b16 %v449
    %v518 = vunpack.c.l.b16 %v450
    %v519 = vpack.c.b16 %v516, %v515
    %v520 = vpack.c.b16 %v518, %v517
    %v524 = vsel %vm118, %v510, 0
    %526 = vmatprep.subr.bf16.mxu0 0
    %527 = vmatpush1.bf16.msra.mxu0 %v519
    %528 = vmatprep.subr.bf16.mxu0 0
    %529 = vmatpush1.bf16.msra.mxu0 %v520
    %530 = vmatprep.subr.bf16.mxu0 0
    %531 = vmatpush1.bf16.msra.mxu0 0
    %532 = vmatprep.subr.bf16.mxu0 0
    %533 = vmatpush1.bf16.msra.mxu0 0
    %534 = vmatprep.subr.bf16.mxu0 0
    %535 = vmatpush1.bf16.msra.mxu0 0
    %536 = vmatprep.subr.bf16.mxu0 0
    %537 = vmatpush1.bf16.msra.mxu0 0
    %538 = vmatprep.subr.bf16.mxu0 0
    %539 = vmatpush1.bf16.msra.mxu0 0
    %540 = vmatprep.subr.bf16.mxu0 0
    %541 = vmatpush1.bf16.msra.mxu0 0
    %542 = vmatprep.subr.bf16.mxu0 0
    %543 = vmatpush1.bf16.msra.mxu0 0
    %544 = vmatprep.subr.bf16.mxu0 0
    %545 = vmatpush1.bf16.msra.mxu0 0
    %546 = vmatprep.subr.bf16.mxu0 0
    %547 = vmatpush1.bf16.msra.mxu0 0
    %548 = vmatprep.subr.bf16.mxu0 0
    %549 = vmatpush1.bf16.msra.mxu0 0
    %550 = vmatprep.subr.bf16.mxu0 0
    %551 = vmatpush1.bf16.msra.mxu0 0
    %552 = vmatprep.subr.bf16.mxu0 0
    %553 = vmatpush1.bf16.msra.mxu0 0
    %554 = vmatprep.subr.bf16.mxu0 0
    %555 = vmatpush1.bf16.msra.mxu0 0
    %556 = vmatprep.subr.bf16.mxu0 0
    %557 = vmatpush1.bf16.msra.mxu0 0
    %558 = vmatprep.mubr.bf16.mxu0 0
    %559 = vmatmul.mubr.bf16.gmra.mrb[0].mxu0 %v524
    %v560 = vpop.f32.mrb[0].mxu0
    %v561 = vadd.f32 %v503, %v560
    %v562 = vpop.f32.mrb[0].mxu0
    %v563 = vpop.f32.mrb[0].mxu0
    %v564 = vpop.f32.mrb[0].mxu0
    %565 = vdwg.mxu0
    %v566 = vld [vmem:[%s6 + $0x2] sm:$0x1]
    %v567 = vlaneseq
    %v568 = vshrl.u32 %v567, 7
    %v569 = vsub.s32 0, %v568
    %v570 = vrot.slane %v566, %v569
    %v571 = vadd.f32 %v561, %v570
    %v572 = vxor.u32 %v571, 2147483648
    %v573 = vmul.f32 %v572, 1.442695
    %v574 = vpow.pop %v573
    %v575 = vadd.f32 %v574, 1.0
    %v576 = vrcp.pop %v575
    %v577 = vmul.f32 1.0, %v576
    %v578 = vtanh.pop %v571
    %v579 = vmul.f32 %v577, 0.0
    %581 = vrot.lane.b32.xlu0 %v578, 64
    %v582 = vpop.permute.xlu0 %581
    %v584 = vmul.f32 %v577, %v582
    %586 = vrot.lane.b32.xlu0 %v584, 32
    %v587 = vpop.permute.xlu0 %586
    %v589 = vadd.f32 %v579, %v587
    %v590 = vtanh.pop %v589
    %592 = vrot.lane.b32.xlu0 %v590, 64
    %v593 = vpop.permute.xlu0 %592
    %v595 = vmul.f32 %v577, %v593
    %v596 = vld [vmem:[#allocation3] sm:$0xff]
    %598 = vrot.lane.b32.xlu0 %v595, 32
    %v599 = vpop.permute.xlu0 %598
    %v601 = vmul.f32 %v596, %v599
    %v602 = vadd.f32 %v601, 0.0
    %v603 = vld [vmem:[%s197] sm:$0xff]
    %604 = vmatprep.subr.bf16.mxu0 0
    %605 = vmatpush1.bf16.msra.mxu0 %v224
    %606 = vmatprep.subr.bf16.mxu0 0
    %607 = vmatpush1.bf16.msra.mxu0 %v225
    %608 = vmatprep.subr.bf16.mxu0 0
    %609 = vmatpush1.bf16.msra.mxu0 0
    %610 = vmatprep.subr.bf16.mxu0 0
    %611 = vmatpush1.bf16.msra.mxu0 0
    %612 = vmatprep.subr.bf16.mxu0 0
    %613 = vmatpush1.bf16.msra.mxu0 0
    %614 = vmatprep.subr.bf16.mxu0 0
    %615 = vmatpush1.bf16.msra.mxu0 0
    %616 = vmatprep.subr.bf16.mxu0 0
    %617 = vmatpush1.bf16.msra.mxu0 0
    %618 = vmatprep.subr.bf16.mxu0 0
    %619 = vmatpush1.bf16.msra.mxu0 0
    %620 = vmatprep.subr.bf16.mxu0 0
    %621 = vmatpush1.bf16.msra.mxu0 0
    %622 = vmatprep.subr.bf16.mxu0 0
    %623 = vmatpush1.bf16.msra.mxu0 0
    %624 = vmatprep.subr.bf16.mxu0 0
    %625 = vmatpush1.bf16.msra.mxu0 0
    %626 = vmatprep.subr.bf16.mxu0 0
    %627 = vmatpush1.bf16.msra.mxu0 0
    %628 = vmatprep.subr.bf16.mxu0 0
    %629 = vmatpush1.bf16.msra.mxu0 0
    %630 = vmatprep.subr.bf16.mxu0 0
    %631 = vmatpush1.bf16.msra.mxu0 0
    %632 = vmatprep.subr.bf16.mxu0 0
    %633 = vmatpush1.bf16.msra.mxu0 0
    %634 = vmatprep.subr.bf16.mxu0 0
    %635 = vmatpush1.bf16.msra.mxu0 0
    %636 = vmatprep.mubr.bf16.mxu0 0
    %637 = vmatmul.mubr.bf16.gmra.mrb[0].mxu0 %v373
    %v638 = vpop.f32.mrb[0].mxu0
    %v639 = vadd.f32 0.0, %v638
    %v640 = vpop.f32.mrb[0].mxu0
    %v641 = vpop.f32.mrb[0].mxu0
    %v642 = vpop.f32.mrb[0].mxu0
    %643 = vdwg.mxu0
    %v644 = vadd.f32 %v603, %v639
    %v645 = vxor.u32 %v644, 2147483648
    %v646 = vmul.f32 %v645, 1.442695
    %v647 = vpow.pop %v646
    %v648 = vadd.f32 %v647, 1.0
    %v649 = vrcp.pop %v648
    %v650 = vmul.f32 1.0, %v649
    %v651 = vtanh.pop %v644
    %v652 = vmul.f32 %v650, %v289
    %654 = vrot.lane.b32.xlu0 %v651, 64
    %v655 = vpop.permute.xlu0 %654
    %v657 = vmul.f32 %v650, %v655
    %659 = vrot.lane.b32.xlu0 %v657, 32
    %v660 = vpop.permute.xlu0 %659
    %v662 = vadd.f32 %v652, %v660
    %v663 = vtanh.pop %v662
    %665 = vrot.lane.b32.xlu0 %v663, 64
    %v666 = vpop.permute.xlu0 %665
    %v668 = vmul.f32 %v650, %v666
    %v669 = vpack.c.bf16 %v668, %v668
    %670 = vmatprep.subr.bf16.mxu0 0
    %671 = vmatpush1.bf16.msra.mxu0 %v313
    %672 = vmatprep.subr.bf16.mxu0 0
    %673 = vmatpush1.bf16.msra.mxu0 %v314
    %674 = vmatprep.subr.bf16.mxu0 0
    %675 = vmatpush1.bf16.msra.mxu0 0
    %676 = vmatprep.subr.bf16.mxu0 0
    %677 = vmatpush1.bf16.msra.mxu0 0
    %678 = vmatprep.subr.bf16.mxu0 0
    %679 = vmatpush1.bf16.msra.mxu0 0
    %680 = vmatprep.subr.bf16.mxu0 0
    %681 = vmatpush1.bf16.msra.mxu0 0
    %682 = vmatprep.subr.bf16.mxu0 0
    %683 = vmatpush1.bf16.msra.mxu0 0
    %684 = vmatprep.subr.bf16.mxu0 0
    %685 = vmatpush1.bf16.msra.mxu0 0
    %686 = vmatprep.subr.bf16.mxu0 0
    %687 = vmatpush1.bf16.msra.mxu0 0
    %688 = vmatprep.subr.bf16.mxu0 0
    %689 = vmatpush1.bf16.msra.mxu0 0
    %690 = vmatprep.subr.bf16.mxu0 0
    %691 = vmatpush1.bf16.msra.mxu0 0
    %692 = vmatprep.subr.bf16.mxu0 0
    %693 = vmatpush1.bf16.msra.mxu0 0
    %694 = vmatprep.subr.bf16.mxu0 0
    %695 = vmatpush1.bf16.msra.mxu0 0
    %696 = vmatprep.subr.bf16.mxu0 0
    %697 = vmatpush1.bf16.msra.mxu0 0
    %698 = vmatprep.subr.bf16.mxu0 0
    %699 = vmatpush1.bf16.msra.mxu0 0
    %700 = vmatprep.subr.bf16.mxu0 0
    %701 = vmatpush1.bf16.msra.mxu0 0
    %702 = vmatprep.mubr.bf16.mxu0 0
    %703 = vmatmul.mubr.bf16.gmra.mrb[0].mxu0 %v524
    %v704 = vpop.f32.mrb[0].mxu0
    %v705 = vadd.f32 0.0, %v704
    %v706 = vpop.f32.mrb[0].mxu0
    %v707 = vpop.f32.mrb[0].mxu0
    %v708 = vpop.f32.mrb[0].mxu0
    %709 = vdwg.mxu0
    %711 = vrot.lane.b32.xlu0 %v669, 32
    %v712 = vpop.permute.xlu0 %711
    %v714 = vsel %vm118, %v712, 0
    %716 = vmatprep.subr.bf16.mxu0 0
    %717 = vmatpush1.bf16.msra.mxu0 %v368
    %718 = vmatprep.subr.bf16.mxu0 0
    %719 = vmatpush1.bf16.msra.mxu0 %v369
    %720 = vmatprep.subr.bf16.mxu0 0
    %721 = vmatpush1.bf16.msra.mxu0 0
    %722 = vmatprep.subr.bf16.mxu0 0
    %723 = vmatpush1.bf16.msra.mxu0 0
    %724 = vmatprep.subr.bf16.mxu0 0
    %725 = vmatpush1.bf16.msra.mxu0 0
    %726 = vmatprep.subr.bf16.mxu0 0
    %727 = vmatpush1.bf16.msra.mxu0 0
    %728 = vmatprep.subr.bf16.mxu0 0
    %729 = vmatpush1.bf16.msra.mxu0 0
    %730 = vmatprep.subr.bf16.mxu0 0
    %731 = vmatpush1.bf16.msra.mxu0 0
    %732 = vmatprep.subr.bf16.mxu0 0
    %733 = vmatpush1.bf16.msra.mxu0 0
    %734 = vmatprep.subr.bf16.mxu0 0
    %735 = vmatpush1.bf16.msra.mxu0 0
    %736 = vmatprep.subr.bf16.mxu0 0
    %737 = vmatpush1.bf16.msra.mxu0 0
    %738 = vmatprep.subr.bf16.mxu0 0
    %739 = vmatpush1.bf16.msra.mxu0 0
    %740 = vmatprep.subr.bf16.mxu0 0
    %741 = vmatpush1.bf16.msra.mxu0 0
    %742 = vmatprep.subr.bf16.mxu0 0
    %743 = vmatpush1.bf16.msra.mxu0 0
    %744 = vmatprep.subr.bf16.mxu0 0
    %745 = vmatpush1.bf16.msra.mxu0 0
    %746 = vmatprep.subr.bf16.mxu0 0
    %747 = vmatpush1.bf16.msra.mxu0 0
    %748 = vmatprep.mubr.bf16.mxu0 0
    %749 = vmatmul.mubr.bf16.gmra.mrb[0].mxu0 %v714
    %v750 = vpop.f32.mrb[0].mxu0
    %v751 = vadd.f32 %v705, %v750
    %v752 = vpop.f32.mrb[0].mxu0
    %v753 = vpop.f32.mrb[0].mxu0
    %v754 = vpop.f32.mrb[0].mxu0
    %755 = vdwg.mxu0
    %v756 = vadd.f32 %v751, %v419
    %v757 = vxor.u32 %v756, 2147483648
    %v758 = vmul.f32 %v757, 1.442695
    %v759 = vpow.pop %v758
    %v760 = vadd.f32 %v759, 1.0
    %v761 = vrcp.pop %v760
    %v762 = vmul.f32 1.0, %v761
    %v763 = vtanh.pop %v756
    %v764 = vmul.f32 %v762, %v438
    %766 = vrot.lane.b32.xlu0 %v763, 64
    %v767 = vpop.permute.xlu0 %766
    %v769 = vmul.f32 %v762, %v767
    %771 = vrot.lane.b32.xlu0 %v769, 32
    %v772 = vpop.permute.xlu0 %771
    %v774 = vadd.f32 %v764, %v772
    %v775 = vtanh.pop %v774
    %777 = vrot.lane.b32.xlu0 %v775, 64
    %v778 = vpop.permute.xlu0 %777
    %v780 = vmul.f32 %v762, %v778
    %v781 = vpack.c.bf16 %v780, %v780
    %v782 = vpack.c.bf16 %v595, %v595
    %784 = vrot.lane.b32.xlu0 %v782, 32
    %v785 = vpop.permute.xlu0 %784
    %v787 = vsel %vm118, %v785, 0
    %789 = vmatprep.subr.bf16.mxu0 0
    %790 = vmatpush1.bf16.msra.mxu0 %v464
    %791 = vmatprep.subr.bf16.mxu0 0
    %792 = vmatpush1.bf16.msra.mxu0 %v465
    %793 = vmatprep.subr.bf16.mxu0 0
    %794 = vmatpush1.bf16.msra.mxu0 0
    %795 = vmatprep.subr.bf16.mxu0 0
    %796 = vmatpush1.bf16.msra.mxu0 0
    %797 = vmatprep.subr.bf16.mxu0 0
    %798 = vmatpush1.bf16.msra.mxu0 0
    %799 = vmatprep.subr.bf16.mxu0 0
    %800 = vmatpush1.bf16.msra.mxu0 0
    %801 = vmatprep.subr.bf16.mxu0 0
    %802 = vmatpush1.bf16.msra.mxu0 0
    %803 = vmatprep.subr.bf16.mxu0 0
    %804 = vmatpush1.bf16.msra.mxu0 0
    %805 = vmatprep.subr.bf16.mxu0 0
    %806 = vmatpush1.bf16.msra.mxu0 0
    %807 = vmatprep.subr.bf16.mxu0 0
    %808 = vmatpush1.bf16.msra.mxu0 0
    %809 = vmatprep.subr.bf16.mxu0 0
    %810 = vmatpush1.bf16.msra.mxu0 0
    %811 = vmatprep.subr.bf16.mxu0 0
    %812 = vmatpush1.bf16.msra.mxu0 0
    %813 = vmatprep.subr.bf16.mxu0 0
    %814 = vmatpush1.bf16.msra.mxu0 0
    %815 = vmatprep.subr.bf16.mxu0 0
    %816 = vmatpush1.bf16.msra.mxu0 0
    %817 = vmatprep.subr.bf16.mxu0 0
    %818 = vmatpush1.bf16.msra.mxu0 0
    %819 = vmatprep.subr.bf16.mxu0 0
    %820 = vmatpush1.bf16.msra.mxu0 0
    %821 = vmatprep.mubr.bf16.mxu0 0
    %822 = vmatmul.mubr.bf16.gmra.mrb[0].mxu0 %v787
    %v823 = vpop.f32.mrb[0].mxu0
    %v824 = vadd.f32 0.0, %v823
    %v825 = vpop.f32.mrb[0].mxu0
    %v826 = vpop.f32.mrb[0].mxu0
    %v827 = vpop.f32.mrb[0].mxu0
    %828 = vdwg.mxu0
    %830 = vrot.lane.b32.xlu0 %v781, 32
    %v831 = vpop.permute.xlu0 %830
    %v833 = vsel %vm118, %v831, 0
    %835 = vmatprep.subr.bf16.mxu0 0
    %836 = vmatpush1.bf16.msra.mxu0 %v519
    %837 = vmatprep.subr.bf16.mxu0 0
    %838 = vmatpush1.bf16.msra.mxu0 %v520
    %839 = vmatprep.subr.bf16.mxu0 0
    %840 = vmatpush1.bf16.msra.mxu0 0
    %841 = vmatprep.subr.bf16.mxu0 0
    %842 = vmatpush1.bf16.msra.mxu0 0
    %843 = vmatprep.subr.bf16.mxu0 0
    %844 = vmatpush1.bf16.msra.mxu0 0
    %845 = vmatprep.subr.bf16.mxu0 0
    %846 = vmatpush1.bf16.msra.mxu0 0
    %847 = vmatprep.subr.bf16.mxu0 0
    %848 = vmatpush1.bf16.msra.mxu0 0
    %849 = vmatprep.subr.bf16.mxu0 0
    %850 = vmatpush1.bf16.msra.mxu0 0
    %851 = vmatprep.subr.bf16.mxu0 0
    %852 = vmatpush1.bf16.msra.mxu0 0
    %853 = vmatprep.subr.bf16.mxu0 0
    %854 = vmatpush1.bf16.msra.mxu0 0
    %855 = vmatprep.subr.bf16.mxu0 0
    %856 = vmatpush1.bf16.msra.mxu0 0
    %857 = vmatprep.subr.bf16.mxu0 0
    %858 = vmatpush1.bf16.msra.mxu0 0
    %859 = vmatprep.subr.bf16.mxu0 0
    %860 = vmatpush1.bf16.msra.mxu0 0
    %861 = vmatprep.subr.bf16.mxu0 0
    %862 = vmatpush1.bf16.msra.mxu0 0
    %863 = vmatprep.subr.bf16.mxu0 0
    %864 = vmatpush1.bf16.msra.mxu0 0
    %865 = vmatprep.subr.bf16.mxu0 0
    %866 = vmatpush1.bf16.msra.mxu0 0
    %867 = vmatprep.mubr.bf16.mxu0 0
    %868 = vmatmul.mubr.bf16.gmra.mrb[0].mxu0 %v833
    %v869 = vpop.f32.mrb[0].mxu0
    %v870 = vadd.f32 %v824, %v869
    %v871 = vpop.f32.mrb[0].mxu0
    %v872 = vpop.f32.mrb[0].mxu0
    %v873 = vpop.f32.mrb[0].mxu0
    %874 = vdwg.mxu0
    %v875 = vadd.f32 %v870, %v570
    %v876 = vxor.u32 %v875, 2147483648
    %v877 = vmul.f32 %v876, 1.442695
    %v878 = vpow.pop %v877
    %v879 = vadd.f32 %v878, 1.0
    %v880 = vrcp.pop %v879
    %v881 = vmul.f32 1.0, %v880
    %v882 = vtanh.pop %v875
    %v883 = vmul.f32 %v881, %v589
    %885 = vrot.lane.b32.xlu0 %v882, 64
    %v886 = vpop.permute.xlu0 %885
    %v888 = vmul.f32 %v881, %v886
    %890 = vrot.lane.b32.xlu0 %v888, 32
    %v891 = vpop.permute.xlu0 %890
    %v893 = vadd.f32 %v883, %v891
    %v894 = vtanh.pop %v893
    %896 = vrot.lane.b32.xlu0 %v894, 64
    %v897 = vpop.permute.xlu0 %896
    %v899 = vmul.f32 %v881, %v897
    %s900 = scalar_lea.vmem [#allocation3], 8
    %v901 = vld [vmem:[%s900] sm:$0xff]
    %903 = vrot.lane.b32.xlu0 %v899, 32
    %v904 = vpop.permute.xlu0 %903
    %v906 = vmul.f32 %v901, %v904
    %v907 = vadd.f32 %v602, %v906
    %v908 = vld [vmem:[%s199] sm:$0xff]
    %909 = vmatprep.subr.bf16.mxu0 0
    %910 = vmatpush1.bf16.msra.mxu0 %v224
    %911 = vmatprep.subr.bf16.mxu0 0
    %912 = vmatpush1.bf16.msra.mxu0 %v225
    %913 = vmatprep.subr.bf16.mxu0 0
    %914 = vmatpush1.bf16.msra.mxu0 0
    %915 = vmatprep.subr.bf16.mxu0 0
    %916 = vmatpush1.bf16.msra.mxu0 0
    %917 = vmatprep.subr.bf16.mxu0 0
    %918 = vmatpush1.bf16.msra.mxu0 0
    %919 = vmatprep.subr.bf16.mxu0 0
    %920 = vmatpush1.bf16.msra.mxu0 0
    %921 = vmatprep.subr.bf16.mxu0 0
    %922 = vmatpush1.bf16.msra.mxu0 0
    %923 = vmatprep.subr.bf16.mxu0 0
    %924 = vmatpush1.bf16.msra.mxu0 0
    %925 = vmatprep.subr.bf16.mxu0 0
    %926 = vmatpush1.bf16.msra.mxu0 0
    %927 = vmatprep.subr.bf16.mxu0 0
    %928 = vmatpush1.bf16.msra.mxu0 0
    %929 = vmatprep.subr.bf16.mxu0 0
    %930 = vmatpush1.bf16.msra.mxu0 0
    %931 = vmatprep.subr.bf16.mxu0 0
    %932 = vmatpush1.bf16.msra.mxu0 0
    %933 = vmatprep.subr.bf16.mxu0 0
    %934 = vmatpush1.bf16.msra.mxu0 0
    %935 = vmatprep.subr.bf16.mxu0 0
    %936 = vmatpush1.bf16.msra.mxu0 0
    %937 = vmatprep.subr.bf16.mxu0 0
    %938 = vmatpush1.bf16.msra.mxu0 0
    %939 = vmatprep.subr.bf16.mxu0 0
    %940 = vmatpush1.bf16.msra.mxu0 0
    %941 = vmatprep.mubr.bf16.mxu0 0
    %942 = vmatmul.mubr.bf16.gmra.mrb[0].mxu0 %v714
    %v943 = vpop.f32.mrb[0].mxu0
    %v944 = vadd.f32 0.0, %v943
    %v945 = vpop.f32.mrb[0].mxu0
    %v946 = vpop.f32.mrb[0].mxu0
    %v947 = vpop.f32.mrb[0].mxu0
    %948 = vdwg.mxu0
    %v949 = vadd.f32 %v908, %v944
    %v950 = vxor.u32 %v949, 2147483648
    %v951 = vmul.f32 %v950, 1.442695
    %v952 = vpow.pop %v951
    %v953 = vadd.f32 %v952, 1.0
    %v954 = vrcp.pop %v953
    %v955 = vmul.f32 1.0, %v954
    %v956 = vtanh.pop %v949
    %v957 = vmul.f32 %v955, %v662
    %959 = vrot.lane.b32.xlu0 %v956, 64
    %v960 = vpop.permute.xlu0 %959
    %v962 = vmul.f32 %v955, %v960
    %964 = vrot.lane.b32.xlu0 %v962, 32
    %v965 = vpop.permute.xlu0 %964
    %v967 = vadd.f32 %v957, %v965
    %v968 = vtanh.pop %v967
    %970 = vrot.lane.b32.xlu0 %v968, 64
    %v971 = vpop.permute.xlu0 %970
    %v973 = vmul.f32 %v955, %v971
    %v974 = vpack.c.bf16 %v973, %v973
    %975 = vmatprep.subr.bf16.mxu0 0
    %976 = vmatpush1.bf16.msra.mxu0 %v313
    %977 = vmatprep.subr.bf16.mxu0 0
    %978 = vmatpush1.bf16.msra.mxu0 %v314
    %979 = vmatprep.subr.bf16.mxu0 0
    %980 = vmatpush1.bf16.msra.mxu0 0
    %981 = vmatprep.subr.bf16.mxu0 0
    %982 = vmatpush1.bf16.msra.mxu0 0
    %983 = vmatprep.subr.bf16.mxu0 0
    %984 = vmatpush1.bf16.msra.mxu0 0
    %985 = vmatprep.subr.bf16.mxu0 0
    %986 = vmatpush1.bf16.msra.mxu0 0
    %987 = vmatprep.subr.bf16.mxu0 0
    %988 = vmatpush1.bf16.msra.mxu0 0
    %989 = vmatprep.subr.bf16.mxu0 0
    %990 = vmatpush1.bf16.msra.mxu0 0
    %991 = vmatprep.subr.bf16.mxu0 0
    %992 = vmatpush1.bf16.msra.mxu0 0
    %993 = vmatprep.subr.bf16.mxu0 0
    %994 = vmatpush1.bf16.msra.mxu0 0
    %995 = vmatprep.subr.bf16.mxu0 0
    %996 = vmatpush1.bf16.msra.mxu0 0
    %997 = vmatprep.subr.bf16.mxu0 0
    %998 = vmatpush1.bf16.msra.mxu0 0
    %999 = vmatprep.subr.bf16.mxu0 0
    %1000 = vmatpush1.bf16.msra.mxu0 0
    %1001 = vmatprep.subr.bf16.mxu0 0
    %1002 = vmatpush1.bf16.msra.mxu0 0
    %1003 = vmatprep.subr.bf16.mxu0 0
    %1004 = vmatpush1.bf16.msra.mxu0 0
    %1005 = vmatprep.subr.bf16.mxu0 0
    %1006 = vmatpush1.bf16.msra.mxu0 0
    %1007 = vmatprep.mubr.bf16.mxu0 0
    %1008 = vmatmul.mubr.bf16.gmra.mrb[0].mxu0 %v833
    %v1009 = vpop.f32.mrb[0].mxu0
    %v1010 = vadd.f32 0.0, %v1009
    %v1011 = vpop.f32.mrb[0].mxu0
    %v1012 = vpop.f32.mrb[0].mxu0
    %v1013 = vpop.f32.mrb[0].mxu0
    %1014 = vdwg.mxu0
    %1016 = vrot.lane.b32.xlu0 %v974, 32
    %v1017 = vpop.permute.xlu0 %1016
    %v1019 = vsel %vm118, %v1017, 0
    %1021 = vmatprep.subr.bf16.mxu0 0
    %1022 = vmatpush1.bf16.msra.mxu0 %v368
    %1023 = vmatprep.subr.bf16.mxu0 0
    %1024 = vmatpush1.bf16.msra.mxu0 %v369
    %1025 = vmatprep.subr.bf16.mxu0 0
    %1026 = vmatpush1.bf16.msra.mxu0 0
    %1027 = vmatprep.subr.bf16.mxu0 0
    %1028 = vmatpush1.bf16.msra.mxu0 0
    %1029 = vmatprep.subr.bf16.mxu0 0
    %1030 = vmatpush1.bf16.msra.mxu0 0
    %1031 = vmatprep.subr.bf16.mxu0 0
    %1032 = vmatpush1.bf16.msra.mxu0 0
    %1033 = vmatprep.subr.bf16.mxu0 0
    %1034 = vmatpush1.bf16.msra.mxu0 0
    %1035 = vmatprep.subr.bf16.mxu0 0
    %1036 = vmatpush1.bf16.msra.mxu0 0
    %1037 = vmatprep.subr.bf16.mxu0 0
    %1038 = vmatpush1.bf16.msra.mxu0 0
    %1039 = vmatprep.subr.bf16.mxu0 0
    %1040 = vmatpush1.bf16.msra.mxu0 0
    %1041 = vmatprep.subr.bf16.mxu0 0
    %1042 = vmatpush1.bf16.msra.mxu0 0
    %1043 = vmatprep.subr.bf16.mxu0 0
    %1044 = vmatpush1.bf16.msra.mxu0 0
    %1045 = vmatprep.subr.bf16.mxu0 0
    %1046 = vmatpush1.bf16.msra.mxu0 0
    %1047 = vmatprep.subr.bf16.mxu0 0
    %1048 = vmatpush1.bf16.msra.mxu0 0
    %1049 = vmatprep.subr.bf16.mxu0 0
    %1050 = vmatpush1.bf16.msra.mxu0 0
    %1051 = vmatprep.subr.bf16.mxu0 0
    %1052 = vmatpush1.bf16.msra.mxu0 0
    %1053 = vmatprep.mubr.bf16.mxu0 0
    %1054 = vmatmul.mubr.bf16.gmra.mrb[0].mxu0 %v1019
    %v1055 = vpop.f32.mrb[0].mxu0
    %v1056 = vadd.f32 %v1010, %v1055
    %v1057 = vpop.f32.mrb[0].mxu0
    %v1058 = vpop.f32.mrb[0].mxu0
    %v1059 = vpop.f32.mrb[0].mxu0
    %1060 = vdwg.mxu0
    %v1061 = vadd.f32 %v1056, %v419
    %v1062 = vxor.u32 %v1061, 2147483648
    %v1063 = vmul.f32 %v1062, 1.442695
    %v1064 = vpow.pop %v1063
    %v1065 = vadd.f32 %v1064, 1.0
    %v1066 = vrcp.pop %v1065
    %v1067 = vmul.f32 1.0, %v1066
    %v1068 = vtanh.pop %v1061
    %v1069 = vmul.f32 %v1067, %v774
    %1071 = vrot.lane.b32.xlu0 %v1068, 64
    %v1072 = vpop.permute.xlu0 %1071
    %v1074 = vmul.f32 %v1067, %v1072
    %1076 = vrot.lane.b32.xlu0 %v1074, 32
    %v1077 = vpop.permute.xlu0 %1076
    %v1079 = vadd.f32 %v1069, %v1077
    %v1080 = vtanh.pop %v1079
    %1082 = vrot.lane.b32.xlu0 %v1080, 64
    %v1083 = vpop.permute.xlu0 %1082
    %v1085 = vmul.f32 %v1067, %v1083
    %v1086 = vpack.c.bf16 %v1085, %v1085
    %v1087 = vpack.c.bf16 %v899, %v899
    %1089 = vrot.lane.b32.xlu0 %v1087, 32
    %v1090 = vpop.permute.xlu0 %1089
    %v1092 = vsel %vm118, %v1090, 0
    %1094 = vmatprep.subr.bf16.mxu0 0
    %1095 = vmatpush1.bf16.msra.mxu0 %v464
    %1096 = vmatprep.subr.bf16.mxu0 0
    %1097 = vmatpush1.bf16.msra.mxu0 %v465
    %1098 = vmatprep.subr.bf16.mxu0 0
    %1099 = vmatpush1.bf16.msra.mxu0 0
    %1100 = vmatprep.subr.bf16.mxu0 0
    %1101 = vmatpush1.bf16.msra.mxu0 0
    %1102 = vmatprep.subr.bf16.mxu0 0
    %1103 = vmatpush1.bf16.msra.mxu0 0
    %1104 = vmatprep.subr.bf16.mxu0 0
    %1105 = vmatpush1.bf16.msra.mxu0 0
    %1106 = vmatprep.subr.bf16.mxu0 0
    %1107 = vmatpush1.bf16.msra.mxu0 0
    %1108 = vmatprep.subr.bf16.mxu0 0
    %1109 = vmatpush1.bf16.msra.mxu0 0
    %1110 = vmatprep.subr.bf16.mxu0 0
    %1111 = vmatpush1.bf16.msra.mxu0 0
    %1112 = vmatprep.subr.bf16.mxu0 0
    %1113 = vmatpush1.bf16.msra.mxu0 0
    %1114 = vmatprep.subr.bf16.mxu0 0
    %1115 = vmatpush1.bf16.msra.mxu0 0
    %1116 = vmatprep.subr.bf16.mxu0 0
    %1117 = vmatpush1.bf16.msra.mxu0 0
    %1118 = vmatprep.subr.bf16.mxu0 0
    %1119 = vmatpush1.bf16.msra.mxu0 0
    %1120 = vmatprep.subr.bf16.mxu0 0
    %1121 = vmatpush1.bf16.msra.mxu0 0
    %1122 = vmatprep.subr.bf16.mxu0 0
    %1123 = vmatpush1.bf16.msra.mxu0 0
    %1124 = vmatprep.subr.bf16.mxu0 0
    %1125 = vmatpush1.bf16.msra.mxu0 0
    %1126 = vmatprep.mubr.bf16.mxu0 0
    %1127 = vmatmul.mubr.bf16.gmra.mrb[0].mxu0 %v1092
    %v1128 = vpop.f32.mrb[0].mxu0
    %v1129 = vadd.f32 0.0, %v1128
    %v1130 = vpop.f32.mrb[0].mxu0
    %v1131 = vpop.f32.mrb[0].mxu0
    %v1132 = vpop.f32.mrb[0].mxu0
    %1133 = vdwg.mxu0
    %1135 = vrot.lane.b32.xlu0 %v1086, 32
    %v1136 = vpop.permute.xlu0 %1135
    %v1138 = vsel %vm118, %v1136, 0
    %1140 = vmatprep.subr.bf16.mxu0 0
    %1141 = vmatpush1.bf16.msra.mxu0 %v519
    %1142 = vmatprep.subr.bf16.mxu0 0
    %1143 = vmatpush1.bf16.msra.mxu0 %v520
    %1144 = vmatprep.subr.bf16.mxu0 0
    %1145 = vmatpush1.bf16.msra.mxu0 0
    %1146 = vmatprep.subr.bf16.mxu0 0
    %1147 = vmatpush1.bf16.msra.mxu0 0
    %1148 = vmatprep.subr.bf16.mxu0 0
    %1149 = vmatpush1.bf16.msra.mxu0 0
    %1150 = vmatprep.subr.bf16.mxu0 0
    %1151 = vmatpush1.bf16.msra.mxu0 0
    %1152 = vmatprep.subr.bf16.mxu0 0
    %1153 = vmatpush1.bf16.msra.mxu0 0
    %1154 = vmatprep.subr.bf16.mxu0 0
    %1155 = vmatpush1.bf16.msra.mxu0 0
    %1156 = vmatprep.subr.bf16.mxu0 0
    %1157 = vmatpush1.bf16.msra.mxu0 0
    %1158 = vmatprep.subr.bf16.mxu0 0
    %1159 = vmatpush1.bf16.msra.mxu0 0
    %1160 = vmatprep.subr.bf16.mxu0 0
    %1161 = vmatpush1.bf16.msra.mxu0 0
    %1162 = vmatprep.subr.bf16.mxu0 0
    %1163 = vmatpush1.bf16.msra.mxu0 0
    %1164 = vmatprep.subr.bf16.mxu0 0
    %1165 = vmatpush1.bf16.msra.mxu0 0
    %1166 = vmatprep.subr.bf16.mxu0 0
    %1167 = vmatpush1.bf16.msra.mxu0 0
    %1168 = vmatprep.subr.bf16.mxu0 0
    %1169 = vmatpush1.bf16.msra.mxu0 0
    %1170 = vmatprep.subr.bf16.mxu0 0
    %1171 = vmatpush1.bf16.msra.mxu0 0
    %1172 = vmatprep.mubr.bf16.mxu0 0
    %1173 = vmatmul.mubr.bf16.gmra.mrb[0].mxu0 %v1138
    %v1174 = vpop.f32.mrb[0].mxu0
    %v1175 = vadd.f32 %v1129, %v1174
    %v1176 = vpop.f32.mrb[0].mxu0
    %v1177 = vpop.f32.mrb[0].mxu0
    %v1178 = vpop.f32.mrb[0].mxu0
    %1179 = vdwg.mxu0
    %v1180 = vadd.f32 %v1175, %v570
    %v1181 = vxor.u32 %v1180, 2147483648
    %v1182 = vmul.f32 %v1181, 1.442695
    %v1183 = vpow.pop %v1182
    %v1184 = vadd.f32 %v1183, 1.0
    %v1185 = vrcp.pop %v1184
    %v1186 = vmul.f32 1.0, %v1185
    %v1187 = vtanh.pop %v1180
    %v1188 = vmul.f32 %v1186, %v893
    %1190 = vrot.lane.b32.xlu0 %v1187, 64
    %v1191 = vpop.permute.xlu0 %1190
    %v1193 = vmul.f32 %v1186, %v1191
    %1195 = vrot.lane.b32.xlu0 %v1193, 32
    %v1196 = vpop.permute.xlu0 %1195
    %v1198 = vadd.f32 %v1188, %v1196
    %v1199 = vtanh.pop %v1198
    %1201 = vrot.lane.b32.xlu0 %v1199, 64
    %v1202 = vpop.permute.xlu0 %1201
    %v1204 = vmul.f32 %v1186, %v1202
    %s1205 = scalar_lea.vmem [#allocation3], 16
    %v1206 = vld [vmem:[%s1205] sm:$0xff]
    %1208 = vrot.lane.b32.xlu0 %v1204, 32
    %v1209 = vpop.permute.xlu0 %1208
    %v1211 = vmul.f32 %v1206, %v1209
    %v1212 = vadd.f32 %v907, %v1211
    %v1213 = vld [vmem:[%s201] sm:$0xff]
    %1214 = vmatprep.subr.bf16.mxu0 0
    %1215 = vmatpush1.bf16.msra.mxu0 %v224
    %1216 = vmatprep.subr.bf16.mxu0 0
    %1217 = vmatpush1.bf16.msra.mxu0 %v225
    %1218 = vmatprep.subr.bf16.mxu0 0
    %1219 = vmatpush1.bf16.msra.mxu0 0
    %1220 = vmatprep.subr.bf16.mxu0 0
    %1221 = vmatpush1.bf16.msra.mxu0 0
    %1222 = vmatprep.subr.bf16.mxu0 0
    %1223 = vmatpush1.bf16.msra.mxu0 0
    %1224 = vmatprep.subr.bf16.mxu0 0
    %1225 = vmatpush1.bf16.msra.mxu0 0
    %1226 = vmatprep.subr.bf16.mxu0 0
    %1227 = vmatpush1.bf16.msra.mxu0 0
    %1228 = vmatprep.subr.bf16.mxu0 0
    %1229 = vmatpush1.bf16.msra.mxu0 0
    %1230 = vmatprep.subr.bf16.mxu0 0
    %1231 = vmatpush1.bf16.msra.mxu0 0
    %1232 = vmatprep.subr.bf16.mxu0 0
    %1233 = vmatpush1.bf16.msra.mxu0 0
    %1234 = vmatprep.subr.bf16.mxu0 0
    %1235 = vmatpush1.bf16.msra.mxu0 0
    %1236 = vmatprep.subr.bf16.mxu0 0
    %1237 = vmatpush1.bf16.msra.mxu0 0
    %1238 = vmatprep.subr.bf16.mxu0 0
    %1239 = vmatpush1.bf16.msra.mxu0 0
    %1240 = vmatprep.subr.bf16.mxu0 0
    %1241 = vmatpush1.bf16.msra.mxu0 0
    %1242 = vmatprep.subr.bf16.mxu0 0
    %1243 = vmatpush1.bf16.msra.mxu0 0
    %1244 = vmatprep.subr.bf16.mxu0 0
    %1245 = vmatpush1.bf16.msra.mxu0 0
    %1246 = vmatprep.mubr.bf16.mxu0 0
    %1247 = vmatmul.mubr.bf16.gmra.mrb[0].mxu0 %v1019
    %v1248 = vpop.f32.mrb[0].mxu0
    %v1249 = vadd.f32 0.0, %v1248
    %v1250 = vpop.f32.mrb[0].mxu0
    %v1251 = vpop.f32.mrb[0].mxu0
    %v1252 = vpop.f32.mrb[0].mxu0
    %1253 = vdwg.mxu0
    %v1254 = vadd.f32 %v1213, %v1249
    %v1255 = vxor.u32 %v1254, 2147483648
    %v1256 = vmul.f32 %v1255, 1.442695
    %v1257 = vpow.pop %v1256
    %v1258 = vadd.f32 %v1257, 1.0
    %v1259 = vrcp.pop %v1258
    %v1260 = vmul.f32 1.0, %v1259
    %v1261 = vtanh.pop %v1254
    %v1262 = vmul.f32 %v1260, %v967
    %1264 = vrot.lane.b32.xlu0 %v1261, 64
    %v1265 = vpop.permute.xlu0 %1264
    %v1267 = vmul.f32 %v1260, %v1265
    %1269 = vrot.lane.b32.xlu0 %v1267, 32
    %v1270 = vpop.permute.xlu0 %1269
    %v1272 = vadd.f32 %v1262, %v1270
    %v1273 = vtanh.pop %v1272
    %1275 = vrot.lane.b32.xlu0 %v1273, 64
    %v1276 = vpop.permute.xlu0 %1275
    %v1278 = vmul.f32 %v1260, %v1276
    %v1279 = vpack.c.bf16 %v1278, %v1278
    %1280 = vmatprep.subr.bf16.mxu0 0
    %1281 = vmatpush1.bf16.msra.mxu0 %v313
    %1282 = vmatprep.subr.bf16.mxu0 0
    %1283 = vmatpush1.bf16.msra.mxu0 %v314
    %1284 = vmatprep.subr.bf16.mxu0 0
    %1285 = vmatpush1.bf16.msra.mxu0 0
    %1286 = vmatprep.subr.bf16.mxu0 0
    %1287 = vmatpush1.bf16.msra.mxu0 0
    %1288 = vmatprep.subr.bf16.mxu0 0
    %1289 = vmatpush1.bf16.msra.mxu0 0
    %1290 = vmatprep.subr.bf16.mxu0 0
    %1291 = vmatpush1.bf16.msra.mxu0 0
    %1292 = vmatprep.subr.bf16.mxu0 0
    %1293 = vmatpush1.bf16.msra.mxu0 0
    %1294 = vmatprep.subr.bf16.mxu0 0
    %1295 = vmatpush1.bf16.msra.mxu0 0
    %1296 = vmatprep.subr.bf16.mxu0 0
    %1297 = vmatpush1.bf16.msra.mxu0 0
    %1298 = vmatprep.subr.bf16.mxu0 0
    %1299 = vmatpush1.bf16.msra.mxu0 0
    %1300 = vmatprep.subr.bf16.mxu0 0
    %1301 = vmatpush1.bf16.msra.mxu0 0
    %1302 = vmatprep.subr.bf16.mxu0 0
    %1303 = vmatpush1.bf16.msra.mxu0 0
    %1304 = vmatprep.subr.bf16.mxu0 0
    %1305 = vmatpush1.bf16.msra.mxu0 0
    %1306 = vmatprep.subr.bf16.mxu0 0
    %1307 = vmatpush1.bf16.msra.mxu0 0
    %1308 = vmatprep.subr.bf16.mxu0 0
    %1309 = vmatpush1.bf16.msra.mxu0 0
    %1310 = vmatprep.subr.bf16.mxu0 0
    %1311 = vmatpush1.bf16.msra.mxu0 0
    %1312 = vmatprep.mubr.bf16.mxu0 0
    %1313 = vmatmul.mubr.bf16.gmra.mrb[0].mxu0 %v1138
    %v1314 = vpop.f32.mrb[0].mxu0
    %v1315 = vadd.f32 0.0, %v1314
    %v1316 = vpop.f32.mrb[0].mxu0
    %v1317 = vpop.f32.mrb[0].mxu0
    %v1318 = vpop.f32.mrb[0].mxu0
    %1319 = vdwg.mxu0
    %1321 = vrot.lane.b32.xlu0 %v1279, 32
    %v1322 = vpop.permute.xlu0 %1321
    %v1324 = vsel %vm118, %v1322, 0
    %1326 = vmatprep.subr.bf16.mxu0 0
    %1327 = vmatpush1.bf16.msra.mxu0 %v368
    %1328 = vmatprep.subr.bf16.mxu0 0
    %1329 = vmatpush1.bf16.msra.mxu0 %v369
    %1330 = vmatprep.subr.bf16.mxu0 0
    %1331 = vmatpush1.bf16.msra.mxu0 0
    %1332 = vmatprep.subr.bf16.mxu0 0
    %1333 = vmatpush1.bf16.msra.mxu0 0
    %1334 = vmatprep.subr.bf16.mxu0 0
    %1335 = vmatpush1.bf16.msra.mxu0 0
    %1336 = vmatprep.subr.bf16.mxu0 0
    %1337 = vmatpush1.bf16.msra.mxu0 0
    %1338 = vmatprep.subr.bf16.mxu0 0
    %1339 = vmatpush1.bf16.msra.mxu0 0
    %1340 = vmatprep.subr.bf16.mxu0 0
    %1341 = vmatpush1.bf16.msra.mxu0 0
    %1342 = vmatprep.subr.bf16.mxu0 0
    %1343 = vmatpush1.bf16.msra.mxu0 0
    %1344 = vmatprep.subr.bf16.mxu0 0
    %1345 = vmatpush1.bf16.msra.mxu0 0
    %1346 = vmatprep.subr.bf16.mxu0 0
    %1347 = vmatpush1.bf16.msra.mxu0 0
    %1348 = vmatprep.subr.bf16.mxu0 0
    %1349 = vmatpush1.bf16.msra.mxu0 0
    %1350 = vmatprep.subr.bf16.mxu0 0
    %1351 = vmatpush1.bf16.msra.mxu0 0
    %1352 = vmatprep.subr.bf16.mxu0 0
    %1353 = vmatpush1.bf16.msra.mxu0 0
    %1354 = vmatprep.subr.bf16.mxu0 0
    %1355 = vmatpush1.bf16.msra.mxu0 0
    %1356 = vmatprep.subr.bf16.mxu0 0
    %1357 = vmatpush1.bf16.msra.mxu0 0
    %1358 = vmatprep.mubr.bf16.mxu0 0
    %1359 = vmatmul.mubr.bf16.gmra.mrb[0].mxu0 %v1324
    %v1360 = vpop.f32.mrb[0].mxu0
    %v1361 = vadd.f32 %v1315, %v1360
    %v1362 = vpop.f32.mrb[0].mxu0
    %v1363 = vpop.f32.mrb[0].mxu0
    %v1364 = vpop.f32.mrb[0].mxu0
    %1365 = vdwg.mxu0
    %v1366 = vadd.f32 %v1361, %v419
    %v1367 = vxor.u32 %v1366, 2147483648
    %v1368 = vmul.f32 %v1367, 1.442695
    %v1369 = vpow.pop %v1368
    %v1370 = vadd.f32 %v1369, 1.0
    %v1371 = vrcp.pop %v1370
    %v1372 = vmul.f32 1.0, %v1371
    %v1373 = vtanh.pop %v1366
    %v1374 = vmul.f32 %v1372, %v1079
    %1376 = vrot.lane.b32.xlu0 %v1373, 64
    %v1377 = vpop.permute.xlu0 %1376
    %v1379 = vmul.f32 %v1372, %v1377
    %1381 = vrot.lane.b32.xlu0 %v1379, 32
    %v1382 = vpop.permute.xlu0 %1381
    %v1384 = vadd.f32 %v1374, %v1382
    %v1385 = vtanh.pop %v1384
    %1387 = vrot.lane.b32.xlu0 %v1385, 64
    %v1388 = vpop.permute.xlu0 %1387
    %v1390 = vmul.f32 %v1372, %v1388
    %v1391 = vpack.c.bf16 %v1390, %v1390
    %v1392 = vpack.c.bf16 %v1204, %v1204
    %1394 = vrot.lane.b32.xlu0 %v1392, 32
    %v1395 = vpop.permute.xlu0 %1394
    %v1397 = vsel %vm118, %v1395, 0
    %1399 = vmatprep.subr.bf16.mxu0 0
    %1400 = vmatpush1.bf16.msra.mxu0 %v464
    %1401 = vmatprep.subr.bf16.mxu0 0
    %1402 = vmatpush1.bf16.msra.mxu0 %v465
    %1403 = vmatprep.subr.bf16.mxu0 0
    %1404 = vmatpush1.bf16.msra.mxu0 0
    %1405 = vmatprep.subr.bf16.mxu0 0
    %1406 = vmatpush1.bf16.msra.mxu0 0
    %1407 = vmatprep.subr.bf16.mxu0 0
    %1408 = vmatpush1.bf16.msra.mxu0 0
    %1409 = vmatprep.subr.bf16.mxu0 0
    %1410 = vmatpush1.bf16.msra.mxu0 0
    %1411 = vmatprep.subr.bf16.mxu0 0
    %1412 = vmatpush1.bf16.msra.mxu0 0
    %1413 = vmatprep.subr.bf16.mxu0 0
    %1414 = vmatpush1.bf16.msra.mxu0 0
    %1415 = vmatprep.subr.bf16.mxu0 0
    %1416 = vmatpush1.bf16.msra.mxu0 0
    %1417 = vmatprep.subr.bf16.mxu0 0
    %1418 = vmatpush1.bf16.msra.mxu0 0
    %1419 = vmatprep.subr.bf16.mxu0 0
    %1420 = vmatpush1.bf16.msra.mxu0 0
    %1421 = vmatprep.subr.bf16.mxu0 0
    %1422 = vmatpush1.bf16.msra.mxu0 0
    %1423 = vmatprep.subr.bf16.mxu0 0
    %1424 = vmatpush1.bf16.msra.mxu0 0
    %1425 = vmatprep.subr.bf16.mxu0 0
    %1426 = vmatpush1.bf16.msra.mxu0 0
    %1427 = vmatprep.subr.bf16.mxu0 0
    %1428 = vmatpush1.bf16.msra.mxu0 0
    %1429 = vmatprep.subr.bf16.mxu0 0
    %1430 = vmatpush1.bf16.msra.mxu0 0
    %1431 = vmatprep.mubr.bf16.mxu0 0
    %1432 = vmatmul.mubr.bf16.gmra.mrb[0].mxu0 %v1397
    %v1433 = vpop.f32.mrb[0].mxu0
    %v1434 = vadd.f32 0.0, %v1433
    %v1435 = vpop.f32.mrb[0].mxu0
    %v1436 = vpop.f32.mrb[0].mxu0
    %v1437 = vpop.f32.mrb[0].mxu0
    %1438 = vdwg.mxu0
    %1440 = vrot.lane.b32.xlu0 %v1391, 32
    %v1441 = vpop.permute.xlu0 %1440
    %v1443 = vsel %vm118, %v1441, 0
    %1445 = vmatprep.subr.bf16.mxu0 0
    %1446 = vmatpush1.bf16.msra.mxu0 %v519
    %1447 = vmatprep.subr.bf16.mxu0 0
    %1448 = vmatpush1.bf16.msra.mxu0 %v520
    %1449 = vmatprep.subr.bf16.mxu0 0
    %1450 = vmatpush1.bf16.msra.mxu0 0
    %1451 = vmatprep.subr.bf16.mxu0 0
    %1452 = vmatpush1.bf16.msra.mxu0 0
    %1453 = vmatprep.subr.bf16.mxu0 0
    %1454 = vmatpush1.bf16.msra.mxu0 0
    %1455 = vmatprep.subr.bf16.mxu0 0
    %1456 = vmatpush1.bf16.msra.mxu0 0
    %1457 = vmatprep.subr.bf16.mxu0 0
    %1458 = vmatpush1.bf16.msra.mxu0 0
    %1459 = vmatprep.subr.bf16.mxu0 0
    %1460 = vmatpush1.bf16.msra.mxu0 0
    %1461 = vmatprep.subr.bf16.mxu0 0
    %1462 = vmatpush1.bf16.msra.mxu0 0
    %1463 = vmatprep.subr.bf16.mxu0 0
    %1464 = vmatpush1.bf16.msra.mxu0 0
    %1465 = vmatprep.subr.bf16.mxu0 0
    %1466 = vmatpush1.bf16.msra.mxu0 0
    %1467 = vmatprep.subr.bf16.mxu0 0
    %1468 = vmatpush1.bf16.msra.mxu0 0
    %1469 = vmatprep.subr.bf16.mxu0 0
    %1470 = vmatpush1.bf16.msra.mxu0 0
    %1471 = vmatprep.subr.bf16.mxu0 0
    %1472 = vmatpush1.bf16.msra.mxu0 0
    %1473 = vmatprep.subr.bf16.mxu0 0
    %1474 = vmatpush1.bf16.msra.mxu0 0
    %1475 = vmatprep.subr.bf16.mxu0 0
    %1476 = vmatpush1.bf16.msra.mxu0 0
    %1477 = vmatprep.mubr.bf16.mxu0 0
    %1478 = vmatmul.mubr.bf16.gmra.mrb[0].mxu0 %v1443
    %v1479 = vpop.f32.mrb[0].mxu0
    %v1480 = vadd.f32 %v1434, %v1479
    %v1481 = vpop.f32.mrb[0].mxu0
    %v1482 = vpop.f32.mrb[0].mxu0
    %v1483 = vpop.f32.mrb[0].mxu0
    %1484 = vdwg.mxu0
    %v1485 = vadd.f32 %v1480, %v570
    %v1486 = vxor.u32 %v1485, 2147483648
    %v1487 = vmul.f32 %v1486, 1.442695
    %v1488 = vpow.pop %v1487
    %v1489 = vadd.f32 %v1488, 1.0
    %v1490 = vrcp.pop %v1489
    %v1491 = vmul.f32 1.0, %v1490
    %v1492 = vtanh.pop %v1485
    %v1493 = vmul.f32 %v1491, %v1198
    %1495 = vrot.lane.b32.xlu0 %v1492, 64
    %v1496 = vpop.permute.xlu0 %1495
    %v1498 = vmul.f32 %v1491, %v1496
    %1500 = vrot.lane.b32.xlu0 %v1498, 32
    %v1501 = vpop.permute.xlu0 %1500
    %v1503 = vadd.f32 %v1493, %v1501
    %v1504 = vtanh.pop %v1503
    %1506 = vrot.lane.b32.xlu0 %v1504, 64
    %v1507 = vpop.permute.xlu0 %1506
    %v1509 = vmul.f32 %v1491, %v1507
    %s1510 = scalar_lea.vmem [#allocation3], 24
    %v1511 = vld [vmem:[%s1510] sm:$0xff]
    %1513 = vrot.lane.b32.xlu0 %v1509, 32
    %v1514 = vpop.permute.xlu0 %1513
    %v1516 = vmul.f32 %v1511, %v1514
    %v1517 = vadd.f32 %v1212, %v1516
    %v1518 = vld [vmem:[%s203] sm:$0xff]
    %1519 = vmatprep.subr.bf16.mxu0 0
    %1520 = vmatpush1.bf16.msra.mxu0 %v224
    %1521 = vmatprep.subr.bf16.mxu0 0
    %1522 = vmatpush1.bf16.msra.mxu0 %v225
    %1523 = vmatprep.subr.bf16.mxu0 0
    %1524 = vmatpush1.bf16.msra.mxu0 0
    %1525 = vmatprep.subr.bf16.mxu0 0
    %1526 = vmatpush1.bf16.msra.mxu0 0
    %1527 = vmatprep.subr.bf16.mxu0 0
    %1528 = vmatpush1.bf16.msra.mxu0 0
    %1529 = vmatprep.subr.bf16.mxu0 0
    %1530 = vmatpush1.bf16.msra.mxu0 0
    %1531 = vmatprep.subr.bf16.mxu0 0
    %1532 = vmatpush1.bf16.msra.mxu0 0
    %1533 = vmatprep.subr.bf16.mxu0 0
    %1534 = vmatpush1.bf16.msra.mxu0 0
    %1535 = vmatprep.subr.bf16.mxu0 0
    %1536 = vmatpush1.bf16.msra.mxu0 0
    %1537 = vmatprep.subr.bf16.mxu0 0
    %1538 = vmatpush1.bf16.msra.mxu0 0
    %1539 = vmatprep.subr.bf16.mxu0 0
    %1540 = vmatpush1.bf16.msra.mxu0 0
    %1541 = vmatprep.subr.bf16.mxu0 0
    %1542 = vmatpush1.bf16.msra.mxu0 0
    %1543 = vmatprep.subr.bf16.mxu0 0
    %1544 = vmatpush1.bf16.msra.mxu0 0
    %1545 = vmatprep.subr.bf16.mxu0 0
    %1546 = vmatpush1.bf16.msra.mxu0 0
    %1547 = vmatprep.subr.bf16.mxu0 0
    %1548 = vmatpush1.bf16.msra.mxu0 0
    %1549 = vmatprep.subr.bf16.mxu0 0
    %1550 = vmatpush1.bf16.msra.mxu0 0
    %1551 = vmatprep.mubr.bf16.mxu0 0
    %1552 = vmatmul.mubr.bf16.gmra.mrb[0].mxu0 %v1324
    %v1553 = vpop.f32.mrb[0].mxu0
    %v1554 = vadd.f32 0.0, %v1553
    %v1555 = vpop.f32.mrb[0].mxu0
    %v1556 = vpop.f32.mrb[0].mxu0
    %v1557 = vpop.f32.mrb[0].mxu0
    %1558 = vdwg.mxu0
    %v1559 = vadd.f32 %v1518, %v1554
    %v1560 = vxor.u32 %v1559, 2147483648
    %v1561 = vmul.f32 %v1560, 1.442695
    %v1562 = vpow.pop %v1561
    %v1563 = vadd.f32 %v1562, 1.0
    %v1564 = vrcp.pop %v1563
    %v1565 = vmul.f32 1.0, %v1564
    %v1566 = vtanh.pop %v1559
    %v1567 = vmul.f32 %v1565, %v1272
    %1569 = vrot.lane.b32.xlu0 %v1566, 64
    %v1570 = vpop.permute.xlu0 %1569
    %v1572 = vmul.f32 %v1565, %v1570
    %1574 = vrot.lane.b32.xlu0 %v1572, 32
    %v1575 = vpop.permute.xlu0 %1574
    %v1577 = vadd.f32 %v1567, %v1575
    %v1578 = vtanh.pop %v1577
    %1580 = vrot.lane.b32.xlu0 %v1578, 64
    %v1581 = vpop.permute.xlu0 %1580
    %v1583 = vmul.f32 %v1565, %v1581
    %v1584 = vpack.c.bf16 %v1583, %v1583
    %1585 = vmatprep.subr.bf16.mxu0 0
    %1586 = vmatpush1.bf16.msra.mxu0 %v313
    %1587 = vmatprep.subr.bf16.mxu0 0
    %1588 = vmatpush1.bf16.msra.mxu0 %v314
    %1589 = vmatprep.subr.bf16.mxu0 0
    %1590 = vmatpush1.bf16.msra.mxu0 0
    %1591 = vmatprep.subr.bf16.mxu0 0
    %1592 = vmatpush1.bf16.msra.mxu0 0
    %1593 = vmatprep.subr.bf16.mxu0 0
    %1594 = vmatpush1.bf16.msra.mxu0 0
    %1595 = vmatprep.subr.bf16.mxu0 0
    %1596 = vmatpush1.bf16.msra.mxu0 0
    %1597 = vmatprep.subr.bf16.mxu0 0
    %1598 = vmatpush1.bf16.msra.mxu0 0
    %1599 = vmatprep.subr.bf16.mxu0 0
    %1600 = vmatpush1.bf16.msra.mxu0 0
    %1601 = vmatprep.subr.bf16.mxu0 0
    %1602 = vmatpush1.bf16.msra.mxu0 0
    %1603 = vmatprep.subr.bf16.mxu0 0
    %1604 = vmatpush1.bf16.msra.mxu0 0
    %1605 = vmatprep.subr.bf16.mxu0 0
    %1606 = vmatpush1.bf16.msra.mxu0 0
    %1607 = vmatprep.subr.bf16.mxu0 0
    %1608 = vmatpush1.bf16.msra.mxu0 0
    %1609 = vmatprep.subr.bf16.mxu0 0
    %1610 = vmatpush1.bf16.msra.mxu0 0
    %1611 = vmatprep.subr.bf16.mxu0 0
    %1612 = vmatpush1.bf16.msra.mxu0 0
    %1613 = vmatprep.subr.bf16.mxu0 0
    %1614 = vmatpush1.bf16.msra.mxu0 0
    %1615 = vmatprep.subr.bf16.mxu0 0
    %1616 = vmatpush1.bf16.msra.mxu0 0
    %1617 = vmatprep.mubr.bf16.mxu0 0
    %1618 = vmatmul.mubr.bf16.gmra.mrb[0].mxu0 %v1443
    %v1619 = vpop.f32.mrb[0].mxu0
    %v1620 = vadd.f32 0.0, %v1619
    %v1621 = vpop.f32.mrb[0].mxu0
    %v1622 = vpop.f32.mrb[0].mxu0
    %v1623 = vpop.f32.mrb[0].mxu0
    %1624 = vdwg.mxu0
    %1626 = vrot.lane.b32.xlu0 %v1584, 32
    %v1627 = vpop.permute.xlu0 %1626
    %v1629 = vsel %vm118, %v1627, 0
    %1631 = vmatprep.subr.bf16.mxu0 0
    %1632 = vmatpush1.bf16.msra.mxu0 %v368
    %1633 = vmatprep.subr.bf16.mxu0 0
    %1634 = vmatpush1.bf16.msra.mxu0 %v369
    %1635 = vmatprep.subr.bf16.mxu0 0
    %1636 = vmatpush1.bf16.msra.mxu0 0
    %1637 = vmatprep.subr.bf16.mxu0 0
    %1638 = vmatpush1.bf16.msra.mxu0 0
    %1639 = vmatprep.subr.bf16.mxu0 0
    %1640 = vmatpush1.bf16.msra.mxu0 0
    %1641 = vmatprep.subr.bf16.mxu0 0
    %1642 = vmatpush1.bf16.msra.mxu0 0
    %1643 = vmatprep.subr.bf16.mxu0 0
    %1644 = vmatpush1.bf16.msra.mxu0 0
    %1645 = vmatprep.subr.bf16.mxu0 0
    %1646 = vmatpush1.bf16.msra.mxu0 0
    %1647 = vmatprep.subr.bf16.mxu0 0
    %1648 = vmatpush1.bf16.msra.mxu0 0
    %1649 = vmatprep.subr.bf16.mxu0 0
    %1650 = vmatpush1.bf16.msra.mxu0 0
    %1651 = vmatprep.subr.bf16.mxu0 0
    %1652 = vmatpush1.bf16.msra.mxu0 0
    %1653 = vmatprep.subr.bf16.mxu0 0
    %1654 = vmatpush1.bf16.msra.mxu0 0
    %1655 = vmatprep.subr.bf16.mxu0 0
    %1656 = vmatpush1.bf16.msra.mxu0 0
    %1657 = vmatprep.subr.bf16.mxu0 0
    %1658 = vmatpush1.bf16.msra.mxu0 0
    %1659 = vmatprep.subr.bf16.mxu0 0
    %1660 = vmatpush1.bf16.msra.mxu0 0
    %1661 = vmatprep.subr.bf16.mxu0 0
    %1662 = vmatpush1.bf16.msra.mxu0 0
    %1663 = vmatprep.mubr.bf16.mxu0 0
    %1664 = vmatmul.mubr.bf16.gmra.mrb[0].mxu0 %v1629
    %v1665 = vpop.f32.mrb[0].mxu0
    %v1666 = vadd.f32 %v1620, %v1665
    %v1667 = vpop.f32.mrb[0].mxu0
    %v1668 = vpop.f32.mrb[0].mxu0
    %v1669 = vpop.f32.mrb[0].mxu0
    %1670 = vdwg.mxu0
    %v1671 = vadd.f32 %v1666, %v419
    %v1672 = vxor.u32 %v1671, 2147483648
    %v1673 = vmul.f32 %v1672, 1.442695
    %v1674 = vpow.pop %v1673
    %v1675 = vadd.f32 %v1674, 1.0
    %v1676 = vrcp.pop %v1675
    %v1677 = vmul.f32 1.0, %v1676
    %v1678 = vtanh.pop %v1671
    %v1679 = vmul.f32 %v1677, %v1384
    %1681 = vrot.lane.b32.xlu0 %v1678, 64
    %v1682 = vpop.permute.xlu0 %1681
    %v1684 = vmul.f32 %v1677, %v1682
    %1686 = vrot.lane.b32.xlu0 %v1684, 32
    %v1687 = vpop.permute.xlu0 %1686
    %v1689 = vadd.f32 %v1679, %v1687
    %v1690 = vtanh.pop %v1689
    %1692 = vrot.lane.b32.xlu0 %v1690, 64
    %v1693 = vpop.permute.xlu0 %1692
    %v1695 = vmul.f32 %v1677, %v1693
    %v1696 = vpack.c.bf16 %v1695, %v1695
    %v1697 = vpack.c.bf16 %v1509, %v1509
    %1699 = vrot.lane.b32.xlu0 %v1697, 32
    %v1700 = vpop.permute.xlu0 %1699
    %v1702 = vsel %vm118, %v1700, 0
    %1704 = vmatprep.subr.bf16.mxu0 0
    %1705 = vmatpush1.bf16.msra.mxu0 %v464
    %1706 = vmatprep.subr.bf16.mxu0 0
    %1707 = vmatpush1.bf16.msra.mxu0 %v465
    %1708 = vmatprep.subr.bf16.mxu0 0
    %1709 = vmatpush1.bf16.msra.mxu0 0
    %1710 = vmatprep.subr.bf16.mxu0 0
    %1711 = vmatpush1.bf16.msra.mxu0 0
    %1712 = vmatprep.subr.bf16.mxu0 0
    %1713 = vmatpush1.bf16.msra.mxu0 0
    %1714 = vmatprep.subr.bf16.mxu0 0
    %1715 = vmatpush1.bf16.msra.mxu0 0
    %1716 = vmatprep.subr.bf16.mxu0 0
    %1717 = vmatpush1.bf16.msra.mxu0 0
    %1718 = vmatprep.subr.bf16.mxu0 0
    %1719 = vmatpush1.bf16.msra.mxu0 0
    %1720 = vmatprep.subr.bf16.mxu0 0
    %1721 = vmatpush1.bf16.msra.mxu0 0
    %1722 = vmatprep.subr.bf16.mxu0 0
    %1723 = vmatpush1.bf16.msra.mxu0 0
    %1724 = vmatprep.subr.bf16.mxu0 0
    %1725 = vmatpush1.bf16.msra.mxu0 0
    %1726 = vmatprep.subr.bf16.mxu0 0
    %1727 = vmatpush1.bf16.msra.mxu0 0
    %1728 = vmatprep.subr.bf16.mxu0 0
    %1729 = vmatpush1.bf16.msra.mxu0 0
    %1730 = vmatprep.subr.bf16.mxu0 0
    %1731 = vmatpush1.bf16.msra.mxu0 0
    %1732 = vmatprep.subr.bf16.mxu0 0
    %1733 = vmatpush1.bf16.msra.mxu0 0
    %1734 = vmatprep.subr.bf16.mxu0 0
    %1735 = vmatpush1.bf16.msra.mxu0 0
    %1736 = vmatprep.mubr.bf16.mxu0 0
    %1737 = vmatmul.mubr.bf16.gmra.mrb[0].mxu0 %v1702
    %v1738 = vpop.f32.mrb[0].mxu0
    %v1739 = vadd.f32 0.0, %v1738
    %v1740 = vpop.f32.mrb[0].mxu0
    %v1741 = vpop.f32.mrb[0].mxu0
    %v1742 = vpop.f32.mrb[0].mxu0
    %1743 = vdwg.mxu0
    %1745 = vrot.lane.b32.xlu0 %v1696, 32
    %v1746 = vpop.permute.xlu0 %1745
    %v1748 = vsel %vm118, %v1746, 0
    %1750 = vmatprep.subr.bf16.mxu0 0
    %1751 = vmatpush1.bf16.msra.mxu0 %v519
    %1752 = vmatprep.subr.bf16.mxu0 0
    %1753 = vmatpush1.bf16.msra.mxu0 %v520
    %1754 = vmatprep.subr.bf16.mxu0 0
    %1755 = vmatpush1.bf16.msra.mxu0 0
    %1756 = vmatprep.subr.bf16.mxu0 0
    %1757 = vmatpush1.bf16.msra.mxu0 0
    %1758 = vmatprep.subr.bf16.mxu0 0
    %1759 = vmatpush1.bf16.msra.mxu0 0
    %1760 = vmatprep.subr.bf16.mxu0 0
    %1761 = vmatpush1.bf16.msra.mxu0 0
    %1762 = vmatprep.subr.bf16.mxu0 0
    %1763 = vmatpush1.bf16.msra.mxu0 0
    %1764 = vmatprep.subr.bf16.mxu0 0
    %1765 = vmatpush1.bf16.msra.mxu0 0
    %1766 = vmatprep.subr.bf16.mxu0 0
    %1767 = vmatpush1.bf16.msra.mxu0 0
    %1768 = vmatprep.subr.bf16.mxu0 0
    %1769 = vmatpush1.bf16.msra.mxu0 0
    %1770 = vmatprep.subr.bf16.mxu0 0
    %1771 = vmatpush1.bf16.msra.mxu0 0
    %1772 = vmatprep.subr.bf16.mxu0 0
    %1773 = vmatpush1.bf16.msra.mxu0 0
    %1774 = vmatprep.subr.bf16.mxu0 0
    %1775 = vmatpush1.bf16.msra.mxu0 0
    %1776 = vmatprep.subr.bf16.mxu0 0
    %1777 = vmatpush1.bf16.msra.mxu0 0
    %1778 = vmatprep.subr.bf16.mxu0 0
    %1779 = vmatpush1.bf16.msra.mxu0 0
    %1780 = vmatprep.subr.bf16.mxu0 0
    %1781 = vmatpush1.bf16.msra.mxu0 0
    %1782 = vmatprep.mubr.bf16.mxu0 0
    %1783 = vmatmul.mubr.bf16.gmra.mrb[0].mxu0 %v1748
    %v1784 = vpop.f32.mrb[0].mxu0
    %v1785 = vadd.f32 %v1739, %v1784
    %v1786 = vpop.f32.mrb[0].mxu0
    %v1787 = vpop.f32.mrb[0].mxu0
    %v1788 = vpop.f32.mrb[0].mxu0
    %1789 = vdwg.mxu0
    %v1790 = vadd.f32 %v1785, %v570
    %v1791 = vxor.u32 %v1790, 2147483648
    %v1792 = vmul.f32 %v1791, 1.442695
    %v1793 = vpow.pop %v1792
    %v1794 = vadd.f32 %v1793, 1.0
    %v1795 = vrcp.pop %v1794
    %v1796 = vmul.f32 1.0, %v1795
    %v1797 = vtanh.pop %v1790
    %v1798 = vmul.f32 %v1796, %v1503
    %1800 = vrot.lane.b32.xlu0 %v1797, 64
    %v1801 = vpop.permute.xlu0 %1800
    %v1803 = vmul.f32 %v1796, %v1801
    %1805 = vrot.lane.b32.xlu0 %v1803, 32
    %v1806 = vpop.permute.xlu0 %1805
    %v1808 = vadd.f32 %v1798, %v1806
    %v1809 = vtanh.pop %v1808
    %1811 = vrot.lane.b32.xlu0 %v1809, 64
    %v1812 = vpop.permute.xlu0 %1811
    %v1814 = vmul.f32 %v1796, %v1812
    %s1815 = scalar_lea.vmem [#allocation3], 32
    %v1816 = vld [vmem:[%s1815] sm:$0xff]
    %1818 = vrot.lane.b32.xlu0 %v1814, 32
    %v1819 = vpop.permute.xlu0 %1818
    %v1821 = vmul.f32 %v1816, %v1819
    %v1822 = vadd.f32 %v1517, %v1821
    %v1823 = vld [vmem:[%s205] sm:$0xff]
    %1824 = vmatprep.subr.bf16.mxu0 0
    %1825 = vmatpush1.bf16.msra.mxu0 %v224
    %1826 = vmatprep.subr.bf16.mxu0 0
    %1827 = vmatpush1.bf16.msra.mxu0 %v225
    %1828 = vmatprep.subr.bf16.mxu0 0
    %1829 = vmatpush1.bf16.msra.mxu0 0
    %1830 = vmatprep.subr.bf16.mxu0 0
    %1831 = vmatpush1.bf16.msra.mxu0 0
    %1832 = vmatprep.subr.bf16.mxu0 0
    %1833 = vmatpush1.bf16.msra.mxu0 0
    %1834 = vmatprep.subr.bf16.mxu0 0
    %1835 = vmatpush1.bf16.msra.mxu0 0
    %1836 = vmatprep.subr.bf16.mxu0 0
    %1837 = vmatpush1.bf16.msra.mxu0 0
    %1838 = vmatprep.subr.bf16.mxu0 0
    %1839 = vmatpush1.bf16.msra.mxu0 0
    %1840 = vmatprep.subr.bf16.mxu0 0
    %1841 = vmatpush1.bf16.msra.mxu0 0
    %1842 = vmatprep.subr.bf16.mxu0 0
    %1843 = vmatpush1.bf16.msra.mxu0 0
    %1844 = vmatprep.subr.bf16.mxu0 0
    %1845 = vmatpush1.bf16.msra.mxu0 0
    %1846 = vmatprep.subr.bf16.mxu0 0
    %1847 = vmatpush1.bf16.msra.mxu0 0
    %1848 = vmatprep.subr.bf16.mxu0 0
    %1849 = vmatpush1.bf16.msra.mxu0 0
    %1850 = vmatprep.subr.bf16.mxu0 0
    %1851 = vmatpush1.bf16.msra.mxu0 0
    %1852 = vmatprep.subr.bf16.mxu0 0
    %1853 = vmatpush1.bf16.msra.mxu0 0
    %1854 = vmatprep.subr.bf16.mxu0 0
    %1855 = vmatpush1.bf16.msra.mxu0 0
    %1856 = vmatprep.mubr.bf16.mxu0 0
    %1857 = vmatmul.mubr.bf16.gmra.mrb[0].mxu0 %v1629
    %v1858 = vpop.f32.mrb[0].mxu0
    %v1859 = vadd.f32 0.0, %v1858
    %v1860 = vpop.f32.mrb[0].mxu0
    %v1861 = vpop.f32.mrb[0].mxu0
    %v1862 = vpop.f32.mrb[0].mxu0
    %1863 = vdwg.mxu0
    %v1864 = vadd.f32 %v1823, %v1859
    %v1865 = vxor.u32 %v1864, 2147483648
    %v1866 = vmul.f32 %v1865, 1.442695
    %v1867 = vpow.pop %v1866
    %v1868 = vadd.f32 %v1867, 1.0
    %v1869 = vrcp.pop %v1868
    %v1870 = vmul.f32 1.0, %v1869
    %v1871 = vtanh.pop %v1864
    %v1872 = vmul.f32 %v1870, %v1577
    %1874 = vrot.lane.b32.xlu0 %v1871, 64
    %v1875 = vpop.permute.xlu0 %1874
    %v1877 = vmul.f32 %v1870, %v1875
    %1879 = vrot.lane.b32.xlu0 %v1877, 32
    %v1880 = vpop.permute.xlu0 %1879
    %v1882 = vadd.f32 %v1872, %v1880
    %v1883 = vtanh.pop %v1882
    %1885 = vrot.lane.b32.xlu0 %v1883, 64
    %v1886 = vpop.permute.xlu0 %1885
    %v1888 = vmul.f32 %v1870, %v1886
    %v1889 = vpack.c.bf16 %v1888, %v1888
    %1890 = vmatprep.subr.bf16.mxu0 0
    %1891 = vmatpush1.bf16.msra.mxu0 %v313
    %1892 = vmatprep.subr.bf16.mxu0 0
    %1893 = vmatpush1.bf16.msra.mxu0 %v314
    %1894 = vmatprep.subr.bf16.mxu0 0
    %1895 = vmatpush1.bf16.msra.mxu0 0
    %1896 = vmatprep.subr.bf16.mxu0 0
    %1897 = vmatpush1.bf16.msra.mxu0 0
    %1898 = vmatprep.subr.bf16.mxu0 0
    %1899 = vmatpush1.bf16.msra.mxu0 0
    %1900 = vmatprep.subr.bf16.mxu0 0
    %1901 = vmatpush1.bf16.msra.mxu0 0
    %1902 = vmatprep.subr.bf16.mxu0 0
    %1903 = vmatpush1.bf16.msra.mxu0 0
    %1904 = vmatprep.subr.bf16.mxu0 0
    %1905 = vmatpush1.bf16.msra.mxu0 0
    %1906 = vmatprep.subr.bf16.mxu0 0
    %1907 = vmatpush1.bf16.msra.mxu0 0
    %1908 = vmatprep.subr.bf16.mxu0 0
    %1909 = vmatpush1.bf16.msra.mxu0 0
    %1910 = vmatprep.subr.bf16.mxu0 0
    %1911 = vmatpush1.bf16.msra.mxu0 0
    %1912 = vmatprep.subr.bf16.mxu0 0
    %1913 = vmatpush1.bf16.msra.mxu0 0
    %1914 = vmatprep.subr.bf16.mxu0 0
    %1915 = vmatpush1.bf16.msra.mxu0 0
    %1916 = vmatprep.subr.bf16.mxu0 0
    %1917 = vmatpush1.bf16.msra.mxu0 0
    %1918 = vmatprep.subr.bf16.mxu0 0
    %1919 = vmatpush1.bf16.msra.mxu0 0
    %1920 = vmatprep.subr.bf16.mxu0 0
    %1921 = vmatpush1.bf16.msra.mxu0 0
    %1922 = vmatprep.mubr.bf16.mxu0 0
    %1923 = vmatmul.mubr.bf16.gmra.mrb[0].mxu0 %v1748
    %v1924 = vpop.f32.mrb[0].mxu0
    %v1925 = vadd.f32 0.0, %v1924
    %v1926 = vpop.f32.mrb[0].mxu0
    %v1927 = vpop.f32.mrb[0].mxu0
    %v1928 = vpop.f32.mrb[0].mxu0
    %1929 = vdwg.mxu0
    %1931 = vrot.lane.b32.xlu0 %v1889, 32
    %v1932 = vpop.permute.xlu0 %1931
    %v1934 = vsel %vm118, %v1932, 0
    %1936 = vmatprep.subr.bf16.mxu0 0
    %1937 = vmatpush1.bf16.msra.mxu0 %v368
    %1938 = vmatprep.subr.bf16.mxu0 0
    %1939 = vmatpush1.bf16.msra.mxu0 %v369
    %1940 = vmatprep.subr.bf16.mxu0 0
    %1941 = vmatpush1.bf16.msra.mxu0 0
    %1942 = vmatprep.subr.bf16.mxu0 0
    %1943 = vmatpush1.bf16.msra.mxu0 0
    %1944 = vmatprep.subr.bf16.mxu0 0
    %1945 = vmatpush1.bf16.msra.mxu0 0
    %1946 = vmatprep.subr.bf16.mxu0 0
    %1947 = vmatpush1.bf16.msra.mxu0 0
    %1948 = vmatprep.subr.bf16.mxu0 0
    %1949 = vmatpush1.bf16.msra.mxu0 0
    %1950 = vmatprep.subr.bf16.mxu0 0
    %1951 = vmatpush1.bf16.msra.mxu0 0
    %1952 = vmatprep.subr.bf16.mxu0 0
    %1953 = vmatpush1.bf16.msra.mxu0 0
    %1954 = vmatprep.subr.bf16.mxu0 0
    %1955 = vmatpush1.bf16.msra.mxu0 0
    %1956 = vmatprep.subr.bf16.mxu0 0
    %1957 = vmatpush1.bf16.msra.mxu0 0
    %1958 = vmatprep.subr.bf16.mxu0 0
    %1959 = vmatpush1.bf16.msra.mxu0 0
    %1960 = vmatprep.subr.bf16.mxu0 0
    %1961 = vmatpush1.bf16.msra.mxu0 0
    %1962 = vmatprep.subr.bf16.mxu0 0
    %1963 = vmatpush1.bf16.msra.mxu0 0
    %1964 = vmatprep.subr.bf16.mxu0 0
    %1965 = vmatpush1.bf16.msra.mxu0 0
    %1966 = vmatprep.subr.bf16.mxu0 0
    %1967 = vmatpush1.bf16.msra.mxu0 0
    %1968 = vmatprep.mubr.bf16.mxu0 0
    %1969 = vmatmul.mubr.bf16.gmra.mrb[0].mxu0 %v1934
    %v1970 = vpop.f32.mrb[0].mxu0
    %v1971 = vadd.f32 %v1925, %v1970
    %v1972 = vpop.f32.mrb[0].mxu0
    %v1973 = vpop.f32.mrb[0].mxu0
    %v1974 = vpop.f32.mrb[0].mxu0
    %1975 = vdwg.mxu0
    %v1976 = vadd.f32 %v1971, %v419
    %v1977 = vxor.u32 %v1976, 2147483648
    %v1978 = vmul.f32 %v1977, 1.442695
    %v1979 = vpow.pop %v1978
    %v1980 = vadd.f32 %v1979, 1.0
    %v1981 = vrcp.pop %v1980
    %v1982 = vmul.f32 1.0, %v1981
    %v1983 = vtanh.pop %v1976
    %v1984 = vmul.f32 %v1982, %v1689
    %1986 = vrot.lane.b32.xlu0 %v1983, 64
    %v1987 = vpop.permute.xlu0 %1986
    %v1989 = vmul.f32 %v1982, %v1987
    %1991 = vrot.lane.b32.xlu0 %v1989, 32
    %v1992 = vpop.permute.xlu0 %1991
    %v1994 = vadd.f32 %v1984, %v1992
    %v1995 = vtanh.pop %v1994
    %1997 = vrot.lane.b32.xlu0 %v1995, 64
    %v1998 = vpop.permute.xlu0 %1997
    %v2000 = vmul.f32 %v1982, %v1998
    %v2001 = vpack.c.bf16 %v2000, %v2000
    %v2002 = vpack.c.bf16 %v1814, %v1814
    %2004 = vrot.lane.b32.xlu0 %v2002, 32
    %v2005 = vpop.permute.xlu0 %2004
    %v2007 = vsel %vm118, %v2005, 0
    %2009 = vmatprep.subr.bf16.mxu0 0
    %2010 = vmatpush1.bf16.msra.mxu0 %v464
    %2011 = vmatprep.subr.bf16.mxu0 0
    %2012 = vmatpush1.bf16.msra.mxu0 %v465
    %2013 = vmatprep.subr.bf16.mxu0 0
    %2014 = vmatpush1.bf16.msra.mxu0 0
    %2015 = vmatprep.subr.bf16.mxu0 0
    %2016 = vmatpush1.bf16.msra.mxu0 0
    %2017 = vmatprep.subr.bf16.mxu0 0
    %2018 = vmatpush1.bf16.msra.mxu0 0
    %2019 = vmatprep.subr.bf16.mxu0 0
    %2020 = vmatpush1.bf16.msra.mxu0 0
    %2021 = vmatprep.subr.bf16.mxu0 0
    %2022 = vmatpush1.bf16.msra.mxu0 0
    %2023 = vmatprep.subr.bf16.mxu0 0
    %2024 = vmatpush1.bf16.msra.mxu0 0
    %2025 = vmatprep.subr.bf16.mxu0 0
    %2026 = vmatpush1.bf16.msra.mxu0 0
    %2027 = vmatprep.subr.bf16.mxu0 0
    %2028 = vmatpush1.bf16.msra.mxu0 0
    %2029 = vmatprep.subr.bf16.mxu0 0
    %2030 = vmatpush1.bf16.msra.mxu0 0
    %2031 = vmatprep.subr.bf16.mxu0 0
    %2032 = vmatpush1.bf16.msra.mxu0 0
    %2033 = vmatprep.subr.bf16.mxu0 0
    %2034 = vmatpush1.bf16.msra.mxu0 0
    %2035 = vmatprep.subr.bf16.mxu0 0
    %2036 = vmatpush1.bf16.msra.mxu0 0
    %2037 = vmatprep.subr.bf16.mxu0 0
    %2038 = vmatpush1.bf16.msra.mxu0 0
    %2039 = vmatprep.subr.bf16.mxu0 0
    %2040 = vmatpush1.bf16.msra.mxu0 0
    %2041 = vmatprep.mubr.bf16.mxu0 0
    %2042 = vmatmul.mubr.bf16.gmra.mrb[0].mxu0 %v2007
    %v2043 = vpop.f32.mrb[0].mxu0
    %v2044 = vadd.f32 0.0, %v2043
    %v2045 = vpop.f32.mrb[0].mxu0
    %v2046 = vpop.f32.mrb[0].mxu0
    %v2047 = vpop.f32.mrb[0].mxu0
    %2048 = vdwg.mxu0
    %2050 = vrot.lane.b32.xlu0 %v2001, 32
    %v2051 = vpop.permute.xlu0 %2050
    %v2053 = vsel %vm118, %v2051, 0
    %2055 = vmatprep.subr.bf16.mxu0 0
    %2056 = vmatpush1.bf16.msra.mxu0 %v519
    %2057 = vmatprep.subr.bf16.mxu0 0
    %2058 = vmatpush1.bf16.msra.mxu0 %v520
    %2059 = vmatprep.subr.bf16.mxu0 0
    %2060 = vmatpush1.bf16.msra.mxu0 0
    %2061 = vmatprep.subr.bf16.mxu0 0
    %2062 = vmatpush1.bf16.msra.mxu0 0
    %2063 = vmatprep.subr.bf16.mxu0 0
    %2064 = vmatpush1.bf16.msra.mxu0 0
    %2065 = vmatprep.subr.bf16.mxu0 0
    %2066 = vmatpush1.bf16.msra.mxu0 0
    %2067 = vmatprep.subr.bf16.mxu0 0
    %2068 = vmatpush1.bf16.msra.mxu0 0
    %2069 = vmatprep.subr.bf16.mxu0 0
    %2070 = vmatpush1.bf16.msra.mxu0 0
    %2071 = vmatprep.subr.bf16.mxu0 0
    %2072 = vmatpush1.bf16.msra.mxu0 0
    %2073 = vmatprep.subr.bf16.mxu0 0
    %2074 = vmatpush1.bf16.msra.mxu0 0
    %2075 = vmatprep.subr.bf16.mxu0 0
    %2076 = vmatpush1.bf16.msra.mxu0 0
    %2077 = vmatprep.subr.bf16.mxu0 0
    %2078 = vmatpush1.bf16.msra.mxu0 0
    %2079 = vmatprep.subr.bf16.mxu0 0
    %2080 = vmatpush1.bf16.msra.mxu0 0
    %2081 = vmatprep.subr.bf16.mxu0 0
    %2082 = vmatpush1.bf16.msra.mxu0 0
    %2083 = vmatprep.subr.bf16.mxu0 0
    %2084 = vmatpush1.bf16.msra.mxu0 0
    %2085 = vmatprep.subr.bf16.mxu0 0
    %2086 = vmatpush1.bf16.msra.mxu0 0
    %2087 = vmatprep.mubr.bf16.mxu0 0
    %2088 = vmatmul.mubr.bf16.gmra.mrb[0].mxu0 %v2053
    %v2089 = vpop.f32.mrb[0].mxu0
    %v2090 = vadd.f32 %v2044, %v2089
    %v2091 = vpop.f32.mrb[0].mxu0
    %v2092 = vpop.f32.mrb[0].mxu0
    %v2093 = vpop.f32.mrb[0].mxu0
    %2094 = vdwg.mxu0
    %v2095 = vadd.f32 %v2090, %v570
    %v2096 = vxor.u32 %v2095, 2147483648
    %v2097 = vmul.f32 %v2096, 1.442695
    %v2098 = vpow.pop %v2097
    %v2099 = vadd.f32 %v2098, 1.0
    %v2100 = vrcp.pop %v2099
    %v2101 = vmul.f32 1.0, %v2100
    %v2102 = vtanh.pop %v2095
    %v2103 = vmul.f32 %v2101, %v1808
    %2105 = vrot.lane.b32.xlu0 %v2102, 64
    %v2106 = vpop.permute.xlu0 %2105
    %v2108 = vmul.f32 %v2101, %v2106
    %2110 = vrot.lane.b32.xlu0 %v2108, 32
    %v2111 = vpop.permute.xlu0 %2110
    %v2113 = vadd.f32 %v2103, %v2111
    %v2114 = vtanh.pop %v2113
    %2116 = vrot.lane.b32.xlu0 %v2114, 64
    %v2117 = vpop.permute.xlu0 %2116
    %v2119 = vmul.f32 %v2101, %v2117
    %s2120 = scalar_lea.vmem [#allocation3], 40
    %v2121 = vld [vmem:[%s2120] sm:$0xff]
    %2123 = vrot.lane.b32.xlu0 %v2119, 32
    %v2124 = vpop.permute.xlu0 %2123
    %v2126 = vmul.f32 %v2121, %v2124
    %v2127 = vadd.f32 %v1822, %v2126
    %v2128 = vld [vmem:[%s207] sm:$0xff]
    %2129 = vmatprep.subr.bf16.mxu0 0
    %2130 = vmatpush1.bf16.msra.mxu0 %v224
    %2131 = vmatprep.subr.bf16.mxu0 0
    %2132 = vmatpush1.bf16.msra.mxu0 %v225
    %2133 = vmatprep.subr.bf16.mxu0 0
    %2134 = vmatpush1.bf16.msra.mxu0 0
    %2135 = vmatprep.subr.bf16.mxu0 0
    %2136 = vmatpush1.bf16.msra.mxu0 0
    %2137 = vmatprep.subr.bf16.mxu0 0
    %2138 = vmatpush1.bf16.msra.mxu0 0
    %2139 = vmatprep.subr.bf16.mxu0 0
    %2140 = vmatpush1.bf16.msra.mxu0 0
    %2141 = vmatprep.subr.bf16.mxu0 0
    %2142 = vmatpush1.bf16.msra.mxu0 0
    %2143 = vmatprep.subr.bf16.mxu0 0
    %2144 = vmatpush1.bf16.msra.mxu0 0
    %2145 = vmatprep.subr.bf16.mxu0 0
    %2146 = vmatpush1.bf16.msra.mxu0 0
    %2147 = vmatprep.subr.bf16.mxu0 0
    %2148 = vmatpush1.bf16.msra.mxu0 0
    %2149 = vmatprep.subr.bf16.mxu0 0
    %2150 = vmatpush1.bf16.msra.mxu0 0
    %2151 = vmatprep.subr.bf16.mxu0 0
    %2152 = vmatpush1.bf16.msra.mxu0 0
    %2153 = vmatprep.subr.bf16.mxu0 0
    %2154 = vmatpush1.bf16.msra.mxu0 0
    %2155 = vmatprep.subr.bf16.mxu0 0
    %2156 = vmatpush1.bf16.msra.mxu0 0
    %2157 = vmatprep.subr.bf16.mxu0 0
    %2158 = vmatpush1.bf16.msra.mxu0 0
    %2159 = vmatprep.subr.bf16.mxu0 0
    %2160 = vmatpush1.bf16.msra.mxu0 0
    %2161 = vmatprep.mubr.bf16.mxu0 0
    %2162 = vmatmul.mubr.bf16.gmra.mrb[0].mxu0 %v1934
    %v2163 = vpop.f32.mrb[0].mxu0
    %v2164 = vadd.f32 0.0, %v2163
    %v2165 = vpop.f32.mrb[0].mxu0
    %v2166 = vpop.f32.mrb[0].mxu0
    %v2167 = vpop.f32.mrb[0].mxu0
    %2168 = vdwg.mxu0
    %v2169 = vadd.f32 %v2128, %v2164
    %v2170 = vxor.u32 %v2169, 2147483648
    %v2171 = vmul.f32 %v2170, 1.442695
    %v2172 = vpow.pop %v2171
    %v2173 = vadd.f32 %v2172, 1.0
    %v2174 = vrcp.pop %v2173
    %v2175 = vmul.f32 1.0, %v2174
    %v2176 = vtanh.pop %v2169
    %v2177 = vmul.f32 %v2175, %v1882
    %2179 = vrot.lane.b32.xlu0 %v2176, 64
    %v2180 = vpop.permute.xlu0 %2179
    %v2182 = vmul.f32 %v2175, %v2180
    %2184 = vrot.lane.b32.xlu0 %v2182, 32
    %v2185 = vpop.permute.xlu0 %2184
    %v2187 = vadd.f32 %v2177, %v2185
    %v2188 = vtanh.pop %v2187
    %2190 = vrot.lane.b32.xlu0 %v2188, 64
    %v2191 = vpop.permute.xlu0 %2190
    %v2193 = vmul.f32 %v2175, %v2191
    %v2194 = vpack.c.bf16 %v2193, %v2193
    %2195 = vmatprep.subr.bf16.mxu0 0
    %2196 = vmatpush1.bf16.msra.mxu0 %v313
    %2197 = vmatprep.subr.bf16.mxu0 0
    %2198 = vmatpush1.bf16.msra.mxu0 %v314
    %2199 = vmatprep.subr.bf16.mxu0 0
    %2200 = vmatpush1.bf16.msra.mxu0 0
    %2201 = vmatprep.subr.bf16.mxu0 0
    %2202 = vmatpush1.bf16.msra.mxu0 0
    %2203 = vmatprep.subr.bf16.mxu0 0
    %2204 = vmatpush1.bf16.msra.mxu0 0
    %2205 = vmatprep.subr.bf16.mxu0 0
    %2206 = vmatpush1.bf16.msra.mxu0 0
    %2207 = vmatprep.subr.bf16.mxu0 0
    %2208 = vmatpush1.bf16.msra.mxu0 0
    %2209 = vmatprep.subr.bf16.mxu0 0
    %2210 = vmatpush1.bf16.msra.mxu0 0
    %2211 = vmatprep.subr.bf16.mxu0 0
    %2212 = vmatpush1.bf16.msra.mxu0 0
    %2213 = vmatprep.subr.bf16.mxu0 0
    %2214 = vmatpush1.bf16.msra.mxu0 0
    %2215 = vmatprep.subr.bf16.mxu0 0
    %2216 = vmatpush1.bf16.msra.mxu0 0
    %2217 = vmatprep.subr.bf16.mxu0 0
    %2218 = vmatpush1.bf16.msra.mxu0 0
    %2219 = vmatprep.subr.bf16.mxu0 0
    %2220 = vmatpush1.bf16.msra.mxu0 0
    %2221 = vmatprep.subr.bf16.mxu0 0
    %2222 = vmatpush1.bf16.msra.mxu0 0
    %2223 = vmatprep.subr.bf16.mxu0 0
    %2224 = vmatpush1.bf16.msra.mxu0 0
    %2225 = vmatprep.subr.bf16.mxu0 0
    %2226 = vmatpush1.bf16.msra.mxu0 0
    %2227 = vmatprep.mubr.bf16.mxu0 0
    %2228 = vmatmul.mubr.bf16.gmra.mrb[0].mxu0 %v2053
    %v2229 = vpop.f32.mrb[0].mxu0
    %v2230 = vadd.f32 0.0, %v2229
    %v2231 = vpop.f32.mrb[0].mxu0
    %v2232 = vpop.f32.mrb[0].mxu0
    %v2233 = vpop.f32.mrb[0].mxu0
    %2234 = vdwg.mxu0
    %2236 = vrot.lane.b32.xlu0 %v2194, 32
    %v2237 = vpop.permute.xlu0 %2236
    %v2239 = vsel %vm118, %v2237, 0
    %2241 = vmatprep.subr.bf16.mxu0 0
    %2242 = vmatpush1.bf16.msra.mxu0 %v368
    %2243 = vmatprep.subr.bf16.mxu0 0
    %2244 = vmatpush1.bf16.msra.mxu0 %v369
    %2245 = vmatprep.subr.bf16.mxu0 0
    %2246 = vmatpush1.bf16.msra.mxu0 0
    %2247 = vmatprep.subr.bf16.mxu0 0
    %2248 = vmatpush1.bf16.msra.mxu0 0
    %2249 = vmatprep.subr.bf16.mxu0 0
    %2250 = vmatpush1.bf16.msra.mxu0 0
    %2251 = vmatprep.subr.bf16.mxu0 0
    %2252 = vmatpush1.bf16.msra.mxu0 0
    %2253 = vmatprep.subr.bf16.mxu0 0
    %2254 = vmatpush1.bf16.msra.mxu0 0
    %2255 = vmatprep.subr.bf16.mxu0 0
    %2256 = vmatpush1.bf16.msra.mxu0 0
    %2257 = vmatprep.subr.bf16.mxu0 0
    %2258 = vmatpush1.bf16.msra.mxu0 0
    %2259 = vmatprep.subr.bf16.mxu0 0
    %2260 = vmatpush1.bf16.msra.mxu0 0
    %2261 = vmatprep.subr.bf16.mxu0 0
    %2262 = vmatpush1.bf16.msra.mxu0 0
    %2263 = vmatprep.subr.bf16.mxu0 0
    %2264 = vmatpush1.bf16.msra.mxu0 0
    %2265 = vmatprep.subr.bf16.mxu0 0
    %2266 = vmatpush1.bf16.msra.mxu0 0
    %2267 = vmatprep.subr.bf16.mxu0 0
    %2268 = vmatpush1.bf16.msra.mxu0 0
    %2269 = vmatprep.subr.bf16.mxu0 0
    %2270 = vmatpush1.bf16.msra.mxu0 0
    %2271 = vmatprep.subr.bf16.mxu0 0
    %2272 = vmatpush1.bf16.msra.mxu0 0
    %2273 = vmatprep.mubr.bf16.mxu0 0
    %2274 = vmatmul.mubr.bf16.gmra.mrb[0].mxu0 %v2239
    %v2275 = vpop.f32.mrb[0].mxu0
    %v2276 = vadd.f32 %v2230, %v2275
    %v2277 = vpop.f32.mrb[0].mxu0
    %v2278 = vpop.f32.mrb[0].mxu0
    %v2279 = vpop.f32.mrb[0].mxu0
    %2280 = vdwg.mxu0
    %v2281 = vadd.f32 %v2276, %v419
    %v2282 = vxor.u32 %v2281, 2147483648
    %v2283 = vmul.f32 %v2282, 1.442695
    %v2284 = vpow.pop %v2283
    %v2285 = vadd.f32 %v2284, 1.0
    %v2286 = vrcp.pop %v2285
    %v2287 = vmul.f32 1.0, %v2286
    %v2288 = vtanh.pop %v2281
    %v2289 = vmul.f32 %v2287, %v1994
    %2291 = vrot.lane.b32.xlu0 %v2288, 64
    %v2292 = vpop.permute.xlu0 %2291
    %v2294 = vmul.f32 %v2287, %v2292
    %2296 = vrot.lane.b32.xlu0 %v2294, 32
    %v2297 = vpop.permute.xlu0 %2296
    %v2299 = vadd.f32 %v2289, %v2297
    %v2300 = vtanh.pop %v2299
    %2302 = vrot.lane.b32.xlu0 %v2300, 64
    %v2303 = vpop.permute.xlu0 %2302
    %v2305 = vmul.f32 %v2287, %v2303
    %v2306 = vpack.c.bf16 %v2305, %v2305
    %v2307 = vpack.c.bf16 %v2119, %v2119
    %2309 = vrot.lane.b32.xlu0 %v2307, 32
    %v2310 = vpop.permute.xlu0 %2309
    %v2312 = vsel %vm118, %v2310, 0
    %2314 = vmatprep.subr.bf16.mxu0 0
    %2315 = vmatpush1.bf16.msra.mxu0 %v464
    %2316 = vmatprep.subr.bf16.mxu0 0
    %2317 = vmatpush1.bf16.msra.mxu0 %v465
    %2318 = vmatprep.subr.bf16.mxu0 0
    %2319 = vmatpush1.bf16.msra.mxu0 0
    %2320 = vmatprep.subr.bf16.mxu0 0
    %2321 = vmatpush1.bf16.msra.mxu0 0
    %2322 = vmatprep.subr.bf16.mxu0 0
    %2323 = vmatpush1.bf16.msra.mxu0 0
    %2324 = vmatprep.subr.bf16.mxu0 0
    %2325 = vmatpush1.bf16.msra.mxu0 0
    %2326 = vmatprep.subr.bf16.mxu0 0
    %2327 = vmatpush1.bf16.msra.mxu0 0
    %2328 = vmatprep.subr.bf16.mxu0 0
    %2329 = vmatpush1.bf16.msra.mxu0 0
    %2330 = vmatprep.subr.bf16.mxu0 0
    %2331 = vmatpush1.bf16.msra.mxu0 0
    %2332 = vmatprep.subr.bf16.mxu0 0
    %2333 = vmatpush1.bf16.msra.mxu0 0
    %2334 = vmatprep.subr.bf16.mxu0 0
    %2335 = vmatpush1.bf16.msra.mxu0 0
    %2336 = vmatprep.subr.bf16.mxu0 0
    %2337 = vmatpush1.bf16.msra.mxu0 0
    %2338 = vmatprep.subr.bf16.mxu0 0
    %2339 = vmatpush1.bf16.msra.mxu0 0
    %2340 = vmatprep.subr.bf16.mxu0 0
    %2341 = vmatpush1.bf16.msra.mxu0 0
    %2342 = vmatprep.subr.bf16.mxu0 0
    %2343 = vmatpush1.bf16.msra.mxu0 0
    %2344 = vmatprep.subr.bf16.mxu0 0
    %2345 = vmatpush1.bf16.msra.mxu0 0
    %2346 = vmatprep.mubr.bf16.mxu0 0
    %2347 = vmatmul.mubr.bf16.gmra.mrb[0].mxu0 %v2312
    %v2348 = vpop.f32.mrb[0].mxu0
    %v2349 = vadd.f32 0.0, %v2348
    %v2350 = vpop.f32.mrb[0].mxu0
    %v2351 = vpop.f32.mrb[0].mxu0
    %v2352 = vpop.f32.mrb[0].mxu0
    %2353 = vdwg.mxu0
    %2355 = vrot.lane.b32.xlu0 %v2306, 32
    %v2356 = vpop.permute.xlu0 %2355
    %v2358 = vsel %vm118, %v2356, 0
    %2360 = vmatprep.subr.bf16.mxu0 0
    %2361 = vmatpush1.bf16.msra.mxu0 %v519
    %2362 = vmatprep.subr.bf16.mxu0 0
    %2363 = vmatpush1.bf16.msra.mxu0 %v520
    %2364 = vmatprep.subr.bf16.mxu0 0
    %2365 = vmatpush1.bf16.msra.mxu0 0
    %2366 = vmatprep.subr.bf16.mxu0 0
    %2367 = vmatpush1.bf16.msra.mxu0 0
    %2368 = vmatprep.subr.bf16.mxu0 0
    %2369 = vmatpush1.bf16.msra.mxu0 0
    %2370 = vmatprep.subr.bf16.mxu0 0
    %2371 = vmatpush1.bf16.msra.mxu0 0
    %2372 = vmatprep.subr.bf16.mxu0 0
    %2373 = vmatpush1.bf16.msra.mxu0 0
    %2374 = vmatprep.subr.bf16.mxu0 0
    %2375 = vmatpush1.bf16.msra.mxu0 0
    %2376 = vmatprep.subr.bf16.mxu0 0
    %2377 = vmatpush1.bf16.msra.mxu0 0
    %2378 = vmatprep.subr.bf16.mxu0 0
    %2379 = vmatpush1.bf16.msra.mxu0 0
    %2380 = vmatprep.subr.bf16.mxu0 0
    %2381 = vmatpush1.bf16.msra.mxu0 0
    %2382 = vmatprep.subr.bf16.mxu0 0
    %2383 = vmatpush1.bf16.msra.mxu0 0
    %2384 = vmatprep.subr.bf16.mxu0 0
    %2385 = vmatpush1.bf16.msra.mxu0 0
    %2386 = vmatprep.subr.bf16.mxu0 0
    %2387 = vmatpush1.bf16.msra.mxu0 0
    %2388 = vmatprep.subr.bf16.mxu0 0
    %2389 = vmatpush1.bf16.msra.mxu0 0
    %2390 = vmatprep.subr.bf16.mxu0 0
    %2391 = vmatpush1.bf16.msra.mxu0 0
    %2392 = vmatprep.mubr.bf16.mxu0 0
    %2393 = vmatmul.mubr.bf16.gmra.mrb[0].mxu0 %v2358
    %v2394 = vpop.f32.mrb[0].mxu0
    %v2395 = vadd.f32 %v2349, %v2394
    %v2396 = vpop.f32.mrb[0].mxu0
    %v2397 = vpop.f32.mrb[0].mxu0
    %v2398 = vpop.f32.mrb[0].mxu0
    %2399 = vdwg.mxu0
    %v2400 = vadd.f32 %v2395, %v570
    %v2401 = vxor.u32 %v2400, 2147483648
    %v2402 = vmul.f32 %v2401, 1.442695
    %v2403 = vpow.pop %v2402
    %v2404 = vadd.f32 %v2403, 1.0
    %v2405 = vrcp.pop %v2404
    %v2406 = vmul.f32 1.0, %v2405
    %v2407 = vtanh.pop %v2400
    %v2408 = vmul.f32 %v2406, %v2113
    %2410 = vrot.lane.b32.xlu0 %v2407, 64
    %v2411 = vpop.permute.xlu0 %2410
    %v2413 = vmul.f32 %v2406, %v2411
    %2415 = vrot.lane.b32.xlu0 %v2413, 32
    %v2416 = vpop.permute.xlu0 %2415
    %v2418 = vadd.f32 %v2408, %v2416
    %v2419 = vtanh.pop %v2418
    %2421 = vrot.lane.b32.xlu0 %v2419, 64
    %v2422 = vpop.permute.xlu0 %2421
    %v2424 = vmul.f32 %v2406, %v2422
    %s2425 = scalar_lea.vmem [#allocation3], 48
    %v2426 = vld [vmem:[%s2425] sm:$0xff]
    %2428 = vrot.lane.b32.xlu0 %v2424, 32
    %v2429 = vpop.permute.xlu0 %2428
    %v2431 = vmul.f32 %v2426, %v2429
    %v2432 = vadd.f32 %v2127, %v2431
    %v2433 = vld [vmem:[%s209] sm:$0xff]
    %2434 = vmatprep.subr.bf16.mxu0 0
    %2435 = vmatpush1.bf16.msra.mxu0 %v224
    %2436 = vmatprep.subr.bf16.mxu0 0
    %2437 = vmatpush1.bf16.msra.mxu0 %v225
    %2438 = vmatprep.subr.bf16.mxu0 0
    %2439 = vmatpush1.bf16.msra.mxu0 0
    %2440 = vmatprep.subr.bf16.mxu0 0
    %2441 = vmatpush1.bf16.msra.mxu0 0
    %2442 = vmatprep.subr.bf16.mxu0 0
    %2443 = vmatpush1.bf16.msra.mxu0 0
    %2444 = vmatprep.subr.bf16.mxu0 0
    %2445 = vmatpush1.bf16.msra.mxu0 0
    %2446 = vmatprep.subr.bf16.mxu0 0
    %2447 = vmatpush1.bf16.msra.mxu0 0
    %2448 = vmatprep.subr.bf16.mxu0 0
    %2449 = vmatpush1.bf16.msra.mxu0 0
    %2450 = vmatprep.subr.bf16.mxu0 0
    %2451 = vmatpush1.bf16.msra.mxu0 0
    %2452 = vmatprep.subr.bf16.mxu0 0
    %2453 = vmatpush1.bf16.msra.mxu0 0
    %2454 = vmatprep.subr.bf16.mxu0 0
    %2455 = vmatpush1.bf16.msra.mxu0 0
    %2456 = vmatprep.subr.bf16.mxu0 0
    %2457 = vmatpush1.bf16.msra.mxu0 0
    %2458 = vmatprep.subr.bf16.mxu0 0
    %2459 = vmatpush1.bf16.msra.mxu0 0
    %2460 = vmatprep.subr.bf16.mxu0 0
    %2461 = vmatpush1.bf16.msra.mxu0 0
    %2462 = vmatprep.subr.bf16.mxu0 0
    %2463 = vmatpush1.bf16.msra.mxu0 0
    %2464 = vmatprep.subr.bf16.mxu0 0
    %2465 = vmatpush1.bf16.msra.mxu0 0
    %2466 = vmatprep.mubr.bf16.mxu0 0
    %2467 = vmatmul.mubr.bf16.gmra.mrb[0].mxu0 %v2239
    %v2468 = vpop.f32.mrb[0].mxu0
    %v2469 = vadd.f32 0.0, %v2468
    %v2470 = vpop.f32.mrb[0].mxu0
    %v2471 = vpop.f32.mrb[0].mxu0
    %v2472 = vpop.f32.mrb[0].mxu0
    %2473 = vdwg.mxu0
    %v2474 = vadd.f32 %v2433, %v2469
    %v2475 = vxor.u32 %v2474, 2147483648
    %v2476 = vmul.f32 %v2475, 1.442695
    %v2477 = vpow.pop %v2476
    %v2478 = vadd.f32 %v2477, 1.0
    %v2479 = vrcp.pop %v2478
    %v2480 = vmul.f32 1.0, %v2479
    %v2481 = vtanh.pop %v2474
    %v2482 = vmul.f32 %v2480, %v2187
    %2484 = vrot.lane.b32.xlu0 %v2481, 64
    %v2485 = vpop.permute.xlu0 %2484
    %v2487 = vmul.f32 %v2480, %v2485
    %2489 = vrot.lane.b32.xlu0 %v2487, 32
    %v2490 = vpop.permute.xlu0 %2489
    %v2492 = vadd.f32 %v2482, %v2490
    %v2493 = vtanh.pop %v2492
    %2495 = vrot.lane.b32.xlu0 %v2493, 64
    %v2496 = vpop.permute.xlu0 %2495
    %v2498 = vmul.f32 %v2480, %v2496
    %v2499 = vpack.c.bf16 %v2498, %v2498
    %2500 = vmatprep.subr.bf16.mxu0 0
    %2501 = vmatpush1.bf16.msra.mxu0 %v313
    %2502 = vmatprep.subr.bf16.mxu0 0
    %2503 = vmatpush1.bf16.msra.mxu0 %v314
    %2504 = vmatprep.subr.bf16.mxu0 0
    %2505 = vmatpush1.bf16.msra.mxu0 0
    %2506 = vmatprep.subr.bf16.mxu0 0
    %2507 = vmatpush1.bf16.msra.mxu0 0
    %2508 = vmatprep.subr.bf16.mxu0 0
    %2509 = vmatpush1.bf16.msra.mxu0 0
    %2510 = vmatprep.subr.bf16.mxu0 0
    %2511 = vmatpush1.bf16.msra.mxu0 0
    %2512 = vmatprep.subr.bf16.mxu0 0
    %2513 = vmatpush1.bf16.msra.mxu0 0
    %2514 = vmatprep.subr.bf16.mxu0 0
    %2515 = vmatpush1.bf16.msra.mxu0 0
    %2516 = vmatprep.subr.bf16.mxu0 0
    %2517 = vmatpush1.bf16.msra.mxu0 0
    %2518 = vmatprep.subr.bf16.mxu0 0
    %2519 = vmatpush1.bf16.msra.mxu0 0
    %2520 = vmatprep.subr.bf16.mxu0 0
    %2521 = vmatpush1.bf16.msra.mxu0 0
    %2522 = vmatprep.subr.bf16.mxu0 0
    %2523 = vmatpush1.bf16.msra.mxu0 0
    %2524 = vmatprep.subr.bf16.mxu0 0
    %2525 = vmatpush1.bf16.msra.mxu0 0
    %2526 = vmatprep.subr.bf16.mxu0 0
    %2527 = vmatpush1.bf16.msra.mxu0 0
    %2528 = vmatprep.subr.bf16.mxu0 0
    %2529 = vmatpush1.bf16.msra.mxu0 0
    %2530 = vmatprep.subr.bf16.mxu0 0
    %2531 = vmatpush1.bf16.msra.mxu0 0
    %2532 = vmatprep.mubr.bf16.mxu0 0
    %2533 = vmatmul.mubr.bf16.gmra.mrb[0].mxu0 %v2358
    %v2534 = vpop.f32.mrb[0].mxu0
    %v2535 = vadd.f32 0.0, %v2534
    %v2536 = vpop.f32.mrb[0].mxu0
    %v2537 = vpop.f32.mrb[0].mxu0
    %v2538 = vpop.f32.mrb[0].mxu0
    %2539 = vdwg.mxu0
    %2541 = vrot.lane.b32.xlu0 %v2499, 32
    %v2542 = vpop.permute.xlu0 %2541
    %v2544 = vsel %vm118, %v2542, 0
    %2546 = vmatprep.subr.bf16.mxu0 0
    %2547 = vmatpush1.bf16.msra.mxu0 %v368
    %2548 = vmatprep.subr.bf16.mxu0 0
    %2549 = vmatpush1.bf16.msra.mxu0 %v369
    %2550 = vmatprep.subr.bf16.mxu0 0
    %2551 = vmatpush1.bf16.msra.mxu0 0
    %2552 = vmatprep.subr.bf16.mxu0 0
    %2553 = vmatpush1.bf16.msra.mxu0 0
    %2554 = vmatprep.subr.bf16.mxu0 0
    %2555 = vmatpush1.bf16.msra.mxu0 0
    %2556 = vmatprep.subr.bf16.mxu0 0
    %2557 = vmatpush1.bf16.msra.mxu0 0
    %2558 = vmatprep.subr.bf16.mxu0 0
    %2559 = vmatpush1.bf16.msra.mxu0 0
    %2560 = vmatprep.subr.bf16.mxu0 0
    %2561 = vmatpush1.bf16.msra.mxu0 0
    %2562 = vmatprep.subr.bf16.mxu0 0
    %2563 = vmatpush1.bf16.msra.mxu0 0
    %2564 = vmatprep.subr.bf16.mxu0 0
    %2565 = vmatpush1.bf16.msra.mxu0 0
    %2566 = vmatprep.subr.bf16.mxu0 0
    %2567 = vmatpush1.bf16.msra.mxu0 0
    %2568 = vmatprep.subr.bf16.mxu0 0
    %2569 = vmatpush1.bf16.msra.mxu0 0
    %2570 = vmatprep.subr.bf16.mxu0 0
    %2571 = vmatpush1.bf16.msra.mxu0 0
    %2572 = vmatprep.subr.bf16.mxu0 0
    %2573 = vmatpush1.bf16.msra.mxu0 0
    %2574 = vmatprep.subr.bf16.mxu0 0
    %2575 = vmatpush1.bf16.msra.mxu0 0
    %2576 = vmatprep.subr.bf16.mxu0 0
    %2577 = vmatpush1.bf16.msra.mxu0 0
    %2578 = vmatprep.mubr.bf16.mxu0 0
    %2579 = vmatmul.mubr.bf16.gmra.mrb[0].mxu0 %v2544
    %v2580 = vpop.f32.mrb[0].mxu0
    %v2581 = vadd.f32 %v2535, %v2580
    %v2582 = vpop.f32.mrb[0].mxu0
    %v2583 = vpop.f32.mrb[0].mxu0
    %v2584 = vpop.f32.mrb[0].mxu0
    %2585 = vdwg.mxu0
    %v2586 = vadd.f32 %v2581, %v419
    %v2587 = vxor.u32 %v2586, 2147483648
    %v2588 = vmul.f32 %v2587, 1.442695
    %v2589 = vpow.pop %v2588
    %v2590 = vadd.f32 %v2589, 1.0
    %v2591 = vrcp.pop %v2590
    %v2592 = vmul.f32 1.0, %v2591
    %v2593 = vtanh.pop %v2586
    %v2594 = vmul.f32 %v2592, %v2299
    %2596 = vrot.lane.b32.xlu0 %v2593, 64
    %v2597 = vpop.permute.xlu0 %2596
    %v2599 = vmul.f32 %v2592, %v2597
    %2601 = vrot.lane.b32.xlu0 %v2599, 32
    %v2602 = vpop.permute.xlu0 %2601
    %v2604 = vadd.f32 %v2594, %v2602
    %v2605 = vtanh.pop %v2604
    %2607 = vrot.lane.b32.xlu0 %v2605, 64
    %v2608 = vpop.permute.xlu0 %2607
    %v2610 = vmul.f32 %v2592, %v2608
    %v2611 = vpack.c.bf16 %v2610, %v2610
    %v2612 = vpack.c.bf16 %v2424, %v2424
    %2614 = vrot.lane.b32.xlu0 %v2612, 32
    %v2615 = vpop.permute.xlu0 %2614
    %v2617 = vsel %vm118, %v2615, 0
    %2619 = vmatprep.subr.bf16.mxu0 0
    %2620 = vmatpush1.bf16.msra.mxu0 %v464
    %2621 = vmatprep.subr.bf16.mxu0 0
    %2622 = vmatpush1.bf16.msra.mxu0 %v465
    %2623 = vmatprep.subr.bf16.mxu0 0
    %2624 = vmatpush1.bf16.msra.mxu0 0
    %2625 = vmatprep.subr.bf16.mxu0 0
    %2626 = vmatpush1.bf16.msra.mxu0 0
    %2627 = vmatprep.subr.bf16.mxu0 0
    %2628 = vmatpush1.bf16.msra.mxu0 0
    %2629 = vmatprep.subr.bf16.mxu0 0
    %2630 = vmatpush1.bf16.msra.mxu0 0
    %2631 = vmatprep.subr.bf16.mxu0 0
    %2632 = vmatpush1.bf16.msra.mxu0 0
    %2633 = vmatprep.subr.bf16.mxu0 0
    %2634 = vmatpush1.bf16.msra.mxu0 0
    %2635 = vmatprep.subr.bf16.mxu0 0
    %2636 = vmatpush1.bf16.msra.mxu0 0
    %2637 = vmatprep.subr.bf16.mxu0 0
    %2638 = vmatpush1.bf16.msra.mxu0 0
    %2639 = vmatprep.subr.bf16.mxu0 0
    %2640 = vmatpush1.bf16.msra.mxu0 0
    %2641 = vmatprep.subr.bf16.mxu0 0
    %2642 = vmatpush1.bf16.msra.mxu0 0
    %2643 = vmatprep.subr.bf16.mxu0 0
    %2644 = vmatpush1.bf16.msra.mxu0 0
    %2645 = vmatprep.subr.bf16.mxu0 0
    %2646 = vmatpush1.bf16.msra.mxu0 0
    %2647 = vmatprep.subr.bf16.mxu0 0
    %2648 = vmatpush1.bf16.msra.mxu0 0
    %2649 = vmatprep.subr.bf16.mxu0 0
    %2650 = vmatpush1.bf16.msra.mxu0 0
    %2651 = vmatprep.mubr.bf16.mxu0 0
    %2652 = vmatmul.mubr.bf16.gmra.mrb[0].mxu0 %v2617
    %v2653 = vpop.f32.mrb[0].mxu0
    %v2654 = vadd.f32 0.0, %v2653
    %v2655 = vpop.f32.mrb[0].mxu0
    %v2656 = vpop.f32.mrb[0].mxu0
    %v2657 = vpop.f32.mrb[0].mxu0
    %2658 = vdwg.mxu0
    %2660 = vrot.lane.b32.xlu0 %v2611, 32
    %v2661 = vpop.permute.xlu0 %2660
    %v2663 = vsel %vm118, %v2661, 0
    %2665 = vmatprep.subr.bf16.mxu0 0
    %2666 = vmatpush1.bf16.msra.mxu0 %v519
    %2667 = vmatprep.subr.bf16.mxu0 0
    %2668 = vmatpush1.bf16.msra.mxu0 %v520
    %2669 = vmatprep.subr.bf16.mxu0 0
    %2670 = vmatpush1.bf16.msra.mxu0 0
    %2671 = vmatprep.subr.bf16.mxu0 0
    %2672 = vmatpush1.bf16.msra.mxu0 0
    %2673 = vmatprep.subr.bf16.mxu0 0
    %2674 = vmatpush1.bf16.msra.mxu0 0
    %2675 = vmatprep.subr.bf16.mxu0 0
    %2676 = vmatpush1.bf16.msra.mxu0 0
    %2677 = vmatprep.subr.bf16.mxu0 0
    %2678 = vmatpush1.bf16.msra.mxu0 0
    %2679 = vmatprep.subr.bf16.mxu0 0
    %2680 = vmatpush1.bf16.msra.mxu0 0
    %2681 = vmatprep.subr.bf16.mxu0 0
    %2682 = vmatpush1.bf16.msra.mxu0 0
    %2683 = vmatprep.subr.bf16.mxu0 0
    %2684 = vmatpush1.bf16.msra.mxu0 0
    %2685 = vmatprep.subr.bf16.mxu0 0
    %2686 = vmatpush1.bf16.msra.mxu0 0
    %2687 = vmatprep.subr.bf16.mxu0 0
    %2688 = vmatpush1.bf16.msra.mxu0 0
    %2689 = vmatprep.subr.bf16.mxu0 0
    %2690 = vmatpush1.bf16.msra.mxu0 0
    %2691 = vmatprep.subr.bf16.mxu0 0
    %2692 = vmatpush1.bf16.msra.mxu0 0
    %2693 = vmatprep.subr.bf16.mxu0 0
    %2694 = vmatpush1.bf16.msra.mxu0 0
    %2695 = vmatprep.subr.bf16.mxu0 0
    %2696 = vmatpush1.bf16.msra.mxu0 0
    %2697 = vmatprep.mubr.bf16.mxu0 0
    %2698 = vmatmul.mubr.bf16.gmra.mrb[0].mxu0 %v2663
    %v2699 = vpop.f32.mrb[0].mxu0
    %v2700 = vadd.f32 %v2654, %v2699
    %v2701 = vpop.f32.mrb[0].mxu0
    %v2702 = vpop.f32.mrb[0].mxu0
    %v2703 = vpop.f32.mrb[0].mxu0
    %2704 = vdwg.mxu0
    %v2705 = vadd.f32 %v2700, %v570
    %v2706 = vxor.u32 %v2705, 2147483648
    %v2707 = vmul.f32 %v2706, 1.442695
    %v2708 = vpow.pop %v2707
    %v2709 = vadd.f32 %v2708, 1.0
    %v2710 = vrcp.pop %v2709
    %v2711 = vmul.f32 1.0, %v2710
    %v2712 = vtanh.pop %v2705
    %v2713 = vmul.f32 %v2711, %v2418
    %2715 = vrot.lane.b32.xlu0 %v2712, 64
    %v2716 = vpop.permute.xlu0 %2715
    %v2718 = vmul.f32 %v2711, %v2716
    %2720 = vrot.lane.b32.xlu0 %v2718, 32
    %v2721 = vpop.permute.xlu0 %2720
    %v2723 = vadd.f32 %v2713, %v2721
    %v2724 = vtanh.pop %v2723
    %2726 = vrot.lane.b32.xlu0 %v2724, 64
    %v2727 = vpop.permute.xlu0 %2726
    %v2729 = vmul.f32 %v2711, %v2727
    %s2730 = scalar_lea.vmem [#allocation3], 56
    %v2731 = vld [vmem:[%s2730] sm:$0xff]
    %2733 = vrot.lane.b32.xlu0 %v2729, 32
    %v2734 = vpop.permute.xlu0 %2733
    %v2736 = vmul.f32 %v2731, %v2734
    %v2737 = vadd.f32 %v2432, %v2736
    %2738 = vst.msk [vmem:[#allocation9] sm:$0xff] %vm118, %v2737
    // Predicated region
    $region42: #{tpu_custom_call.1} parent=1 // pred_check
      _
    $region43: #{tpu_custom_call.1} parent=1 // pred_check_branch
      %2740 = sbr.rel (0) target = $region45
    $region44: #{tpu_custom_call.1} parent=1 // pred_region
      %s2742 = ssub.s32 128, 128
      %2743 = vsyncadd [#allocation5], %s2742
      %s2745 = sshll.u32 [#allocation9], 4
      %s2746 = int_to_ptr.vmem [resolvable:$true] %s2745
      %2748 = dma.vmem_to_hbm [thread:$0]  %s2746, 128, %s7, [#allocation5]
    $region45: #{tpu_custom_call.1} parent=1 // pred_fallthru
      _
    // Predicated region
    $region46: #{tpu_custom_call.1} parent=1 // pred_check
      _
    $region47: #{tpu_custom_call.1} parent=1 // pred_check_branch
      %2750 = sbr.rel (0) target = $region49
    $region48: #{tpu_custom_call.1} parent=1 // pred_region
      %2751 = dma.done [#allocation5], 128
    $region49: #{tpu_custom_call.1} parent=1 // pred_fallthru
      _
    %2752 = vsyncpa [#allocation4], 1
    %2753 = vsyncpa [#allocation7], 1
    %2754 = vsyncpa [#allocation5], 1

</llo_original>
